<compile_context>
chip_gen: v7x
topology: tpu7x:2x2x1
jax: 0.10.0
libtpu: 0.0.40
codegen_flags: <defaults>
</compile_context>

<pallas_src>
import functools

import jax
import jax.numpy as jnp
from jax.experimental import pallas as pl
from jax.experimental.pallas import tpu as pltpu


# ---------------------------------------------------------------------------
# Kernel
# ---------------------------------------------------------------------------
def _bilstm_fc_kernel(xf_ref, xb_ref, len_ref,
                      wih_f_ref, wih_b_ref, bih_f_ref, bih_b_ref,
                      whh_f_ref, whh_b_ref,
                      w1_ref, b1_ref, w2_ref, b2_ref,
                      out_ref,
                      pre_f_ref, pre_b_ref, h_ref, c_ref,
                      *, Tp, Tc, Bp, E, Hp, unroll):
    """One grid step == one chunk of Tc fused (fwd+bwd) time steps.

    xf_ref : (Tc, Bp, E)  bf16  forward  chunk c  (times [c*Tc, (c+1)*Tc))
    xb_ref : (Tc, Bp, E)  bf16  backward chunk    (times [Tp-(c+1)*Tc, Tp-c*Tc))
    len_ref: (Bp, Hp)     int32 per-row sequence length, lane-broadcast
    wih_*  : (E, 4Hp) bf16, whh_*: (Hp, 4Hp) bf16, gate column order [i,f,g,o]
    bih_*  : (1, 4Hp) f32  (b_ih + b_hh folded)
    h_ref/c_ref scratch: (Bp, 2Hp) f32, layout [fwd Hp | bwd Hp], persist
    across grid steps.  pre_*_ref: (Tc, Bp, 4Hp) bf16 per-chunk pre-gates.
    """
    cidx = pl.program_id(0)
    nchunks = pl.num_programs(0)

    # ---- init carried state on the first chunk ---------------------------
    @pl.when(cidx == 0)
    def _init():
        h_ref[...] = jnp.zeros_like(h_ref)
        c_ref[...] = jnp.zeros_like(c_ref)

    # ---- per-chunk input projection: two K=E MXU matmuls (bias folded),
    # stored once as bf16.  No structural zeros, no duplicated x.
    xf = xf_ref[...].reshape(Tc * Bp, E)
    xb = xb_ref[...].reshape(Tc * Bp, E)
    pre_f_ref[...] = (
        jnp.dot(xf, wih_f_ref[...], preferred_element_type=jnp.float32)
        + bih_f_ref[...]).reshape(Tc, Bp, 4 * Hp).astype(jnp.bfloat16)
    pre_b_ref[...] = (
        jnp.dot(xb, wih_b_ref[...], preferred_element_type=jnp.float32)
        + bih_b_ref[...]).reshape(Tc, Bp, 4 * Hp).astype(jnp.bfloat16)

    lens = len_ref[...]                                   # (Bp, Hp) int32
    s0 = cidx * Tc                                        # fused step offset

    def step(ls, carry):
        h_f, c_f, h_b, c_b = carry                        # each (Bp, Hp) f32
        s = s0 + ls
        # 3-D leading-axis reads; backward uses the reversed row of its chunk.
        pg_f = pre_f_ref[ls].astype(jnp.float32)          # (Bp, 4Hp)
        pg_b = pre_b_ref[Tc - 1 - ls].astype(jnp.float32)
        gf = jnp.dot(h_f.astype(jnp.bfloat16), whh_f_ref[...],
                     preferred_element_type=jnp.float32) + pg_f
        gb = jnp.dot(h_b.astype(jnp.bfloat16), whh_b_ref[...],
                     preferred_element_type=jnp.float32) + pg_b

        def lstm_cell(g, c):                              # f32 gate math (v5e-safe)
            i = jax.nn.sigmoid(g[:, 0 * Hp:1 * Hp])       # Hp-wide lane-aligned slabs
            f = jax.nn.sigmoid(g[:, 1 * Hp:2 * Hp])
            u = jnp.tanh(g[:, 2 * Hp:3 * Hp])
            o = jax.nn.sigmoid(g[:, 3 * Hp:4 * Hp])
            c_new = f * c + i * u
            return o * jnp.tanh(c_new), c_new

        hf_new, cf_new = lstm_cell(gf, c_f)
        hb_new, cb_new = lstm_cell(gb, c_b)
        # pack_padded_sequence semantics: fwd advances while s < len,
        # bwd advances while (Tp-1-s) < len.
        m_f = s < lens
        m_b = ((Tp - 1) - s) < lens
        h_f = jnp.where(m_f, hf_new, h_f)
        c_f = jnp.where(m_f, cf_new, c_f)
        h_b = jnp.where(m_b, hb_new, h_b)
        c_b = jnp.where(m_b, cb_new, c_b)
        return h_f, c_f, h_b, c_b

    carry0 = (h_ref[:, :Hp], c_ref[:, :Hp], h_ref[:, Hp:], c_ref[:, Hp:])
    h_f, c_f, h_b, c_b = jax.lax.fori_loop(0, Tc, step, carry0, unroll=unroll)
    h_ref[:, :Hp] = h_f
    h_ref[:, Hp:] = h_b
    c_ref[:, :Hp] = c_f
    c_ref[:, Hp:] = c_b

    # ---- FC head + ELU, only on the last chunk ----------------------------
    @pl.when(cidx == nchunks - 1)
    def _head():
        h = h_ref[...]                                    # [h_fwd | h_bwd] (Bp, 2Hp)
        z1 = jnp.dot(h.astype(jnp.bfloat16), w1_ref[...],
                     preferred_element_type=jnp.float32) + b1_ref[...]
        z1 = jnp.where(z1 > 0, z1, 0.01 * z1)             # LeakyReLU(0.01)
        z2 = jnp.dot(z1.astype(jnp.bfloat16), w2_ref[...],
                     preferred_element_type=jnp.float32) + b2_ref[...]
        # ELU(alpha=1); exp only on the clamped negative branch.
        out_ref[...] = jnp.where(z2 > 0, z2, jnp.exp(jnp.minimum(z2, 0.0)) - 1.0)


# ---------------------------------------------------------------------------
# Wrapper helpers
# ---------------------------------------------------------------------------
def _round_up(x, m):
    return (x + m - 1) // m * m


def _vmem_budget_bytes():
    # Generation-aware: ~3/4 of physical VMEM (64 MiB/TC on v7x, 128 MiB on
    # v5e/v6e).  Conservative fallback if the query is unavailable.
    try:
        cap = int(pltpu.get_tpu_info().vmem_capacity_bytes)
    except Exception:
        cap = 64 << 20
    return (cap * 3) // 4


def _pick_time_chunk(T, Bp, E, Hp, budget):
    # Bytes that scale with the chunk: 2 directions x 2 pipeline buffers of
    # (Tc, Bp, E) bf16 x-tiles + two (Tc, Bp, 4Hp) bf16 pre-gate scratches.
    per_t = Bp * (2 * 2 * E * 2 + 2 * 4 * Hp * 2)
    tc = max(8, (budget // 3) // max(per_t, 1))
    return int(max(1, min(tc, T, 512)))


def _vmem_estimate(Tc, Bp, E, Hp, Cp):
    bf, f32 = 2, 4
    x_tiles = 2 * 2 * Tc * Bp * E * bf                  # two x specs, double-buffered
    lens = 2 * Bp * Hp * 4
    weights = 2 * (2 * E * 4 * Hp * bf + 2 * 4 * Hp * f32
                   + 2 * Hp * 4 * Hp * bf + 2 * Hp * Hp * bf
                   + Hp * f32 + Hp * Cp * bf + Cp * f32)
    out = 2 * Bp * Cp * f32
    scratch = 2 * Tc * Bp * 4 * Hp * bf + 2 * Bp * 2 * Hp * f32
    return x_tiles + lens + weights + out + scratch


def _pad_gate_blocks(w, h, hp):
    """Last dim holds 4 gate blocks [i,f,g,o] of width h; pad each to hp."""
    lead = w.shape[:-1]
    w4 = w.reshape(lead + (4, h))
    w4 = jnp.pad(w4, [(0, 0)] * len(lead) + [(0, 0), (0, hp - h)])
    return w4.reshape(lead + (4 * hp,))


def init_params(key, vocab_size, embed_dim, hid_dim, num_classes=9):
    ks = jax.random.split(key, 13)
    s = 0.1
    emb = jax.random.normal(ks[0], (vocab_size, embed_dim), jnp.float32) * s
    emb = emb.at[0].set(0.0)                 # padding_idx=0 -> zero row
    return {
        "embedding": emb,
        # per-direction LSTM weights, stored transposed ([in, 4H], gates i,f,g,o)
        "wih_f": jax.random.normal(ks[1], (embed_dim, 4 * hid_dim), jnp.float32) * s,
        "whh_f": jax.random.normal(ks[2], (hid_dim, 4 * hid_dim), jnp.float32) * s,
        "b_f": (jax.random.normal(ks[3], (1, 4 * hid_dim), jnp.float32)
                + jax.random.normal(ks[4], (1, 4 * hid_dim), jnp.float32)) * s,  # b_ih+b_hh
        "wih_b": jax.random.normal(ks[5], (embed_dim, 4 * hid_dim), jnp.float32) * s,
        "whh_b": jax.random.normal(ks[6], (hid_dim, 4 * hid_dim), jnp.float32) * s,
        "b_b": (jax.random.normal(ks[7], (1, 4 * hid_dim), jnp.float32)
                + jax.random.normal(ks[8], (1, 4 * hid_dim), jnp.float32)) * s,
        # fc head, stored transposed ([in, out]); w1 rows ordered [fwd H | bwd H]
        "w1": jax.random.normal(ks[9], (2 * hid_dim, hid_dim), jnp.float32) * s,
        "b1": jax.random.normal(ks[10], (1, hid_dim), jnp.float32) * s,
        "w2": jax.random.normal(ks[11], (hid_dim, num_classes), jnp.float32) * s,
        "b2": jax.random.normal(ks[12], (1, num_classes), jnp.float32) * s,
    }


# ---------------------------------------------------------------------------
# Forward
# ---------------------------------------------------------------------------
@functools.partial(jax.jit, static_argnames=("time_chunk",))
def simple_rnn_forward(tokens, lengths, params, *, time_chunk=None):
    B, T = tokens.shape
    E = params["wih_f"].shape[0]
    H = params["whh_f"].shape[0]
    C = params["w2"].shape[1]

    # ---- alignment padding: sublanes (B), lanes (H gate slabs, classes) ----
    Bp = _round_up(B, 8)
    Hp = _round_up(H, 128)
    Cp = _round_up(C, 128)

    budget = _vmem_budget_bytes()
    Tc = time_chunk if time_chunk is not None else _pick_time_chunk(T, Bp, E, Hp, budget)
    nchunks = pl.cdiv(T, Tc)
    Tp = nchunks * Tc

    # ---- glue: embedding gather + time-major layout stay in plain XLA ------
    tok_p = jnp.zeros((Bp, T), tokens.dtype).at[:B].set(tokens)
    emb = jnp.take(params["embedding"], tok_p, axis=0)          # (Bp, T, E)
    x_tm = jnp.transpose(emb, (1, 0, 2))                        # (T, Bp, E)
    x_tm = jnp.pad(x_tm, ((0, Tp - T), (0, 0), (0, 0))).astype(jnp.bfloat16)

    len_p = jnp.zeros((Bp,), jnp.int32).at[:B].set(
        jnp.minimum(lengths.astype(jnp.int32), T))
    lens2d = jnp.broadcast_to(len_p[:, None], (Bp, Hp))         # broadcast-friendly VMEM

    # ---- pad weights (per-gate column padding keeps the i,f,g,o layout) ----
    wih_f = _pad_gate_blocks(params["wih_f"], H, Hp)            # (E, 4Hp)
    wih_b = _pad_gate_blocks(params["wih_b"], H, Hp)
    b_f = _pad_gate_blocks(params["b_f"], H, Hp)                # (1, 4Hp)
    b_b = _pad_gate_blocks(params["b_b"], H, Hp)
    whh_f = _pad_gate_blocks(jnp.pad(params["whh_f"], ((0, Hp - H), (0, 0))), H, Hp)
    whh_b = _pad_gate_blocks(jnp.pad(params["whh_b"], ((0, Hp - H), (0, 0))), H, Hp)
    w1 = jnp.concatenate([jnp.pad(params["w1"][:H], ((0, Hp - H), (0, 0))),
                          jnp.pad(params["w1"][H:], ((0, Hp - H), (0, 0)))], axis=0)
    w1 = jnp.pad(w1, ((0, 0), (0, Hp - H)))                     # (2Hp, Hp)
    b1 = jnp.pad(params["b1"], ((0, 0), (0, Hp - H)))           # (1, Hp)
    w2 = jnp.pad(params["w2"], ((0, Hp - H), (0, Cp - C)))      # (Hp, Cp)
    b2 = jnp.pad(params["b2"], ((0, 0), (0, Cp - C)))           # (1, Cp)

    vmem_limit = int(min(max(2 * _vmem_estimate(Tc, Bp, E, Hp, Cp), 32 << 20), budget))

    kernel = functools.partial(_bilstm_fc_kernel, Tp=Tp, Tc=Tc, Bp=Bp, E=E, Hp=Hp,
                               unroll=max(1, min(4, Tc)))

    grid_spec = pltpu.PrefetchScalarGridSpec(
        num_scalar_prefetch=0,
        grid=(nchunks,),
        in_specs=[
            pl.BlockSpec((Tc, Bp, E), lambda c: (c, 0, 0)),               # x fwd chunk
            pl.BlockSpec((Tc, Bp, E), lambda c: (nchunks - 1 - c, 0, 0)),  # x bwd chunk
            pl.BlockSpec((Bp, Hp), lambda c: (0, 0)),                     # lengths
            pl.BlockSpec((E, 4 * Hp), lambda c: (0, 0)),                  # wih_f
            pl.BlockSpec((E, 4 * Hp), lambda c: (0, 0)),                  # wih_b
            pl.BlockSpec((1, 4 * Hp), lambda c: (0, 0)),                  # b_f
            pl.BlockSpec((1, 4 * Hp), lambda c: (0, 0)),                  # b_b
            pl.BlockSpec((Hp, 4 * Hp), lambda c: (0, 0)),                 # whh_f
            pl.BlockSpec((Hp, 4 * Hp), lambda c: (0, 0)),                 # whh_b
            pl.BlockSpec((2 * Hp, Hp), lambda c: (0, 0)),                 # w1
            pl.BlockSpec((1, Hp), lambda c: (0, 0)),                      # b1
            pl.BlockSpec((Hp, Cp), lambda c: (0, 0)),                     # w2
            pl.BlockSpec((1, Cp), lambda c: (0, 0)),                      # b2
        ],
        out_specs=pl.BlockSpec((Bp, Cp), lambda c: (0, 0)),
        scratch_shapes=[
            pltpu.VMEM((Tc, Bp, 4 * Hp), jnp.bfloat16),   # fwd pre-gates (bf16)
            pltpu.VMEM((Tc, Bp, 4 * Hp), jnp.bfloat16),   # bwd pre-gates (bf16)
            pltpu.VMEM((Bp, 2 * Hp), jnp.float32),        # h state, carried
            pltpu.VMEM((Bp, 2 * Hp), jnp.float32),        # c state, carried
        ],
    )

    out = pl.pallas_call(
        kernel,
        out_shape=jax.ShapeDtypeStruct((Bp, Cp), jnp.float32),
        grid_spec=grid_spec,
        compiler_params=pltpu.CompilerParams(
            dimension_semantics=("arbitrary",),           # sequential recurrence
            vmem_limit_bytes=vmem_limit),
    )(x_tm, x_tm, lens2d,
      wih_f.astype(jnp.bfloat16), wih_b.astype(jnp.bfloat16), b_f, b_b,
      whh_f.astype(jnp.bfloat16), whh_b.astype(jnp.bfloat16),
      w1.astype(jnp.bfloat16), b1, w2.astype(jnp.bfloat16), b2)

    return jnp.squeeze(out[:B, :C])   # matches torch .squeeze()


if __name__ == "__main__":
    VOCAB, EMBED, HID = 20, 16, 32
    B, T = 2, 8

    key = jax.random.PRNGKey(0)
    k_param, k_tok = jax.random.split(key)
    params = init_params(k_param, VOCAB, EMBED, HID)

    # lengths sorted descending (pack_padded_sequence enforce_sorted=True)
    lengths = jnp.array([8, 5], dtype=jnp.int32)
    tokens = jax.random.randint(k_tok, (B, T), 1, VOCAB, dtype=jnp.int32)
    # zero out padded positions (padding token id = 0)
    pos = jnp.arange(T)[None, :]
    tokens = jnp.where(pos < lengths[:, None], tokens, 0)

    # time_chunk=4 -> 2 grid steps, exercising the pipelined state-carry path.
    out = simple_rnn_forward(tokens, lengths, params, time_chunk=4)
    jax.block_until_ready(out)
    assert out.shape == (B, 9)
    print("KERNEL_OK")
</pallas_src>

<mosaic_0001>
module attributes {stable_mosaic.version = 11 : i64} {
  func.func @_bilstm_fc_kernel(%arg0: i32, %arg1: memref<4x8x16xbf16, #tpu.memory_space<vmem>>, %arg2: memref<4x8x16xbf16, #tpu.memory_space<vmem>>, %arg3: memref<8x128xi32, #tpu.memory_space<vmem>>, %arg4: memref<16x512xbf16, #tpu.memory_space<vmem>>, %arg5: memref<16x512xbf16, #tpu.memory_space<vmem>>, %arg6: memref<1x512xf32, #tpu.memory_space<vmem>>, %arg7: memref<1x512xf32, #tpu.memory_space<vmem>>, %arg8: memref<128x512xbf16, #tpu.memory_space<vmem>>, %arg9: memref<128x512xbf16, #tpu.memory_space<vmem>>, %arg10: memref<256x128xbf16, #tpu.memory_space<vmem>>, %arg11: memref<1x128xf32, #tpu.memory_space<vmem>>, %arg12: memref<128x128xbf16, #tpu.memory_space<vmem>>, %arg13: memref<1x128xf32, #tpu.memory_space<vmem>>, %arg14: memref<8x128xf32, #tpu.memory_space<vmem>>, %arg15: memref<4x8x512xbf16, #tpu.memory_space<vmem>>, %arg16: memref<4x8x512xbf16, #tpu.memory_space<vmem>>, %arg17: memref<8x256xf32, #tpu.memory_space<vmem>>, %arg18: memref<8x256xf32, #tpu.memory_space<vmem>>) attributes {dimension_semantics = [#tpu.dimension_semantics<arbitrary>], iteration_bounds = array<i64: 2>, scalar_prefetch = 0 : i64, scratch_operands = 4 : i64, tpu.core_type = #tpu.core_type<tc>, window_params = [{transform_indices = @transform_0, window_bounds = array<i64: 4, 8, 16>}, {transform_indices = @transform_1, window_bounds = array<i64: 4, 8, 16>}, {pipeline_mode = #tpu.pipeline_mode<synchronous>, transform_indices = @transform_2, window_bounds = array<i64: 8, 128>}, {pipeline_mode = #tpu.pipeline_mode<synchronous>, transform_indices = @transform_3, window_bounds = array<i64: 16, 512>}, {pipeline_mode = #tpu.pipeline_mode<synchronous>, transform_indices = @transform_4, window_bounds = array<i64: 16, 512>}, {pipeline_mode = #tpu.pipeline_mode<synchronous>, transform_indices = @transform_5, window_bounds = array<i64: 1, 512>}, {pipeline_mode = #tpu.pipeline_mode<synchronous>, transform_indices = @transform_6, window_bounds = array<i64: 1, 512>}, {pipeline_mode = #tpu.pipeline_mode<synchronous>, transform_indices = @transform_7, window_bounds = array<i64: 128, 512>}, {pipeline_mode = #tpu.pipeline_mode<synchronous>, transform_indices = @transform_8, window_bounds = array<i64: 128, 512>}, {pipeline_mode = #tpu.pipeline_mode<synchronous>, transform_indices = @transform_9, window_bounds = array<i64: 256, 128>}, {pipeline_mode = #tpu.pipeline_mode<synchronous>, transform_indices = @transform_10, window_bounds = array<i64: 1, 128>}, {pipeline_mode = #tpu.pipeline_mode<synchronous>, transform_indices = @transform_11, window_bounds = array<i64: 128, 128>}, {pipeline_mode = #tpu.pipeline_mode<synchronous>, transform_indices = @transform_12, window_bounds = array<i64: 1, 128>}, {pipeline_mode = #tpu.pipeline_mode<synchronous>, transform_indices = @transform_13, window_bounds = array<i64: 8, 128>}]} {
    %c0_i32 = arith.constant 0 : i32
    %0 = arith.cmpi eq, %arg0, %c0_i32 : i32
    %1 = arith.extui %0 : i1 to i32
    %c0_i32_0 = arith.constant 0 : i32
    %2 = arith.cmpi ne, %1, %c0_i32_0 : i32
    scf.if %2 {
      %cst_113 = arith.constant 0.000000e+00 : f32
      %344 = vector.broadcast %cst_113 : f32 to vector<8x256xf32>
      %c0_114 = arith.constant 0 : index
      %c0_115 = arith.constant 0 : index
      %345 = vector.load %arg17[%c0_114, %c0_115] : memref<8x256xf32, #tpu.memory_space<vmem>>, vector<8x256xf32>
      tpu.vector_store %arg17[%c0_114, %c0_115], %344 {strides = array<i32>} : memref<8x256xf32, #tpu.memory_space<vmem>>, vector<8x256xf32>,
      %cst_116 = arith.constant 0.000000e+00 : f32
      %346 = vector.broadcast %cst_116 : f32 to vector<8x256xf32>
      %c0_117 = arith.constant 0 : index
      %c0_118 = arith.constant 0 : index
      %347 = vector.load %arg18[%c0_117, %c0_118] : memref<8x256xf32, #tpu.memory_space<vmem>>, vector<8x256xf32>
      tpu.vector_store %arg18[%c0_117, %c0_118], %346 {strides = array<i32>} : memref<8x256xf32, #tpu.memory_space<vmem>>, vector<8x256xf32>,
    } else {
    }
    %c0 = arith.constant 0 : index
    %c0_1 = arith.constant 0 : index
    %c0_2 = arith.constant 0 : index
    %3 = vector.load %arg1[%c0, %c0_1, %c0_2] : memref<4x8x16xbf16, #tpu.memory_space<vmem>>, vector<4x8x16xbf16>
    %4 = vector.shape_cast %3 : vector<4x8x16xbf16> to vector<32x16xbf16>
    %c0_3 = arith.constant 0 : index
    %c0_4 = arith.constant 0 : index
    %c0_5 = arith.constant 0 : index
    %5 = vector.load %arg2[%c0_3, %c0_4, %c0_5] : memref<4x8x16xbf16, #tpu.memory_space<vmem>>, vector<4x8x16xbf16>
    %6 = vector.shape_cast %5 : vector<4x8x16xbf16> to vector<32x16xbf16>
    %c0_6 = arith.constant 0 : index
    %c0_7 = arith.constant 0 : index
    %7 = vector.load %arg4[%c0_6, %c0_7] : memref<16x512xbf16, #tpu.memory_space<vmem>>, vector<16x512xbf16>
    %cst = arith.constant dense<0.000000e+00> : vector<32x512xf32>
    %8 = tpu.matmul %4, %7, %cst {dimension_numbers = #tpu.dot_dimension_numbers<[1], [0], [0], [1], [0, 0, 1, 1], [], []>} : vector<32x16xbf16>, vector<16x512xbf16>, vector<32x512xf32> -> vector<32x512xf32>
    %c0_8 = arith.constant 0 : index
    %c0_9 = arith.constant 0 : index
    %9 = vector.load %arg6[%c0_8, %c0_9] : memref<1x512xf32, #tpu.memory_space<vmem>>, vector<1x512xf32>
    %10 = vector.broadcast %9 : vector<1x512xf32> to vector<32x512xf32>
    %11 = arith.addf %8, %10 : vector<32x512xf32>
    %12 = vector.shape_cast %11 : vector<32x512xf32> to vector<4x8x512xf32>
    %13 = arith.truncf %12 : vector<4x8x512xf32> to vector<4x8x512xbf16>
    %c0_10 = arith.constant 0 : index
    %c0_11 = arith.constant 0 : index
    %c0_12 = arith.constant 0 : index
    %14 = vector.load %arg15[%c0_10, %c0_11, %c0_12] : memref<4x8x512xbf16, #tpu.memory_space<vmem>>, vector<4x8x512xbf16>
    tpu.vector_store %arg15[%c0_10, %c0_11, %c0_12], %13 {strides = array<i32>} : memref<4x8x512xbf16, #tpu.memory_space<vmem>>, vector<4x8x512xbf16>,
    %c0_13 = arith.constant 0 : index
    %c0_14 = arith.constant 0 : index
    %15 = vector.load %arg5[%c0_13, %c0_14] : memref<16x512xbf16, #tpu.memory_space<vmem>>, vector<16x512xbf16>
    %cst_15 = arith.constant dense<0.000000e+00> : vector<32x512xf32>
    %16 = tpu.matmul %6, %15, %cst_15 {dimension_numbers = #tpu.dot_dimension_numbers<[1], [0], [0], [1], [0, 0, 1, 1], [], []>} : vector<32x16xbf16>, vector<16x512xbf16>, vector<32x512xf32> -> vector<32x512xf32>
    %c0_16 = arith.constant 0 : index
    %c0_17 = arith.constant 0 : index
    %17 = vector.load %arg7[%c0_16, %c0_17] : memref<1x512xf32, #tpu.memory_space<vmem>>, vector<1x512xf32>
    %18 = vector.broadcast %17 : vector<1x512xf32> to vector<32x512xf32>
    %19 = arith.addf %16, %18 : vector<32x512xf32>
    %20 = vector.shape_cast %19 : vector<32x512xf32> to vector<4x8x512xf32>
    %21 = arith.truncf %20 : vector<4x8x512xf32> to vector<4x8x512xbf16>
    %c0_18 = arith.constant 0 : index
    %c0_19 = arith.constant 0 : index
    %c0_20 = arith.constant 0 : index
    %22 = vector.load %arg16[%c0_18, %c0_19, %c0_20] : memref<4x8x512xbf16, #tpu.memory_space<vmem>>, vector<4x8x512xbf16>
    tpu.vector_store %arg16[%c0_18, %c0_19, %c0_20], %21 {strides = array<i32>} : memref<4x8x512xbf16, #tpu.memory_space<vmem>>, vector<4x8x512xbf16>,
    %c0_21 = arith.constant 0 : index
    %c0_22 = arith.constant 0 : index
    %23 = vector.load %arg3[%c0_21, %c0_22] : memref<8x128xi32, #tpu.memory_space<vmem>>, vector<8x128xi32>
    %c4_i32 = arith.constant 4 : i32
    %24 = arith.muli %arg0, %c4_i32 : i32
    %c0_23 = arith.constant 0 : index
    %c0_24 = arith.constant 0 : index
    %25 = vector.load %arg17[%c0_23, %c0_24] : memref<8x256xf32, #tpu.memory_space<vmem>>, vector<8x128xf32>
    %c0_25 = arith.constant 0 : index
    %c0_26 = arith.constant 0 : index
    %26 = vector.load %arg18[%c0_25, %c0_26] : memref<8x256xf32, #tpu.memory_space<vmem>>, vector<8x128xf32>
    %c0_27 = arith.constant 0 : index
    %c128 = arith.constant 128 : index
    %27 = vector.load %arg17[%c0_27, %c128] : memref<8x256xf32, #tpu.memory_space<vmem>>, vector<8x128xf32>
    %c0_28 = arith.constant 0 : index
    %c128_29 = arith.constant 128 : index
    %28 = vector.load %arg18[%c0_28, %c128_29] : memref<8x256xf32, #tpu.memory_space<vmem>>, vector<8x128xf32>
    %c0_i32_30 = arith.constant 0 : i32
    %29 = arith.addi %24, %c0_i32_30 : i32
    %30 = arith.index_cast %c0_i32_30 : i32 to index
    %c0_31 = arith.constant 0 : index
    %c0_32 = arith.constant 0 : index
    %31 = vector.load %arg15[%30, %c0_31, %c0_32] : memref<4x8x512xbf16, #tpu.memory_space<vmem>>, vector<1x8x512xbf16>
    %32 = vector.shape_cast %31 : vector<1x8x512xbf16> to vector<8x512xbf16>
    %33 = arith.extf %32 : vector<8x512xbf16> to vector<8x512xf32>
    %c3_i32 = arith.constant 3 : i32
    %34 = arith.subi %c3_i32, %c0_i32_30 : i32
    %35 = arith.index_cast %34 : i32 to index
    %c0_33 = arith.constant 0 : index
    %c0_34 = arith.constant 0 : index
    %36 = vector.load %arg16[%35, %c0_33, %c0_34] : memref<4x8x512xbf16, #tpu.memory_space<vmem>>, vector<1x8x512xbf16>
    %37 = vector.shape_cast %36 : vector<1x8x512xbf16> to vector<8x512xbf16>
    %38 = arith.extf %37 : vector<8x512xbf16> to vector<8x512xf32>
    %39 = arith.truncf %25 : vector<8x128xf32> to vector<8x128xbf16>
    %c0_35 = arith.constant 0 : index
    %c0_36 = arith.constant 0 : index
    %40 = vector.load %arg8[%c0_35, %c0_36] : memref<128x512xbf16, #tpu.memory_space<vmem>>, vector<128x512xbf16>
    %cst_37 = arith.constant dense<0.000000e+00> : vector<8x512xf32>
    %41 = tpu.matmul %39, %40, %cst_37 {dimension_numbers = #tpu.dot_dimension_numbers<[1], [0], [0], [1], [0, 0, 1, 1], [], []>} : vector<8x128xbf16>, vector<128x512xbf16>, vector<8x512xf32> -> vector<8x512xf32>
    %42 = arith.addf %41, %33 : vector<8x512xf32>
    %43 = arith.truncf %27 : vector<8x128xf32> to vector<8x128xbf16>
    %c0_38 = arith.constant 0 : index
    %c0_39 = arith.constant 0 : index
    %44 = vector.load %arg9[%c0_38, %c0_39] : memref<128x512xbf16, #tpu.memory_space<vmem>>, vector<128x512xbf16>
    %cst_40 = arith.constant dense<0.000000e+00> : vector<8x512xf32>
    %45 = tpu.matmul %43, %44, %cst_40 {dimension_numbers = #tpu.dot_dimension_numbers<[1], [0], [0], [1], [0, 0, 1, 1], [], []>} : vector<8x128xbf16>, vector<128x512xbf16>, vector<8x512xf32> -> vector<8x512xf32>
    %46 = arith.addf %45, %38 : vector<8x512xf32>
    %47 = vector.extract_strided_slice %42 {offsets = [0, 0], sizes = [8, 128], strides = [1, 1]} : vector<8x512xf32> to vector<8x128xf32>
    %48 = arith.negf %47 : vector<8x128xf32>
    %49 = math.exp %48 : vector<8x128xf32>
    %cst_41 = arith.constant 1.000000e+00 : f32
    %50 = vector.broadcast %cst_41 : f32 to vector<8x128xf32>
    %51 = arith.addf %50, %49 : vector<8x128xf32>
    %52 = arith.divf %50, %51 : vector<8x128xf32>
    %53 = vector.extract_strided_slice %42 {offsets = [0, 128], sizes = [8, 128], strides = [1, 1]} : vector<8x512xf32> to vector<8x128xf32>
    %54 = arith.negf %53 : vector<8x128xf32>
    %55 = math.exp %54 : vector<8x128xf32>
    %cst_42 = arith.constant 1.000000e+00 : f32
    %56 = vector.broadcast %cst_42 : f32 to vector<8x128xf32>
    %57 = arith.addf %56, %55 : vector<8x128xf32>
    %58 = arith.divf %56, %57 : vector<8x128xf32>
    %59 = vector.extract_strided_slice %42 {offsets = [0, 256], sizes = [8, 128], strides = [1, 1]} : vector<8x512xf32> to vector<8x128xf32>
    %60 = math.tanh %59 : vector<8x128xf32>
    %61 = vector.extract_strided_slice %42 {offsets = [0, 384], sizes = [8, 128], strides = [1, 1]} : vector<8x512xf32> to vector<8x128xf32>
    %62 = arith.negf %61 : vector<8x128xf32>
    %63 = math.exp %62 : vector<8x128xf32>
    %cst_43 = arith.constant 1.000000e+00 : f32
    %64 = vector.broadcast %cst_43 : f32 to vector<8x128xf32>
    %65 = arith.addf %64, %63 : vector<8x128xf32>
    %66 = arith.divf %64, %65 : vector<8x128xf32>
    %67 = arith.mulf %58, %26 : vector<8x128xf32>
    %68 = arith.mulf %52, %60 : vector<8x128xf32>
    %69 = arith.addf %67, %68 : vector<8x128xf32>
    %70 = math.tanh %69 : vector<8x128xf32>
    %71 = arith.mulf %66, %70 : vector<8x128xf32>
    %72 = vector.extract_strided_slice %46 {offsets = [0, 0], sizes = [8, 128], strides = [1, 1]} : vector<8x512xf32> to vector<8x128xf32>
    %73 = arith.negf %72 : vector<8x128xf32>
    %74 = math.exp %73 : vector<8x128xf32>
    %cst_44 = arith.constant 1.000000e+00 : f32
    %75 = vector.broadcast %cst_44 : f32 to vector<8x128xf32>
    %76 = arith.addf %75, %74 : vector<8x128xf32>
    %77 = arith.divf %75, %76 : vector<8x128xf32>
    %78 = vector.extract_strided_slice %46 {offsets = [0, 128], sizes = [8, 128], strides = [1, 1]} : vector<8x512xf32> to vector<8x128xf32>
    %79 = arith.negf %78 : vector<8x128xf32>
    %80 = math.exp %79 : vector<8x128xf32>
    %cst_45 = arith.constant 1.000000e+00 : f32
    %81 = vector.broadcast %cst_45 : f32 to vector<8x128xf32>
    %82 = arith.addf %81, %80 : vector<8x128xf32>
    %83 = arith.divf %81, %82 : vector<8x128xf32>
    %84 = vector.extract_strided_slice %46 {offsets = [0, 256], sizes = [8, 128], strides = [1, 1]} : vector<8x512xf32> to vector<8x128xf32>
    %85 = math.tanh %84 : vector<8x128xf32>
    %86 = vector.extract_strided_slice %46 {offsets = [0, 384], sizes = [8, 128], strides = [1, 1]} : vector<8x512xf32> to vector<8x128xf32>
    %87 = arith.negf %86 : vector<8x128xf32>
    %88 = math.exp %87 : vector<8x128xf32>
    %cst_46 = arith.constant 1.000000e+00 : f32
    %89 = vector.broadcast %cst_46 : f32 to vector<8x128xf32>
    %90 = arith.addf %89, %88 : vector<8x128xf32>
    %91 = arith.divf %89, %90 : vector<8x128xf32>
    %92 = arith.mulf %83, %28 : vector<8x128xf32>
    %93 = arith.mulf %77, %85 : vector<8x128xf32>
    %94 = arith.addf %92, %93 : vector<8x128xf32>
    %95 = math.tanh %94 : vector<8x128xf32>
    %96 = arith.mulf %91, %95 : vector<8x128xf32>
    %97 = vector.broadcast %29 : i32 to vector<8x128xi32>
    %98 = arith.cmpi slt, %97, %23 : vector<8x128xi32>
    %c7_i32 = arith.constant 7 : i32
    %99 = arith.subi %c7_i32, %29 : i32
    %100 = vector.broadcast %99 : i32 to vector<8x128xi32>
    %101 = arith.cmpi slt, %100, %23 : vector<8x128xi32>
    %102 = arith.select %98, %71, %25 : vector<8x128xi1>, vector<8x128xf32>
    %103 = arith.select %98, %69, %26 : vector<8x128xi1>, vector<8x128xf32>
    %104 = arith.select %101, %96, %27 : vector<8x128xi1>, vector<8x128xf32>
    %105 = arith.select %101, %94, %28 : vector<8x128xi1>, vector<8x128xf32>
    %c1_i32 = arith.constant 1 : i32
    %106 = arith.addi %24, %c1_i32 : i32
    %107 = arith.index_cast %c1_i32 : i32 to index
    %c0_47 = arith.constant 0 : index
    %c0_48 = arith.constant 0 : index
    %108 = vector.load %arg15[%107, %c0_47, %c0_48] : memref<4x8x512xbf16, #tpu.memory_space<vmem>>, vector<1x8x512xbf16>
    %109 = vector.shape_cast %108 : vector<1x8x512xbf16> to vector<8x512xbf16>
    %110 = arith.extf %109 : vector<8x512xbf16> to vector<8x512xf32>
    %c3_i32_49 = arith.constant 3 : i32
    %111 = arith.subi %c3_i32_49, %c1_i32 : i32
    %112 = arith.index_cast %111 : i32 to index
    %c0_50 = arith.constant 0 : index
    %c0_51 = arith.constant 0 : index
    %113 = vector.load %arg16[%112, %c0_50, %c0_51] : memref<4x8x512xbf16, #tpu.memory_space<vmem>>, vector<1x8x512xbf16>
    %114 = vector.shape_cast %113 : vector<1x8x512xbf16> to vector<8x512xbf16>
    %115 = arith.extf %114 : vector<8x512xbf16> to vector<8x512xf32>
    %116 = arith.truncf %102 : vector<8x128xf32> to vector<8x128xbf16>
    %c0_52 = arith.constant 0 : index
    %c0_53 = arith.constant 0 : index
    %117 = vector.load %arg8[%c0_52, %c0_53] : memref<128x512xbf16, #tpu.memory_space<vmem>>, vector<128x512xbf16>
    %cst_54 = arith.constant dense<0.000000e+00> : vector<8x512xf32>
    %118 = tpu.matmul %116, %117, %cst_54 {dimension_numbers = #tpu.dot_dimension_numbers<[1], [0], [0], [1], [0, 0, 1, 1], [], []>} : vector<8x128xbf16>, vector<128x512xbf16>, vector<8x512xf32> -> vector<8x512xf32>
    %119 = arith.addf %118, %110 : vector<8x512xf32>
    %120 = arith.truncf %104 : vector<8x128xf32> to vector<8x128xbf16>
    %c0_55 = arith.constant 0 : index
    %c0_56 = arith.constant 0 : index
    %121 = vector.load %arg9[%c0_55, %c0_56] : memref<128x512xbf16, #tpu.memory_space<vmem>>, vector<128x512xbf16>
    %cst_57 = arith.constant dense<0.000000e+00> : vector<8x512xf32>
    %122 = tpu.matmul %120, %121, %cst_57 {dimension_numbers = #tpu.dot_dimension_numbers<[1], [0], [0], [1], [0, 0, 1, 1], [], []>} : vector<8x128xbf16>, vector<128x512xbf16>, vector<8x512xf32> -> vector<8x512xf32>
    %123 = arith.addf %122, %115 : vector<8x512xf32>
    %124 = vector.extract_strided_slice %119 {offsets = [0, 0], sizes = [8, 128], strides = [1, 1]} : vector<8x512xf32> to vector<8x128xf32>
    %125 = arith.negf %124 : vector<8x128xf32>
    %126 = math.exp %125 : vector<8x128xf32>
    %cst_58 = arith.constant 1.000000e+00 : f32
    %127 = vector.broadcast %cst_58 : f32 to vector<8x128xf32>
    %128 = arith.addf %127, %126 : vector<8x128xf32>
    %129 = arith.divf %127, %128 : vector<8x128xf32>
    %130 = vector.extract_strided_slice %119 {offsets = [0, 128], sizes = [8, 128], strides = [1, 1]} : vector<8x512xf32> to vector<8x128xf32>
    %131 = arith.negf %130 : vector<8x128xf32>
    %132 = math.exp %131 : vector<8x128xf32>
    %cst_59 = arith.constant 1.000000e+00 : f32
    %133 = vector.broadcast %cst_59 : f32 to vector<8x128xf32>
    %134 = arith.addf %133, %132 : vector<8x128xf32>
    %135 = arith.divf %133, %134 : vector<8x128xf32>
    %136 = vector.extract_strided_slice %119 {offsets = [0, 256], sizes = [8, 128], strides = [1, 1]} : vector<8x512xf32> to vector<8x128xf32>
    %137 = math.tanh %136 : vector<8x128xf32>
    %138 = vector.extract_strided_slice %119 {offsets = [0, 384], sizes = [8, 128], strides = [1, 1]} : vector<8x512xf32> to vector<8x128xf32>
    %139 = arith.negf %138 : vector<8x128xf32>
    %140 = math.exp %139 : vector<8x128xf32>
    %cst_60 = arith.constant 1.000000e+00 : f32
    %141 = vector.broadcast %cst_60 : f32 to vector<8x128xf32>
    %142 = arith.addf %141, %140 : vector<8x128xf32>
    %143 = arith.divf %141, %142 : vector<8x128xf32>
    %144 = arith.mulf %135, %103 : vector<8x128xf32>
    %145 = arith.mulf %129, %137 : vector<8x128xf32>
    %146 = arith.addf %144, %145 : vector<8x128xf32>
    %147 = math.tanh %146 : vector<8x128xf32>
    %148 = arith.mulf %143, %147 : vector<8x128xf32>
    %149 = vector.extract_strided_slice %123 {offsets = [0, 0], sizes = [8, 128], strides = [1, 1]} : vector<8x512xf32> to vector<8x128xf32>
    %150 = arith.negf %149 : vector<8x128xf32>
    %151 = math.exp %150 : vector<8x128xf32>
    %cst_61 = arith.constant 1.000000e+00 : f32
    %152 = vector.broadcast %cst_61 : f32 to vector<8x128xf32>
    %153 = arith.addf %152, %151 : vector<8x128xf32>
    %154 = arith.divf %152, %153 : vector<8x128xf32>
    %155 = vector.extract_strided_slice %123 {offsets = [0, 128], sizes = [8, 128], strides = [1, 1]} : vector<8x512xf32> to vector<8x128xf32>
    %156 = arith.negf %155 : vector<8x128xf32>
    %157 = math.exp %156 : vector<8x128xf32>
    %cst_62 = arith.constant 1.000000e+00 : f32
    %158 = vector.broadcast %cst_62 : f32 to vector<8x128xf32>
    %159 = arith.addf %158, %157 : vector<8x128xf32>
    %160 = arith.divf %158, %159 : vector<8x128xf32>
    %161 = vector.extract_strided_slice %123 {offsets = [0, 256], sizes = [8, 128], strides = [1, 1]} : vector<8x512xf32> to vector<8x128xf32>
    %162 = math.tanh %161 : vector<8x128xf32>
    %163 = vector.extract_strided_slice %123 {offsets = [0, 384], sizes = [8, 128], strides = [1, 1]} : vector<8x512xf32> to vector<8x128xf32>
    %164 = arith.negf %163 : vector<8x128xf32>
    %165 = math.exp %164 : vector<8x128xf32>
    %cst_63 = arith.constant 1.000000e+00 : f32
    %166 = vector.broadcast %cst_63 : f32 to vector<8x128xf32>
    %167 = arith.addf %166, %165 : vector<8x128xf32>
    %168 = arith.divf %166, %167 : vector<8x128xf32>
    %169 = arith.mulf %160, %105 : vector<8x128xf32>
    %170 = arith.mulf %154, %162 : vector<8x128xf32>
    %171 = arith.addf %169, %170 : vector<8x128xf32>
    %172 = math.tanh %171 : vector<8x128xf32>
    %173 = arith.mulf %168, %172 : vector<8x128xf32>
    %174 = vector.broadcast %106 : i32 to vector<8x128xi32>
    %175 = arith.cmpi slt, %174, %23 : vector<8x128xi32>
    %c7_i32_64 = arith.constant 7 : i32
    %176 = arith.subi %c7_i32_64, %106 : i32
    %177 = vector.broadcast %176 : i32 to vector<8x128xi32>
    %178 = arith.cmpi slt, %177, %23 : vector<8x128xi32>
    %179 = arith.select %175, %148, %102 : vector<8x128xi1>, vector<8x128xf32>
    %180 = arith.select %175, %146, %103 : vector<8x128xi1>, vector<8x128xf32>
    %181 = arith.select %178, %173, %104 : vector<8x128xi1>, vector<8x128xf32>
    %182 = arith.select %178, %171, %105 : vector<8x128xi1>, vector<8x128xf32>
    %c2_i32 = arith.constant 2 : i32
    %183 = arith.addi %24, %c2_i32 : i32
    %184 = arith.index_cast %c2_i32 : i32 to index
    %c0_65 = arith.constant 0 : index
    %c0_66 = arith.constant 0 : index
    %185 = vector.load %arg15[%184, %c0_65, %c0_66] : memref<4x8x512xbf16, #tpu.memory_space<vmem>>, vector<1x8x512xbf16>
    %186 = vector.shape_cast %185 : vector<1x8x512xbf16> to vector<8x512xbf16>
    %187 = arith.extf %186 : vector<8x512xbf16> to vector<8x512xf32>
    %c3_i32_67 = arith.constant 3 : i32
    %188 = arith.subi %c3_i32_67, %c2_i32 : i32
    %189 = arith.index_cast %188 : i32 to index
    %c0_68 = arith.constant 0 : index
    %c0_69 = arith.constant 0 : index
    %190 = vector.load %arg16[%189, %c0_68, %c0_69] : memref<4x8x512xbf16, #tpu.memory_space<vmem>>, vector<1x8x512xbf16>
    %191 = vector.shape_cast %190 : vector<1x8x512xbf16> to vector<8x512xbf16>
    %192 = arith.extf %191 : vector<8x512xbf16> to vector<8x512xf32>
    %193 = arith.truncf %179 : vector<8x128xf32> to vector<8x128xbf16>
    %c0_70 = arith.constant 0 : index
    %c0_71 = arith.constant 0 : index
    %194 = vector.load %arg8[%c0_70, %c0_71] : memref<128x512xbf16, #tpu.memory_space<vmem>>, vector<128x512xbf16>
    %cst_72 = arith.constant dense<0.000000e+00> : vector<8x512xf32>
    %195 = tpu.matmul %193, %194, %cst_72 {dimension_numbers = #tpu.dot_dimension_numbers<[1], [0], [0], [1], [0, 0, 1, 1], [], []>} : vector<8x128xbf16>, vector<128x512xbf16>, vector<8x512xf32> -> vector<8x512xf32>
    %196 = arith.addf %195, %187 : vector<8x512xf32>
    %197 = arith.truncf %181 : vector<8x128xf32> to vector<8x128xbf16>
    %c0_73 = arith.constant 0 : index
    %c0_74 = arith.constant 0 : index
    %198 = vector.load %arg9[%c0_73, %c0_74] : memref<128x512xbf16, #tpu.memory_space<vmem>>, vector<128x512xbf16>
    %cst_75 = arith.constant dense<0.000000e+00> : vector<8x512xf32>
    %199 = tpu.matmul %197, %198, %cst_75 {dimension_numbers = #tpu.dot_dimension_numbers<[1], [0], [0], [1], [0, 0, 1, 1], [], []>} : vector<8x128xbf16>, vector<128x512xbf16>, vector<8x512xf32> -> vector<8x512xf32>
    %200 = arith.addf %199, %192 : vector<8x512xf32>
    %201 = vector.extract_strided_slice %196 {offsets = [0, 0], sizes = [8, 128], strides = [1, 1]} : vector<8x512xf32> to vector<8x128xf32>
    %202 = arith.negf %201 : vector<8x128xf32>
    %203 = math.exp %202 : vector<8x128xf32>
    %cst_76 = arith.constant 1.000000e+00 : f32
    %204 = vector.broadcast %cst_76 : f32 to vector<8x128xf32>
    %205 = arith.addf %204, %203 : vector<8x128xf32>
    %206 = arith.divf %204, %205 : vector<8x128xf32>
    %207 = vector.extract_strided_slice %196 {offsets = [0, 128], sizes = [8, 128], strides = [1, 1]} : vector<8x512xf32> to vector<8x128xf32>
    %208 = arith.negf %207 : vector<8x128xf32>
    %209 = math.exp %208 : vector<8x128xf32>
    %cst_77 = arith.constant 1.000000e+00 : f32
    %210 = vector.broadcast %cst_77 : f32 to vector<8x128xf32>
    %211 = arith.addf %210, %209 : vector<8x128xf32>
    %212 = arith.divf %210, %211 : vector<8x128xf32>
    %213 = vector.extract_strided_slice %196 {offsets = [0, 256], sizes = [8, 128], strides = [1, 1]} : vector<8x512xf32> to vector<8x128xf32>
    %214 = math.tanh %213 : vector<8x128xf32>
    %215 = vector.extract_strided_slice %196 {offsets = [0, 384], sizes = [8, 128], strides = [1, 1]} : vector<8x512xf32> to vector<8x128xf32>
    %216 = arith.negf %215 : vector<8x128xf32>
    %217 = math.exp %216 : vector<8x128xf32>
    %cst_78 = arith.constant 1.000000e+00 : f32
    %218 = vector.broadcast %cst_78 : f32 to vector<8x128xf32>
    %219 = arith.addf %218, %217 : vector<8x128xf32>
    %220 = arith.divf %218, %219 : vector<8x128xf32>
    %221 = arith.mulf %212, %180 : vector<8x128xf32>
    %222 = arith.mulf %206, %214 : vector<8x128xf32>
    %223 = arith.addf %221, %222 : vector<8x128xf32>
    %224 = math.tanh %223 : vector<8x128xf32>
    %225 = arith.mulf %220, %224 : vector<8x128xf32>
    %226 = vector.extract_strided_slice %200 {offsets = [0, 0], sizes = [8, 128], strides = [1, 1]} : vector<8x512xf32> to vector<8x128xf32>
    %227 = arith.negf %226 : vector<8x128xf32>
    %228 = math.exp %227 : vector<8x128xf32>
    %cst_79 = arith.constant 1.000000e+00 : f32
    %229 = vector.broadcast %cst_79 : f32 to vector<8x128xf32>
    %230 = arith.addf %229, %228 : vector<8x128xf32>
    %231 = arith.divf %229, %230 : vector<8x128xf32>
    %232 = vector.extract_strided_slice %200 {offsets = [0, 128], sizes = [8, 128], strides = [1, 1]} : vector<8x512xf32> to vector<8x128xf32>
    %233 = arith.negf %232 : vector<8x128xf32>
    %234 = math.exp %233 : vector<8x128xf32>
    %cst_80 = arith.constant 1.000000e+00 : f32
    %235 = vector.broadcast %cst_80 : f32 to vector<8x128xf32>
    %236 = arith.addf %235, %234 : vector<8x128xf32>
    %237 = arith.divf %235, %236 : vector<8x128xf32>
    %238 = vector.extract_strided_slice %200 {offsets = [0, 256], sizes = [8, 128], strides = [1, 1]} : vector<8x512xf32> to vector<8x128xf32>
    %239 = math.tanh %238 : vector<8x128xf32>
    %240 = vector.extract_strided_slice %200 {offsets = [0, 384], sizes = [8, 128], strides = [1, 1]} : vector<8x512xf32> to vector<8x128xf32>
    %241 = arith.negf %240 : vector<8x128xf32>
    %242 = math.exp %241 : vector<8x128xf32>
    %cst_81 = arith.constant 1.000000e+00 : f32
    %243 = vector.broadcast %cst_81 : f32 to vector<8x128xf32>
    %244 = arith.addf %243, %242 : vector<8x128xf32>
    %245 = arith.divf %243, %244 : vector<8x128xf32>
    %246 = arith.mulf %237, %182 : vector<8x128xf32>
    %247 = arith.mulf %231, %239 : vector<8x128xf32>
    %248 = arith.addf %246, %247 : vector<8x128xf32>
    %249 = math.tanh %248 : vector<8x128xf32>
    %250 = arith.mulf %245, %249 : vector<8x128xf32>
    %251 = vector.broadcast %183 : i32 to vector<8x128xi32>
    %252 = arith.cmpi slt, %251, %23 : vector<8x128xi32>
    %c7_i32_82 = arith.constant 7 : i32
    %253 = arith.subi %c7_i32_82, %183 : i32
    %254 = vector.broadcast %253 : i32 to vector<8x128xi32>
    %255 = arith.cmpi slt, %254, %23 : vector<8x128xi32>
    %256 = arith.select %252, %225, %179 : vector<8x128xi1>, vector<8x128xf32>
    %257 = arith.select %252, %223, %180 : vector<8x128xi1>, vector<8x128xf32>
    %258 = arith.select %255, %250, %181 : vector<8x128xi1>, vector<8x128xf32>
    %259 = arith.select %255, %248, %182 : vector<8x128xi1>, vector<8x128xf32>
    %c3_i32_83 = arith.constant 3 : i32
    %260 = arith.addi %24, %c3_i32_83 : i32
    %261 = arith.index_cast %c3_i32_83 : i32 to index
    %c0_84 = arith.constant 0 : index
    %c0_85 = arith.constant 0 : index
    %262 = vector.load %arg15[%261, %c0_84, %c0_85] : memref<4x8x512xbf16, #tpu.memory_space<vmem>>, vector<1x8x512xbf16>
    %263 = vector.shape_cast %262 : vector<1x8x512xbf16> to vector<8x512xbf16>
    %264 = arith.extf %263 : vector<8x512xbf16> to vector<8x512xf32>
    %c3_i32_86 = arith.constant 3 : i32
    %265 = arith.subi %c3_i32_86, %c3_i32_83 : i32
    %266 = arith.index_cast %265 : i32 to index
    %c0_87 = arith.constant 0 : index
    %c0_88 = arith.constant 0 : index
    %267 = vector.load %arg16[%266, %c0_87, %c0_88] : memref<4x8x512xbf16, #tpu.memory_space<vmem>>, vector<1x8x512xbf16>
    %268 = vector.shape_cast %267 : vector<1x8x512xbf16> to vector<8x512xbf16>
    %269 = arith.extf %268 : vector<8x512xbf16> to vector<8x512xf32>
    %270 = arith.truncf %256 : vector<8x128xf32> to vector<8x128xbf16>
    %c0_89 = arith.constant 0 : index
    %c0_90 = arith.constant 0 : index
    %271 = vector.load %arg8[%c0_89, %c0_90] : memref<128x512xbf16, #tpu.memory_space<vmem>>, vector<128x512xbf16>
    %cst_91 = arith.constant dense<0.000000e+00> : vector<8x512xf32>
    %272 = tpu.matmul %270, %271, %cst_91 {dimension_numbers = #tpu.dot_dimension_numbers<[1], [0], [0], [1], [0, 0, 1, 1], [], []>} : vector<8x128xbf16>, vector<128x512xbf16>, vector<8x512xf32> -> vector<8x512xf32>
    %273 = arith.addf %272, %264 : vector<8x512xf32>
    %274 = arith.truncf %258 : vector<8x128xf32> to vector<8x128xbf16>
    %c0_92 = arith.constant 0 : index
    %c0_93 = arith.constant 0 : index
    %275 = vector.load %arg9[%c0_92, %c0_93] : memref<128x512xbf16, #tpu.memory_space<vmem>>, vector<128x512xbf16>
    %cst_94 = arith.constant dense<0.000000e+00> : vector<8x512xf32>
    %276 = tpu.matmul %274, %275, %cst_94 {dimension_numbers = #tpu.dot_dimension_numbers<[1], [0], [0], [1], [0, 0, 1, 1], [], []>} : vector<8x128xbf16>, vector<128x512xbf16>, vector<8x512xf32> -> vector<8x512xf32>
    %277 = arith.addf %276, %269 : vector<8x512xf32>
    %278 = vector.extract_strided_slice %273 {offsets = [0, 0], sizes = [8, 128], strides = [1, 1]} : vector<8x512xf32> to vector<8x128xf32>
    %279 = arith.negf %278 : vector<8x128xf32>
    %280 = math.exp %279 : vector<8x128xf32>
    %cst_95 = arith.constant 1.000000e+00 : f32
    %281 = vector.broadcast %cst_95 : f32 to vector<8x128xf32>
    %282 = arith.addf %281, %280 : vector<8x128xf32>
    %283 = arith.divf %281, %282 : vector<8x128xf32>
    %284 = vector.extract_strided_slice %273 {offsets = [0, 128], sizes = [8, 128], strides = [1, 1]} : vector<8x512xf32> to vector<8x128xf32>
    %285 = arith.negf %284 : vector<8x128xf32>
    %286 = math.exp %285 : vector<8x128xf32>
    %cst_96 = arith.constant 1.000000e+00 : f32
    %287 = vector.broadcast %cst_96 : f32 to vector<8x128xf32>
    %288 = arith.addf %287, %286 : vector<8x128xf32>
    %289 = arith.divf %287, %288 : vector<8x128xf32>
    %290 = vector.extract_strided_slice %273 {offsets = [0, 256], sizes = [8, 128], strides = [1, 1]} : vector<8x512xf32> to vector<8x128xf32>
    %291 = math.tanh %290 : vector<8x128xf32>
    %292 = vector.extract_strided_slice %273 {offsets = [0, 384], sizes = [8, 128], strides = [1, 1]} : vector<8x512xf32> to vector<8x128xf32>
    %293 = arith.negf %292 : vector<8x128xf32>
    %294 = math.exp %293 : vector<8x128xf32>
    %cst_97 = arith.constant 1.000000e+00 : f32
    %295 = vector.broadcast %cst_97 : f32 to vector<8x128xf32>
    %296 = arith.addf %295, %294 : vector<8x128xf32>
    %297 = arith.divf %295, %296 : vector<8x128xf32>
    %298 = arith.mulf %289, %257 : vector<8x128xf32>
    %299 = arith.mulf %283, %291 : vector<8x128xf32>
    %300 = arith.addf %298, %299 : vector<8x128xf32>
    %301 = math.tanh %300 : vector<8x128xf32>
    %302 = arith.mulf %297, %301 : vector<8x128xf32>
    %303 = vector.extract_strided_slice %277 {offsets = [0, 0], sizes = [8, 128], strides = [1, 1]} : vector<8x512xf32> to vector<8x128xf32>
    %304 = arith.negf %303 : vector<8x128xf32>
    %305 = math.exp %304 : vector<8x128xf32>
    %cst_98 = arith.constant 1.000000e+00 : f32
    %306 = vector.broadcast %cst_98 : f32 to vector<8x128xf32>
    %307 = arith.addf %306, %305 : vector<8x128xf32>
    %308 = arith.divf %306, %307 : vector<8x128xf32>
    %309 = vector.extract_strided_slice %277 {offsets = [0, 128], sizes = [8, 128], strides = [1, 1]} : vector<8x512xf32> to vector<8x128xf32>
    %310 = arith.negf %309 : vector<8x128xf32>
    %311 = math.exp %310 : vector<8x128xf32>
    %cst_99 = arith.constant 1.000000e+00 : f32
    %312 = vector.broadcast %cst_99 : f32 to vector<8x128xf32>
    %313 = arith.addf %312, %311 : vector<8x128xf32>
    %314 = arith.divf %312, %313 : vector<8x128xf32>
    %315 = vector.extract_strided_slice %277 {offsets = [0, 256], sizes = [8, 128], strides = [1, 1]} : vector<8x512xf32> to vector<8x128xf32>
    %316 = math.tanh %315 : vector<8x128xf32>
    %317 = vector.extract_strided_slice %277 {offsets = [0, 384], sizes = [8, 128], strides = [1, 1]} : vector<8x512xf32> to vector<8x128xf32>
    %318 = arith.negf %317 : vector<8x128xf32>
    %319 = math.exp %318 : vector<8x128xf32>
    %cst_100 = arith.constant 1.000000e+00 : f32
    %320 = vector.broadcast %cst_100 : f32 to vector<8x128xf32>
    %321 = arith.addf %320, %319 : vector<8x128xf32>
    %322 = arith.divf %320, %321 : vector<8x128xf32>
    %323 = arith.mulf %314, %259 : vector<8x128xf32>
    %324 = arith.mulf %308, %316 : vector<8x128xf32>
    %325 = arith.addf %323, %324 : vector<8x128xf32>
    %326 = math.tanh %325 : vector<8x128xf32>
    %327 = arith.mulf %322, %326 : vector<8x128xf32>
    %328 = vector.broadcast %260 : i32 to vector<8x128xi32>
    %329 = arith.cmpi slt, %328, %23 : vector<8x128xi32>
    %c7_i32_101 = arith.constant 7 : i32
    %330 = arith.subi %c7_i32_101, %260 : i32
    %331 = vector.broadcast %330 : i32 to vector<8x128xi32>
    %332 = arith.cmpi slt, %331, %23 : vector<8x128xi32>
    %333 = arith.select %329, %302, %256 : vector<8x128xi1>, vector<8x128xf32>
    %334 = arith.select %329, %300, %257 : vector<8x128xi1>, vector<8x128xf32>
    %335 = arith.select %332, %327, %258 : vector<8x128xi1>, vector<8x128xf32>
    %336 = arith.select %332, %325, %259 : vector<8x128xi1>, vector<8x128xf32>
    %c4_i32_102 = arith.constant 4 : i32
    %c0_103 = arith.constant 0 : index
    %c0_104 = arith.constant 0 : index
    %337 = vector.load %arg17[%c0_103, %c0_104] : memref<8x256xf32, #tpu.memory_space<vmem>>, vector<8x128xf32>
    tpu.vector_store %arg17[%c0_103, %c0_104], %333 {strides = array<i32>} : memref<8x256xf32, #tpu.memory_space<vmem>>, vector<8x128xf32>,
    %c0_105 = arith.constant 0 : index
    %c128_106 = arith.constant 128 : index
    %338 = vector.load %arg17[%c0_105, %c128_106] : memref<8x256xf32, #tpu.memory_space<vmem>>, vector<8x128xf32>
    tpu.vector_store %arg17[%c0_105, %c128_106], %335 {strides = array<i32>} : memref<8x256xf32, #tpu.memory_space<vmem>>, vector<8x128xf32>,
    %c0_107 = arith.constant 0 : index
    %c0_108 = arith.constant 0 : index
    %339 = vector.load %arg18[%c0_107, %c0_108] : memref<8x256xf32, #tpu.memory_space<vmem>>, vector<8x128xf32>
    tpu.vector_store %arg18[%c0_107, %c0_108], %334 {strides = array<i32>} : memref<8x256xf32, #tpu.memory_space<vmem>>, vector<8x128xf32>,
    %c0_109 = arith.constant 0 : index
    %c128_110 = arith.constant 128 : index
    %340 = vector.load %arg18[%c0_109, %c128_110] : memref<8x256xf32, #tpu.memory_space<vmem>>, vector<8x128xf32>
    tpu.vector_store %arg18[%c0_109, %c128_110], %336 {strides = array<i32>} : memref<8x256xf32, #tpu.memory_space<vmem>>, vector<8x128xf32>,
    %c1_i32_111 = arith.constant 1 : i32
    %341 = arith.cmpi eq, %arg0, %c1_i32_111 : i32
    %342 = arith.extui %341 : i1 to i32
    %c0_i32_112 = arith.constant 0 : i32
    %343 = arith.cmpi ne, %342, %c0_i32_112 : i32
    scf.if %343 {
      %c0_113 = arith.constant 0 : index
      %c0_114 = arith.constant 0 : index
      %344 = vector.load %arg17[%c0_113, %c0_114] : memref<8x256xf32, #tpu.memory_space<vmem>>, vector<8x256xf32>
      %345 = arith.truncf %344 : vector<8x256xf32> to vector<8x256xbf16>
      %c0_115 = arith.constant 0 : index
      %c0_116 = arith.constant 0 : index
      %346 = vector.load %arg10[%c0_115, %c0_116] : memref<256x128xbf16, #tpu.memory_space<vmem>>, vector<256x128xbf16>
      %cst_117 = arith.constant dense<0.000000e+00> : vector<8x128xf32>
      %347 = tpu.matmul %345, %346, %cst_117 {dimension_numbers = #tpu.dot_dimension_numbers<[1], [0], [0], [1], [0, 0, 1, 1], [], []>} : vector<8x256xbf16>, vector<256x128xbf16>, vector<8x128xf32> -> vector<8x128xf32>
      %c0_118 = arith.constant 0 : index
      %c0_119 = arith.constant 0 : index
      %348 = vector.load %arg11[%c0_118, %c0_119] : memref<1x128xf32, #tpu.memory_space<vmem>>, vector<1x128xf32>
      %349 = vector.broadcast %348 : vector<1x128xf32> to vector<8x128xf32>
      %350 = arith.addf %347, %349 : vector<8x128xf32>
      %cst_120 = arith.constant 0.000000e+00 : f32
      %351 = vector.broadcast %cst_120 : f32 to vector<8x128xf32>
      %352 = arith.cmpf ogt, %350, %351 : vector<8x128xf32>
      %cst_121 = arith.constant 0.00999999977 : f32
      %353 = vector.broadcast %cst_121 : f32 to vector<8x128xf32>
      %354 = arith.mulf %353, %350 : vector<8x128xf32>
      %355 = arith.select %352, %350, %354 : vector<8x128xi1>, vector<8x128xf32>
      %356 = arith.truncf %355 : vector<8x128xf32> to vector<8x128xbf16>
      %c0_122 = arith.constant 0 : index
      %c0_123 = arith.constant 0 : index
      %357 = vector.load %arg12[%c0_122, %c0_123] : memref<128x128xbf16, #tpu.memory_space<vmem>>, vector<128x128xbf16>
      %cst_124 = arith.constant dense<0.000000e+00> : vector<8x128xf32>
      %358 = tpu.matmul %356, %357, %cst_124 {dimension_numbers = #tpu.dot_dimension_numbers<[1], [0], [0], [1], [0, 0, 1, 1], [], []>} : vector<8x128xbf16>, vector<128x128xbf16>, vector<8x128xf32> -> vector<8x128xf32>
      %c0_125 = arith.constant 0 : index
      %c0_126 = arith.constant 0 : index
      %359 = vector.load %arg13[%c0_125, %c0_126] : memref<1x128xf32, #tpu.memory_space<vmem>>, vector<1x128xf32>
      %360 = vector.broadcast %359 : vector<1x128xf32> to vector<8x128xf32>
      %361 = arith.addf %358, %360 : vector<8x128xf32>
      %cst_127 = arith.constant 0.000000e+00 : f32
      %362 = vector.broadcast %cst_127 : f32 to vector<8x128xf32>
      %363 = arith.cmpf ogt, %361, %362 : vector<8x128xf32>
      %cst_128 = arith.constant 0.000000e+00 : f32
      %364 = vector.broadcast %cst_128 : f32 to vector<8x128xf32>
      %365 = arith.minimumf %361, %364 : vector<8x128xf32>
      %366 = math.exp %365 : vector<8x128xf32>
      %cst_129 = arith.constant 1.000000e+00 : f32
      %367 = vector.broadcast %cst_129 : f32 to vector<8x128xf32>
      %368 = arith.subf %366, %367 : vector<8x128xf32>
      %369 = arith.select %363, %361, %368 : vector<8x128xi1>, vector<8x128xf32>
      %c0_130 = arith.constant 0 : index
      %c0_131 = arith.constant 0 : index
      %370 = vector.load %arg14[%c0_130, %c0_131] : memref<8x128xf32, #tpu.memory_space<vmem>>, vector<8x128xf32>
      tpu.vector_store %arg14[%c0_130, %c0_131], %369 {strides = array<i32>} : memref<8x128xf32, #tpu.memory_space<vmem>>, vector<8x128xf32>,
    } else {
    }
    return
  }
  func.func @transform_0(%arg0: i32) -> (i32, i32, i32) {
    %c0_i32 = arith.constant 0 : i32
    %c0_i32_0 = arith.constant 0 : i32
    %c0_i32_1 = arith.constant 0 : i32
    return %arg0, %c0_i32, %c0_i32_0 : i32, i32, i32
  }
  func.func @transform_1(%arg0: i32) -> (i32, i32, i32) {
    %c1_i32 = arith.constant 1 : i32
    %0 = arith.subi %c1_i32, %arg0 : i32
    %c0_i32 = arith.constant 0 : i32
    %c0_i32_0 = arith.constant 0 : i32
    %c0_i32_1 = arith.constant 0 : i32
    return %0, %c0_i32, %c0_i32_0 : i32, i32, i32
  }
  func.func @transform_2(%arg0: i32) -> (i32, i32) {
    %c0_i32 = arith.constant 0 : i32
    %c0_i32_0 = arith.constant 0 : i32
    %c0_i32_1 = arith.constant 0 : i32
    return %c0_i32, %c0_i32_0 : i32, i32
  }
  func.func @transform_3(%arg0: i32) -> (i32, i32) {
    %c0_i32 = arith.constant 0 : i32
    %c0_i32_0 = arith.constant 0 : i32
    %c0_i32_1 = arith.constant 0 : i32
    return %c0_i32, %c0_i32_0 : i32, i32
  }
  func.func @transform_4(%arg0: i32) -> (i32, i32) {
    %c0_i32 = arith.constant 0 : i32
    %c0_i32_0 = arith.constant 0 : i32
    %c0_i32_1 = arith.constant 0 : i32
    return %c0_i32, %c0_i32_0 : i32, i32
  }
  func.func @transform_5(%arg0: i32) -> (i32, i32) {
    %c0_i32 = arith.constant 0 : i32
    %c0_i32_0 = arith.constant 0 : i32
    %c0_i32_1 = arith.constant 0 : i32
    return %c0_i32, %c0_i32_0 : i32, i32
  }
  func.func @transform_6(%arg0: i32) -> (i32, i32) {
    %c0_i32 = arith.constant 0 : i32
    %c0_i32_0 = arith.constant 0 : i32
    %c0_i32_1 = arith.constant 0 : i32
    return %c0_i32, %c0_i32_0 : i32, i32
  }
  func.func @transform_7(%arg0: i32) -> (i32, i32) {
    %c0_i32 = arith.constant 0 : i32
    %c0_i32_0 = arith.constant 0 : i32
    %c0_i32_1 = arith.constant 0 : i32
    return %c0_i32, %c0_i32_0 : i32, i32
  }
  func.func @transform_8(%arg0: i32) -> (i32, i32) {
    %c0_i32 = arith.constant 0 : i32
    %c0_i32_0 = arith.constant 0 : i32
    %c0_i32_1 = arith.constant 0 : i32
    return %c0_i32, %c0_i32_0 : i32, i32
  }
  func.func @transform_9(%arg0: i32) -> (i32, i32) {
    %c0_i32 = arith.constant 0 : i32
    %c0_i32_0 = arith.constant 0 : i32
    %c0_i32_1 = arith.constant 0 : i32
    return %c0_i32, %c0_i32_0 : i32, i32
  }
  func.func @transform_10(%arg0: i32) -> (i32, i32) {
    %c0_i32 = arith.constant 0 : i32
    %c0_i32_0 = arith.constant 0 : i32
    %c0_i32_1 = arith.constant 0 : i32
    return %c0_i32, %c0_i32_0 : i32, i32
  }
  func.func @transform_11(%arg0: i32) -> (i32, i32) {
    %c0_i32 = arith.constant 0 : i32
    %c0_i32_0 = arith.constant 0 : i32
    %c0_i32_1 = arith.constant 0 : i32
    return %c0_i32, %c0_i32_0 : i32, i32
  }
  func.func @transform_12(%arg0: i32) -> (i32, i32) {
    %c0_i32 = arith.constant 0 : i32
    %c0_i32_0 = arith.constant 0 : i32
    %c0_i32_1 = arith.constant 0 : i32
    return %c0_i32, %c0_i32_0 : i32, i32
  }
  func.func @transform_13(%arg0: i32) -> (i32, i32) {
    %c0_i32 = arith.constant 0 : i32
    %c0_i32_0 = arith.constant 0 : i32
    %c0_i32_1 = arith.constant 0 : i32
    return %c0_i32, %c0_i32_0 : i32, i32
  }
}

</mosaic_0001>

<llo_original>
// kernel: simple_rnn_forward.1
$region0: #{simple_rnn_forward.1}
  #allocation0 [shape = 'u32[]', space=smem, size = 0x4, offset = 0x4, fixed_abs, tag = 'smem constant byte address 0x4 - core index']
  #allocation1 [shape = 'u32[144,128]{1,0:T(1,128)}', space=vmem, size = 0x12000, scoped, tag = 'internal scratch']
  #allocation2 [shape = 'bf16[4,8,512]{2,1,0:T(8,128)(2,1)}', space=vmem, size = 0x8000, scoped, tag = 'scratch operand']
  #allocation3 [shape = 'bf16[4,8,512]{2,1,0:T(8,128)(2,1)}', space=vmem, size = 0x8000, scoped, tag = 'scratch operand']
  #allocation4 [shape = 'f32[8,256]{1,0:T(8,128)}', space=vmem, size = 0x2000, scoped, tag = 'scratch operand']
  #allocation5 [shape = 'f32[8,256]{1,0:T(8,128)}', space=vmem, size = 0x2000, scoped, tag = 'scratch operand']
  %s0 = inlined_call_operand.vmem [shape: bf16[8,8,16], index: 0, kind: input, shape index: {}, may-alias: {0,1}]
  %s1 = inlined_call_operand.vmem [shape: bf16[8,8,16], index: 1, kind: input, shape index: {}, may-alias: {0,1}]
  %s2 = inlined_call_operand.vmem [shape: s32[8,128], index: 2, kind: input, shape index: {}]
  %s3 = inlined_call_operand.vmem [shape: bf16[16,512], index: 3, kind: input, shape index: {}]
  %s4 = inlined_call_operand.vmem [shape: bf16[16,512], index: 4, kind: input, shape index: {}]
  %s5 = inlined_call_operand.vmem [shape: f32[1,512], index: 5, kind: input, shape index: {}]
  %s6 = inlined_call_operand.vmem [shape: f32[1,512], index: 6, kind: input, shape index: {}]
  %s7 = inlined_call_operand.vmem [shape: bf16[128,512], index: 7, kind: input, shape index: {}]
  %s8 = inlined_call_operand.vmem [shape: bf16[128,512], index: 8, kind: input, shape index: {}]
  %s9 = inlined_call_operand.vmem [shape: bf16[256,128], index: 9, kind: input, shape index: {}]
  %s10 = inlined_call_operand.vmem [shape: f32[1,128], index: 10, kind: input, shape index: {}]
  %s11 = inlined_call_operand.vmem [shape: bf16[128,128], index: 11, kind: input, shape index: {}]
  %s12 = inlined_call_operand.vmem [shape: f32[1,128], index: 12, kind: input, shape index: {}]
  %s13 = inlined_call_operand.vmem [shape: f32[8,128], index: 13, kind: output, shape index: {}]
  %s14 = sld [smem:[#allocation0]]
  $region93: #{simple_rnn_forward.1} parent=0
    _
  %s16 = ssub.s32 1, %s14
  %s17 = scalar_select 0, %s16, %s14
  loop: start=0, step=1, limit=4
  $region2: #{simple_rnn_forward.1} parent=0 // loop_pre_header
    _
  $region3: #{simple_rnn_forward.1} parent=0 // loop_header
    %s19 = sphi 0, %s23
    %p20 = scmp.ge.s32.totalorder %s19, 4
    %s29 = sphi 0, %s31
    %s32 = sphi 0, %s29
    %s33 = sphi 0, %s32
    %s49 = sphi 0, %s33
    %s57 = sphi 0, %s59
    %s60 = sphi 0, %s57
    %s61 = sphi 0, %s60
    %s77 = sphi 0, %s61
    %s81 = sphi 0, %s81
    %s83 = sphi 0, %s81
    %s84 = sphi 0, %s83
    %s98 = sphi 0, %s84
    %s102 = sphi 0, %s102
    %s104 = sphi 0, %s102
    %s105 = sphi 0, %s104
    %s119 = sphi 0, %s105
    %s123 = sphi 0, %s123
    %s125 = sphi 0, %s123
    %s126 = sphi 0, %s125
    %s140 = sphi 0, %s126
    %s144 = sphi 0, %s144
    %s146 = sphi 0, %s144
    %s147 = sphi 0, %s146
    %s161 = sphi 0, %s147
    %s165 = sphi 0, %s165
    %s167 = sphi 0, %s165
    %s168 = sphi 0, %s167
    %s182 = sphi 0, %s168
    %s186 = sphi 0, %s186
    %s188 = sphi 0, %s186
    %s189 = sphi 0, %s188
    %s203 = sphi 0, %s189
    %s207 = sphi 0, %s207
    %s209 = sphi 0, %s207
    %s210 = sphi 0, %s209
    %s224 = sphi 0, %s210
    %s228 = sphi 0, %s228
    %s230 = sphi 0, %s228
    %s231 = sphi 0, %s230
    %s245 = sphi 0, %s231
    %s249 = sphi 0, %s249
    %s251 = sphi 0, %s249
    %s252 = sphi 0, %s251
    %s266 = sphi 0, %s252
    %s270 = sphi 0, %s270
    %s272 = sphi 0, %s270
    %s273 = sphi 0, %s272
    %s287 = sphi 0, %s273
    %s291 = sphi 0, %s291
    %s293 = sphi 0, %s291
    %s294 = sphi 0, %s293
    %s308 = sphi 0, %s294
    %s312 = sphi 0, %s312
    %s314 = sphi 0, %s312
    %s315 = sphi 0, %s314
    %s329 = sphi 0, %s315
  $region4: #{simple_rnn_forward.1} parent=0 // loop_header_branch
    %22 = sbr.rel (%p20) target = $region8
  $region5: #{simple_rnn_forward.1} parent=0 // loop_body
    %s24 = ssub.s32 %s19, 1
    %s25 = ssub.s32 %s19, 2
    %s26 = sadd.s32 %s19, 1
    %s27 = ssub.s32 %s19, %s26
    %p28 = scmp.eq.s32.totalorder %s27, 0
    %s30 = sadd.s32 %s29, 1
    %s31 = scalar_select %p28, %s29, %s30
    %p34 = pneg %p28
    %p35 = scmp.eq.s32.totalorder %s19, 1
    %p36 = por %p34, %p35
    %p37 = scmp.ne.s32.totalorder %s29, %s32
    %p38 = scmp.eq.s32.totalorder %s19, 0
    %p39 = por %p37, %p38
    %p40 = scmp.ne.s32.totalorder %s29, %s32
    %p41 = scmp.eq.s32.totalorder %s24, 1
    %p42 = por %p40, %p41
    %p43 = scmp.ne.s32.totalorder %s32, %s33
    %p44 = scmp.eq.s32.totalorder %s24, 0
    %p45 = por %p43, %p44
    %p46 = scmp.ne.s32.totalorder %s32, %s33
    %p47 = scmp.eq.s32.totalorder %s25, 1
    %p48 = por %p46, %p47
    %p50 = scmp.ne.s32.totalorder %s33, %s49
    %p51 = scmp.eq.s32.totalorder %s25, 0
    %p52 = por %p50, %p51
    %s53 = ssub.s32 1, %s19
    %s54 = ssub.s32 1, %s26
    %s55 = ssub.s32 %s53, %s54
    %p56 = scmp.eq.s32.totalorder %s55, 0
    %s58 = sadd.s32 %s57, 1
    %s59 = scalar_select %p56, %s57, %s58
    %p62 = pneg %p56
    %p63 = scmp.eq.s32.totalorder %s19, 1
    %p64 = por %p62, %p63
    %p65 = scmp.ne.s32.totalorder %s57, %s60
    %p66 = scmp.eq.s32.totalorder %s19, 0
    %p67 = por %p65, %p66
    %p68 = scmp.ne.s32.totalorder %s57, %s60
    %p69 = scmp.eq.s32.totalorder %s24, 1
    %p70 = por %p68, %p69
    %p71 = scmp.ne.s32.totalorder %s60, %s61
    %p72 = scmp.eq.s32.totalorder %s24, 0
    %p73 = por %p71, %p72
    %p74 = scmp.ne.s32.totalorder %s60, %s61
    %p75 = scmp.eq.s32.totalorder %s25, 1
    %p76 = por %p74, %p75
    %p78 = scmp.ne.s32.totalorder %s61, %s77
    %p79 = scmp.eq.s32.totalorder %s25, 0
    %p80 = por %p78, %p79
    %s82 = sadd.s32 %s81, 1
    %p85 = scmp.eq.s32.totalorder %s19, 1
    %p86 = scmp.ne.s32.totalorder %s81, %s83
    %p87 = scmp.eq.s32.totalorder %s19, 0
    %p88 = por %p86, %p87
    %p89 = scmp.ne.s32.totalorder %s81, %s83
    %p90 = scmp.eq.s32.totalorder %s24, 1
    %p91 = por %p89, %p90
    %p92 = scmp.ne.s32.totalorder %s83, %s84
    %p93 = scmp.eq.s32.totalorder %s24, 0
    %p94 = por %p92, %p93
    %p95 = scmp.ne.s32.totalorder %s83, %s84
    %p96 = scmp.eq.s32.totalorder %s25, 1
    %p97 = por %p95, %p96
    %p99 = scmp.ne.s32.totalorder %s84, %s98
    %p100 = scmp.eq.s32.totalorder %s25, 0
    %p101 = por %p99, %p100
    %s103 = sadd.s32 %s102, 1
    %p106 = scmp.eq.s32.totalorder %s19, 1
    %p107 = scmp.ne.s32.totalorder %s102, %s104
    %p108 = scmp.eq.s32.totalorder %s19, 0
    %p109 = por %p107, %p108
    %p110 = scmp.ne.s32.totalorder %s102, %s104
    %p111 = scmp.eq.s32.totalorder %s24, 1
    %p112 = por %p110, %p111
    %p113 = scmp.ne.s32.totalorder %s104, %s105
    %p114 = scmp.eq.s32.totalorder %s24, 0
    %p115 = por %p113, %p114
    %p116 = scmp.ne.s32.totalorder %s104, %s105
    %p117 = scmp.eq.s32.totalorder %s25, 1
    %p118 = por %p116, %p117
    %p120 = scmp.ne.s32.totalorder %s105, %s119
    %p121 = scmp.eq.s32.totalorder %s25, 0
    %p122 = por %p120, %p121
    %s124 = sadd.s32 %s123, 1
    %p127 = scmp.eq.s32.totalorder %s19, 1
    %p128 = scmp.ne.s32.totalorder %s123, %s125
    %p129 = scmp.eq.s32.totalorder %s19, 0
    %p130 = por %p128, %p129
    %p131 = scmp.ne.s32.totalorder %s123, %s125
    %p132 = scmp.eq.s32.totalorder %s24, 1
    %p133 = por %p131, %p132
    %p134 = scmp.ne.s32.totalorder %s125, %s126
    %p135 = scmp.eq.s32.totalorder %s24, 0
    %p136 = por %p134, %p135
    %p137 = scmp.ne.s32.totalorder %s125, %s126
    %p138 = scmp.eq.s32.totalorder %s25, 1
    %p139 = por %p137, %p138
    %p141 = scmp.ne.s32.totalorder %s126, %s140
    %p142 = scmp.eq.s32.totalorder %s25, 0
    %p143 = por %p141, %p142
    %s145 = sadd.s32 %s144, 1
    %p148 = scmp.eq.s32.totalorder %s19, 1
    %p149 = scmp.ne.s32.totalorder %s144, %s146
    %p150 = scmp.eq.s32.totalorder %s19, 0
    %p151 = por %p149, %p150
    %p152 = scmp.ne.s32.totalorder %s144, %s146
    %p153 = scmp.eq.s32.totalorder %s24, 1
    %p154 = por %p152, %p153
    %p155 = scmp.ne.s32.totalorder %s146, %s147
    %p156 = scmp.eq.s32.totalorder %s24, 0
    %p157 = por %p155, %p156
    %p158 = scmp.ne.s32.totalorder %s146, %s147
    %p159 = scmp.eq.s32.totalorder %s25, 1
    %p160 = por %p158, %p159
    %p162 = scmp.ne.s32.totalorder %s147, %s161
    %p163 = scmp.eq.s32.totalorder %s25, 0
    %p164 = por %p162, %p163
    %s166 = sadd.s32 %s165, 1
    %p169 = scmp.eq.s32.totalorder %s19, 1
    %p170 = scmp.ne.s32.totalorder %s165, %s167
    %p171 = scmp.eq.s32.totalorder %s19, 0
    %p172 = por %p170, %p171
    %p173 = scmp.ne.s32.totalorder %s165, %s167
    %p174 = scmp.eq.s32.totalorder %s24, 1
    %p175 = por %p173, %p174
    %p176 = scmp.ne.s32.totalorder %s167, %s168
    %p177 = scmp.eq.s32.totalorder %s24, 0
    %p178 = por %p176, %p177
    %p179 = scmp.ne.s32.totalorder %s167, %s168
    %p180 = scmp.eq.s32.totalorder %s25, 1
    %p181 = por %p179, %p180
    %p183 = scmp.ne.s32.totalorder %s168, %s182
    %p184 = scmp.eq.s32.totalorder %s25, 0
    %p185 = por %p183, %p184
    %s187 = sadd.s32 %s186, 1
    %p190 = scmp.eq.s32.totalorder %s19, 1
    %p191 = scmp.ne.s32.totalorder %s186, %s188
    %p192 = scmp.eq.s32.totalorder %s19, 0
    %p193 = por %p191, %p192
    %p194 = scmp.ne.s32.totalorder %s186, %s188
    %p195 = scmp.eq.s32.totalorder %s24, 1
    %p196 = por %p194, %p195
    %p197 = scmp.ne.s32.totalorder %s188, %s189
    %p198 = scmp.eq.s32.totalorder %s24, 0
    %p199 = por %p197, %p198
    %p200 = scmp.ne.s32.totalorder %s188, %s189
    %p201 = scmp.eq.s32.totalorder %s25, 1
    %p202 = por %p200, %p201
    %p204 = scmp.ne.s32.totalorder %s189, %s203
    %p205 = scmp.eq.s32.totalorder %s25, 0
    %p206 = por %p204, %p205
    %s208 = sadd.s32 %s207, 1
    %p211 = scmp.eq.s32.totalorder %s19, 1
    %p212 = scmp.ne.s32.totalorder %s207, %s209
    %p213 = scmp.eq.s32.totalorder %s19, 0
    %p214 = por %p212, %p213
    %p215 = scmp.ne.s32.totalorder %s207, %s209
    %p216 = scmp.eq.s32.totalorder %s24, 1
    %p217 = por %p215, %p216
    %p218 = scmp.ne.s32.totalorder %s209, %s210
    %p219 = scmp.eq.s32.totalorder %s24, 0
    %p220 = por %p218, %p219
    %p221 = scmp.ne.s32.totalorder %s209, %s210
    %p222 = scmp.eq.s32.totalorder %s25, 1
    %p223 = por %p221, %p222
    %p225 = scmp.ne.s32.totalorder %s210, %s224
    %p226 = scmp.eq.s32.totalorder %s25, 0
    %p227 = por %p225, %p226
    %s229 = sadd.s32 %s228, 1
    %p232 = scmp.eq.s32.totalorder %s19, 1
    %p233 = scmp.ne.s32.totalorder %s228, %s230
    %p234 = scmp.eq.s32.totalorder %s19, 0
    %p235 = por %p233, %p234
    %p236 = scmp.ne.s32.totalorder %s228, %s230
    %p237 = scmp.eq.s32.totalorder %s24, 1
    %p238 = por %p236, %p237
    %p239 = scmp.ne.s32.totalorder %s230, %s231
    %p240 = scmp.eq.s32.totalorder %s24, 0
    %p241 = por %p239, %p240
    %p242 = scmp.ne.s32.totalorder %s230, %s231
    %p243 = scmp.eq.s32.totalorder %s25, 1
    %p244 = por %p242, %p243
    %p246 = scmp.ne.s32.totalorder %s231, %s245
    %p247 = scmp.eq.s32.totalorder %s25, 0
    %p248 = por %p246, %p247
    %s250 = sadd.s32 %s249, 1
    %p253 = scmp.eq.s32.totalorder %s19, 1
    %p254 = scmp.ne.s32.totalorder %s249, %s251
    %p255 = scmp.eq.s32.totalorder %s19, 0
    %p256 = por %p254, %p255
    %p257 = scmp.ne.s32.totalorder %s249, %s251
    %p258 = scmp.eq.s32.totalorder %s24, 1
    %p259 = por %p257, %p258
    %p260 = scmp.ne.s32.totalorder %s251, %s252
    %p261 = scmp.eq.s32.totalorder %s24, 0
    %p262 = por %p260, %p261
    %p263 = scmp.ne.s32.totalorder %s251, %s252
    %p264 = scmp.eq.s32.totalorder %s25, 1
    %p265 = por %p263, %p264
    %p267 = scmp.ne.s32.totalorder %s252, %s266
    %p268 = scmp.eq.s32.totalorder %s25, 0
    %p269 = por %p267, %p268
    %s271 = sadd.s32 %s270, 1
    %p274 = scmp.eq.s32.totalorder %s19, 1
    %p275 = scmp.ne.s32.totalorder %s270, %s272
    %p276 = scmp.eq.s32.totalorder %s19, 0
    %p277 = por %p275, %p276
    %p278 = scmp.ne.s32.totalorder %s270, %s272
    %p279 = scmp.eq.s32.totalorder %s24, 1
    %p280 = por %p278, %p279
    %p281 = scmp.ne.s32.totalorder %s272, %s273
    %p282 = scmp.eq.s32.totalorder %s24, 0
    %p283 = por %p281, %p282
    %p284 = scmp.ne.s32.totalorder %s272, %s273
    %p285 = scmp.eq.s32.totalorder %s25, 1
    %p286 = por %p284, %p285
    %p288 = scmp.ne.s32.totalorder %s273, %s287
    %p289 = scmp.eq.s32.totalorder %s25, 0
    %p290 = por %p288, %p289
    %s292 = sadd.s32 %s291, 1
    %p295 = scmp.eq.s32.totalorder %s19, 1
    %p296 = scmp.ne.s32.totalorder %s291, %s293
    %p297 = scmp.eq.s32.totalorder %s19, 0
    %p298 = por %p296, %p297
    %p299 = scmp.ne.s32.totalorder %s291, %s293
    %p300 = scmp.eq.s32.totalorder %s24, 1
    %p301 = por %p299, %p300
    %p302 = scmp.ne.s32.totalorder %s293, %s294
    %p303 = scmp.eq.s32.totalorder %s24, 0
    %p304 = por %p302, %p303
    %p305 = scmp.ne.s32.totalorder %s293, %s294
    %p306 = scmp.eq.s32.totalorder %s25, 1
    %p307 = por %p305, %p306
    %p309 = scmp.ne.s32.totalorder %s294, %s308
    %p310 = scmp.eq.s32.totalorder %s25, 0
    %p311 = por %p309, %p310
    %s313 = sadd.s32 %s312, 1
    %p316 = scmp.eq.s32.totalorder %s19, 1
    %p317 = scmp.ne.s32.totalorder %s312, %s314
    %p318 = scmp.eq.s32.totalorder %s19, 0
    %p319 = por %p317, %p318
    %p320 = scmp.ne.s32.totalorder %s312, %s314
    %p321 = scmp.eq.s32.totalorder %s24, 1
    %p322 = por %p320, %p321
    %p323 = scmp.ne.s32.totalorder %s314, %s315
    %p324 = scmp.eq.s32.totalorder %s24, 0
    %p325 = por %p323, %p324
    %p326 = scmp.ne.s32.totalorder %s314, %s315
    %p327 = scmp.eq.s32.totalorder %s25, 1
    %p328 = por %p326, %p327
    %p330 = scmp.ne.s32.totalorder %s315, %s329
    %p331 = scmp.eq.s32.totalorder %s25, 0
    %p332 = por %p330, %p331
    %p333 = scmp.le.s32.totalorder 1, %s19
    %p334 = scmp.lt.s32.totalorder %s19, 3
    %p335 = pnand %p333, %p334
    %p336 = pneg %p335
    // Predicated region
    $region9: #{simple_rnn_forward.1} parent=5 // pred_check
      _
    $region10: #{simple_rnn_forward.1} parent=5 // pred_check_branch
      %338 = sbr.rel (%p335) target = $region12
    $region11: #{simple_rnn_forward.1} parent=5 // pred_region
      %s339 = ssub.s32 %s19, 1
      // Predicated region
      $region13: #{simple_rnn_forward.1} parent=11 // pred_check
        %p340 = pneg %p94
      $region14: #{simple_rnn_forward.1} parent=11 // pred_check_branch
        %342 = sbr.rel (%p340) target = $region16
      $region15: #{simple_rnn_forward.1} parent=11 // pred_region
        _
      $region16: #{simple_rnn_forward.1} parent=11 // pred_fallthru
        _
      // Predicated region
      $region17: #{simple_rnn_forward.1} parent=11 // pred_check
        %p343 = pneg %p115
      $region18: #{simple_rnn_forward.1} parent=11 // pred_check_branch
        %345 = sbr.rel (%p343) target = $region20
      $region19: #{simple_rnn_forward.1} parent=11 // pred_region
        _
      $region20: #{simple_rnn_forward.1} parent=11 // pred_fallthru
        _
      // Predicated region
      $region21: #{simple_rnn_forward.1} parent=11 // pred_check
        %p346 = pneg %p136
      $region22: #{simple_rnn_forward.1} parent=11 // pred_check_branch
        %348 = sbr.rel (%p346) target = $region24
      $region23: #{simple_rnn_forward.1} parent=11 // pred_region
        _
      $region24: #{simple_rnn_forward.1} parent=11 // pred_fallthru
        _
      // Predicated region
      $region25: #{simple_rnn_forward.1} parent=11 // pred_check
        %p349 = pneg %p157
      $region26: #{simple_rnn_forward.1} parent=11 // pred_check_branch
        %351 = sbr.rel (%p349) target = $region28
      $region27: #{simple_rnn_forward.1} parent=11 // pred_region
        _
      $region28: #{simple_rnn_forward.1} parent=11 // pred_fallthru
        _
      // Predicated region
      $region29: #{simple_rnn_forward.1} parent=11 // pred_check
        %p352 = pneg %p178
      $region30: #{simple_rnn_forward.1} parent=11 // pred_check_branch
        %354 = sbr.rel (%p352) target = $region32
      $region31: #{simple_rnn_forward.1} parent=11 // pred_region
        _
      $region32: #{simple_rnn_forward.1} parent=11 // pred_fallthru
        _
      // Predicated region
      $region33: #{simple_rnn_forward.1} parent=11 // pred_check
        %p355 = pneg %p199
      $region34: #{simple_rnn_forward.1} parent=11 // pred_check_branch
        %357 = sbr.rel (%p355) target = $region36
      $region35: #{simple_rnn_forward.1} parent=11 // pred_region
        _
      $region36: #{simple_rnn_forward.1} parent=11 // pred_fallthru
        _
      // Predicated region
      $region37: #{simple_rnn_forward.1} parent=11 // pred_check
        %p358 = pneg %p220
      $region38: #{simple_rnn_forward.1} parent=11 // pred_check_branch
        %360 = sbr.rel (%p358) target = $region40
      $region39: #{simple_rnn_forward.1} parent=11 // pred_region
        _
      $region40: #{simple_rnn_forward.1} parent=11 // pred_fallthru
        _
      // Predicated region
      $region41: #{simple_rnn_forward.1} parent=11 // pred_check
        %p361 = pneg %p241
      $region42: #{simple_rnn_forward.1} parent=11 // pred_check_branch
        %363 = sbr.rel (%p361) target = $region44
      $region43: #{simple_rnn_forward.1} parent=11 // pred_region
        _
      $region44: #{simple_rnn_forward.1} parent=11 // pred_fallthru
        _
      // Predicated region
      $region45: #{simple_rnn_forward.1} parent=11 // pred_check
        %p364 = pneg %p262
      $region46: #{simple_rnn_forward.1} parent=11 // pred_check_branch
        %366 = sbr.rel (%p364) target = $region48
      $region47: #{simple_rnn_forward.1} parent=11 // pred_region
        _
      $region48: #{simple_rnn_forward.1} parent=11 // pred_fallthru
        _
      // Predicated region
      $region49: #{simple_rnn_forward.1} parent=11 // pred_check
        %p367 = pneg %p283
      $region50: #{simple_rnn_forward.1} parent=11 // pred_check_branch
        %369 = sbr.rel (%p367) target = $region52
      $region51: #{simple_rnn_forward.1} parent=11 // pred_region
        _
      $region52: #{simple_rnn_forward.1} parent=11 // pred_fallthru
        _
      // Predicated region
      $region53: #{simple_rnn_forward.1} parent=11 // pred_check
        %p370 = pneg %p304
      $region54: #{simple_rnn_forward.1} parent=11 // pred_check_branch
        %372 = sbr.rel (%p370) target = $region56
      $region55: #{simple_rnn_forward.1} parent=11 // pred_region
        _
      $region56: #{simple_rnn_forward.1} parent=11 // pred_fallthru
        _
    $region12: #{simple_rnn_forward.1} parent=5 // pred_fallthru
      _
    %p373 = scmp.lt.s32.totalorder %s19, 2
    // Predicated region
    $region57: #{simple_rnn_forward.1} parent=5 // pred_check
      %p374 = pneg %p373
    $region58: #{simple_rnn_forward.1} parent=5 // pred_check_branch
      %376 = sbr.rel (%p374) target = $region60
    $region59: #{simple_rnn_forward.1} parent=5 // pred_region
      // Predicated region
      $region61: #{simple_rnn_forward.1} parent=59 // pred_check
        %p377 = pneg %p39
      $region62: #{simple_rnn_forward.1} parent=59 // pred_check_branch
        %379 = sbr.rel (%p377) target = $region64
      $region63: #{simple_rnn_forward.1} parent=59 // pred_region
        %s380 = smul.u32 4, %s19
        %p381 = scmp.lt.s32.totalorder %s380, 7
        %s382 = scalar_select %p381, %s380, 7
        %s383 = smul.addr %s382, 4
        %s384 = scalar_lea.vmem %s0, %s383
        %s385 = smul.u32 4, %s19
      $region64: #{simple_rnn_forward.1} parent=59 // pred_fallthru
        _
      // Predicated region
      $region65: #{simple_rnn_forward.1} parent=59 // pred_check
        %p386 = pneg %p67
      $region66: #{simple_rnn_forward.1} parent=59 // pred_check_branch
        %388 = sbr.rel (%p386) target = $region68
      $region67: #{simple_rnn_forward.1} parent=59 // pred_region
        %s389 = ssub.s32 1, %s19
        %s390 = smul.u32 4, %s389
        %p391 = scmp.lt.s32.totalorder %s390, 7
        %s392 = scalar_select %p391, %s390, 7
        %s393 = smul.addr %s392, 4
        %s394 = scalar_lea.vmem %s1, %s393
        %s395 = ssub.s32 1, %s19
        %s396 = smul.u32 4, %s395
      $region68: #{simple_rnn_forward.1} parent=59 // pred_fallthru
        _
    $region60: #{simple_rnn_forward.1} parent=5 // pred_fallthru
      _
    %p397 = scmp.le.s32.totalorder 1, %s19
    %p398 = scmp.lt.s32.totalorder %s19, 3
    %p399 = pnand %p397, %p398
    %p400 = pneg %p399
    // Predicated region
    $region69: #{simple_rnn_forward.1} parent=5 // pred_check
      _
    $region70: #{simple_rnn_forward.1} parent=5 // pred_check_branch
      %402 = sbr.rel (%p399) target = $region72
    $region71: #{simple_rnn_forward.1} parent=5 // pred_region
      %s403 = ssub.s32 %s19, 1
      %s404 = smul.u32 4, %s24
      %p405 = scmp.lt.s32.totalorder %s404, 7
      %s406 = scalar_select %p405, %s404, 7
      %s407 = smul.addr %s406, 4
      %s408 = scalar_lea.vmem %s0, %s407
      %p409 = pneg %p45
      %p410 = pneg %p42
      %s411 = ssub.s32 1, %s24
      %s412 = smul.u32 4, %s411
      %p413 = scmp.lt.s32.totalorder %s412, 7
      %s414 = scalar_select %p413, %s412, 7
      %s415 = smul.addr %s414, 4
      %s416 = scalar_lea.vmem %s1, %s415
      %p417 = pneg %p73
      %p418 = pneg %p70
      %p419 = pneg %p94
      %p420 = pneg %p91
      %p421 = pneg %p115
      %p422 = pneg %p112
      %p423 = pneg %p136
      %p424 = pneg %p133
      %p425 = pneg %p157
      %p426 = pneg %p154
      %p427 = pneg %p178
      %p428 = pneg %p175
      %p429 = pneg %p199
      %p430 = pneg %p196
      %p431 = pneg %p220
      %p432 = pneg %p217
      %p433 = pneg %p241
      %p434 = pneg %p238
      %p435 = pneg %p262
      %p436 = pneg %p259
      %p437 = pneg %p283
      %p438 = pneg %p280
      %p439 = pneg %p304
      %p440 = pneg %p301
      %p441 = pneg %p325
      %p442 = pneg %p322
      %s443 = smul.u32 4, %s24
      %p444 = scmp.lt.s32.totalorder %s443, 7
      %s445 = scalar_select %p444, %s443, 7
      %s446 = smul.addr %s445, 4
      %s447 = scalar_lea.vmem %s0, %s446
      %s448 = smul.u32 4, %s24
      %s449 = ssub.s32 1, %s24
      %s450 = smul.u32 4, %s449
      %p451 = scmp.lt.s32.totalorder %s450, 7
      %s452 = scalar_select %p451, %s450, 7
      %s453 = smul.addr %s452, 4
      %s454 = scalar_lea.vmem %s1, %s453
      %s455 = ssub.s32 1, %s24
      %s456 = smul.u32 4, %s455
      %p458 = scmp.eq.s32.totalorder %s24, 0
      // Predicated region
      $region73: #{simple_rnn_forward.1} parent=71 // pred_check
        %p459 = pneg %p458
      $region74: #{simple_rnn_forward.1} parent=71 // pred_check_branch
        %461 = sbr.rel (%p459) target = $region76
      $region75: #{simple_rnn_forward.1} parent=71 // pred_region
        %462 = vst [vmem:[#allocation4] sm:$0xff] 0.0
        %463 = vst [vmem:[#allocation4 + $0x8] sm:$0xff] 0.0
        %464 = vst [vmem:[#allocation5] sm:$0xff] 0.0
        %465 = vst [vmem:[#allocation5 + $0x8] sm:$0xff] 0.0
      $region76: #{simple_rnn_forward.1} parent=71 // pred_fallthru
        _
      %v466 = vld [vmem:[%s447] sm:$0xf]
      %v467 = vld [vmem:[%s447 + $0x4] sm:$0xf]
      %v468 = vld [vmem:[%s447 + $0x8] sm:$0xf]
      %v469 = vld [vmem:[%s447 + $0xc] sm:$0xf]
      %v470 = vld [vmem:[%s454] sm:$0xf]
      %v471 = vld [vmem:[%s454 + $0x4] sm:$0xf]
      %v472 = vld [vmem:[%s454 + $0x8] sm:$0xf]
      %v473 = vld [vmem:[%s454 + $0xc] sm:$0xf]
      %v474 = vld [vmem:[%s3] sm:$0xff]
      %v475 = vld [vmem:[%s3 + $0x8] sm:$0xff]
      %v476 = vld [vmem:[%s3 + $0x10] sm:$0xff]
      %v477 = vld [vmem:[%s3 + $0x18] sm:$0xff]
      %v478 = vld [vmem:[%s5] sm:$0xf]
      %v480 = vlaneseq
      %v481 = vshrl.u32 %v480, 7
      %v482 = vsub.s32 0, %v481
      %v483 = vrot.slane %v478, %v482
      %v484 = vlaneseq
      %v485 = vshrl.u32 %v484, 7
      %v486 = vsub.s32 1, %v485
      %v487 = vrot.slane %v478, %v486
      %v488 = vlaneseq
      %v489 = vshrl.u32 %v488, 7
      %v490 = vsub.s32 2, %v489
      %v491 = vrot.slane %v478, %v490
      %v492 = vlaneseq
      %v493 = vshrl.u32 %v492, 7
      %v494 = vsub.s32 3, %v493
      %v495 = vrot.slane %v478, %v494
      %v504 = vunpack.c.l.b16 %v466
      %v505 = vunpack.c.l.b16 %v467
      %v506 = vunpack.c.l.b16 %v468
      %v507 = vunpack.c.l.b16 %v469
      %v508 = vpack.c.b16 %v505, %v504
      %v509 = vpack.c.b16 %v507, %v506
      %v514 = vunpack.c.l.b16 %v474
      %v515 = vunpack.c.h.b16 %v474
      %v516 = vunpack.c.l.b16 %v475
      %v517 = vunpack.c.h.b16 %v475
      %v518 = vunpack.c.l.b16 %v476
      %v519 = vunpack.c.h.b16 %v476
      %v520 = vunpack.c.l.b16 %v477
      %v521 = vunpack.c.h.b16 %v477
      %v522 = vpack.c.b16 %v518, %v514
      %v523 = vpack.c.b16 %v519, %v515
      %v524 = vpack.c.b16 %v520, %v516
      %v525 = vpack.c.b16 %v521, %v517
      %vm530 = vcmask 130048
      %v532 = vsel %vm530, %v508, 0
      %v535 = vsel %vm530, %v509, 0
      %537 = vmatprep.subr.bf16.mxu0 %v523
      %538 = vmatpush1.bf16.msra.mxu0 %v522
      %539 = vmatprep.subr.bf16.mxu0 0
      %540 = vmatpush1.bf16.msra.mxu0 0
      %541 = vmatprep.subr.bf16.mxu0 0
      %542 = vmatpush1.bf16.msra.mxu0 0
      %543 = vmatprep.subr.bf16.mxu0 0
      %544 = vmatpush1.bf16.msra.mxu0 0
      %545 = vmatprep.subr.bf16.mxu0 0
      %546 = vmatpush1.bf16.msra.mxu0 0
      %547 = vmatprep.subr.bf16.mxu0 0
      %548 = vmatpush1.bf16.msra.mxu0 0
      %549 = vmatprep.subr.bf16.mxu0 0
      %550 = vmatpush1.bf16.msra.mxu0 0
      %551 = vmatprep.subr.bf16.mxu0 0
      %552 = vmatpush1.bf16.msra.mxu0 0
      %553 = vmatprep.subr.bf16.mxu0 0
      %554 = vmatpush1.bf16.msra.mxu0 0
      %555 = vmatprep.subr.bf16.mxu0 0
      %556 = vmatpush1.bf16.msra.mxu0 0
      %557 = vmatprep.subr.bf16.mxu0 0
      %558 = vmatpush1.bf16.msra.mxu0 0
      %559 = vmatprep.subr.bf16.mxu0 0
      %560 = vmatpush1.bf16.msra.mxu0 0
      %561 = vmatprep.subr.bf16.mxu0 0
      %562 = vmatpush1.bf16.msra.mxu0 0
      %563 = vmatprep.subr.bf16.mxu0 0
      %564 = vmatpush1.bf16.msra.mxu0 0
      %565 = vmatprep.subr.bf16.mxu0 0
      %566 = vmatpush1.bf16.msra.mxu0 0
      %567 = vmatprep.subr.bf16.mxu0 0
      %568 = vmatpush1.bf16.msra.mxu0 0
      %569 = vmatprep.mubr.bf16.mxu0 0
      %570 = vmatmul.mubr.bf16.gmra.mrb[0].mxu0 %v532
      %v571 = vpop.f32.mrb[0].mxu0
      %v572 = vadd.f32 %v483, %v571
      %v573 = vpop.f32.mrb[0].mxu0
      %v574 = vadd.f32 %v487, %v573
      %v575 = vpop.f32.mrb[0].mxu0
      %v576 = vadd.f32 %v483, %v575
      %v577 = vpop.f32.mrb[0].mxu0
      %v578 = vadd.f32 %v487, %v577
      %579 = vmatprep.mubr.bf16.mxu0 0
      %580 = vmatmul.mubr.bf16.gmra.mrb[0].mxu0 %v535
      %v581 = vpop.f32.mrb[0].mxu0
      %v582 = vadd.f32 %v483, %v581
      %v583 = vpop.f32.mrb[0].mxu0
      %v584 = vadd.f32 %v487, %v583
      %v585 = vpop.f32.mrb[0].mxu0
      %v586 = vadd.f32 %v483, %v585
      %v587 = vpop.f32.mrb[0].mxu0
      %v588 = vadd.f32 %v487, %v587
      %589 = vdwg.mxu0
      %590 = vmatprep.subr.bf16.mxu0 %v525
      %591 = vmatpush1.bf16.msra.mxu0 %v524
      %592 = vmatprep.subr.bf16.mxu0 0
      %593 = vmatpush1.bf16.msra.mxu0 0
      %594 = vmatprep.subr.bf16.mxu0 0
      %595 = vmatpush1.bf16.msra.mxu0 0
      %596 = vmatprep.subr.bf16.mxu0 0
      %597 = vmatpush1.bf16.msra.mxu0 0
      %598 = vmatprep.subr.bf16.mxu0 0
      %599 = vmatpush1.bf16.msra.mxu0 0
      %600 = vmatprep.subr.bf16.mxu0 0
      %601 = vmatpush1.bf16.msra.mxu0 0
      %602 = vmatprep.subr.bf16.mxu0 0
      %603 = vmatpush1.bf16.msra.mxu0 0
      %604 = vmatprep.subr.bf16.mxu0 0
      %605 = vmatpush1.bf16.msra.mxu0 0
      %606 = vmatprep.subr.bf16.mxu0 0
      %607 = vmatpush1.bf16.msra.mxu0 0
      %608 = vmatprep.subr.bf16.mxu0 0
      %609 = vmatpush1.bf16.msra.mxu0 0
      %610 = vmatprep.subr.bf16.mxu0 0
      %611 = vmatpush1.bf16.msra.mxu0 0
      %612 = vmatprep.subr.bf16.mxu0 0
      %613 = vmatpush1.bf16.msra.mxu0 0
      %614 = vmatprep.subr.bf16.mxu0 0
      %615 = vmatpush1.bf16.msra.mxu0 0
      %616 = vmatprep.subr.bf16.mxu0 0
      %617 = vmatpush1.bf16.msra.mxu0 0
      %618 = vmatprep.subr.bf16.mxu0 0
      %619 = vmatpush1.bf16.msra.mxu0 0
      %620 = vmatprep.subr.bf16.mxu0 0
      %621 = vmatpush1.bf16.msra.mxu0 0
      %622 = vmatprep.mubr.bf16.mxu0 0
      %623 = vmatmul.mubr.bf16.gmra.mrb[0].mxu0 %v532
      %v624 = vpop.f32.mrb[0].mxu0
      %v625 = vadd.f32 %v491, %v624
      %v626 = vpop.f32.mrb[0].mxu0
      %v627 = vadd.f32 %v495, %v626
      %v628 = vpop.f32.mrb[0].mxu0
      %v629 = vadd.f32 %v491, %v628
      %v630 = vpop.f32.mrb[0].mxu0
      %v631 = vadd.f32 %v495, %v630
      %632 = vmatprep.mubr.bf16.mxu0 0
      %633 = vmatmul.mubr.bf16.gmra.mrb[0].mxu0 %v535
      %v634 = vpop.f32.mrb[0].mxu0
      %v635 = vadd.f32 %v491, %v634
      %v636 = vpop.f32.mrb[0].mxu0
      %v637 = vadd.f32 %v495, %v636
      %v638 = vpop.f32.mrb[0].mxu0
      %v639 = vadd.f32 %v491, %v638
      %v640 = vpop.f32.mrb[0].mxu0
      %v641 = vadd.f32 %v495, %v640
      %642 = vdwg.mxu0
      %v643 = vpack.c.bf16 %v572, %v572
      %v644 = vpack.c.bf16 %v574, %v574
      %v645 = vpack.c.bf16 %v625, %v625
      %v646 = vpack.c.bf16 %v627, %v627
      %v647 = vpack.c.bf16 %v576, %v576
      %v648 = vpack.c.bf16 %v578, %v578
      %v649 = vpack.c.bf16 %v629, %v629
      %v650 = vpack.c.bf16 %v631, %v631
      %v651 = vpack.c.bf16 %v582, %v582
      %v652 = vpack.c.bf16 %v584, %v584
      %v653 = vpack.c.bf16 %v635, %v635
      %v654 = vpack.c.bf16 %v637, %v637
      %v655 = vpack.c.bf16 %v586, %v586
      %v656 = vpack.c.bf16 %v588, %v588
      %v657 = vpack.c.bf16 %v639, %v639
      %v658 = vpack.c.bf16 %v641, %v641
      %v675 = vunpack.c.l.b16 %v643
      %v676 = vunpack.c.l.b16 %v644
      %v677 = vunpack.c.l.b16 %v645
      %v678 = vunpack.c.l.b16 %v646
      %v679 = vunpack.c.l.b16 %v647
      %v680 = vunpack.c.l.b16 %v648
      %v681 = vunpack.c.l.b16 %v649
      %v682 = vunpack.c.l.b16 %v650
      %v683 = vunpack.c.l.b16 %v651
      %v684 = vunpack.c.l.b16 %v652
      %v685 = vunpack.c.l.b16 %v653
      %v686 = vunpack.c.l.b16 %v654
      %v687 = vunpack.c.l.b16 %v655
      %v688 = vunpack.c.l.b16 %v656
      %v689 = vunpack.c.l.b16 %v657
      %v690 = vunpack.c.l.b16 %v658
      %v691 = vpack.c.b16 %v676, %v675
      %v692 = vpack.c.b16 %v678, %v677
      %v693 = vpack.c.b16 %v680, %v679
      %v694 = vpack.c.b16 %v682, %v681
      %v695 = vpack.c.b16 %v684, %v683
      %v696 = vpack.c.b16 %v686, %v685
      %v697 = vpack.c.b16 %v688, %v687
      %v698 = vpack.c.b16 %v690, %v689
      %707 = vst [vmem:[#allocation2] sm:$0xff] %v691
      %708 = vst [vmem:[#allocation2 + $0x8] sm:$0xff] %v692
      %709 = vst [vmem:[#allocation2 + $0x10] sm:$0xff] %v693
      %710 = vst [vmem:[#allocation2 + $0x18] sm:$0xff] %v694
      %711 = vst [vmem:[#allocation2 + $0x20] sm:$0xff] %v695
      %712 = vst [vmem:[#allocation2 + $0x28] sm:$0xff] %v696
      %713 = vst [vmem:[#allocation2 + $0x30] sm:$0xff] %v697
      %714 = vst [vmem:[#allocation2 + $0x38] sm:$0xff] %v698
      %v715 = vld [vmem:[%s4] sm:$0xff]
      %v716 = vld [vmem:[%s4 + $0x8] sm:$0xff]
      %v717 = vld [vmem:[%s4 + $0x10] sm:$0xff]
      %v718 = vld [vmem:[%s4 + $0x18] sm:$0xff]
      %v719 = vld [vmem:[%s6] sm:$0xf]
      %v721 = vlaneseq
      %v722 = vshrl.u32 %v721, 7
      %v723 = vsub.s32 0, %v722
      %v724 = vrot.slane %v719, %v723
      %v725 = vlaneseq
      %v726 = vshrl.u32 %v725, 7
      %v727 = vsub.s32 1, %v726
      %v728 = vrot.slane %v719, %v727
      %v729 = vlaneseq
      %v730 = vshrl.u32 %v729, 7
      %v731 = vsub.s32 2, %v730
      %v732 = vrot.slane %v719, %v731
      %v733 = vlaneseq
      %v734 = vshrl.u32 %v733, 7
      %v735 = vsub.s32 3, %v734
      %v736 = vrot.slane %v719, %v735
      %v745 = vunpack.c.l.b16 %v470
      %v746 = vunpack.c.l.b16 %v471
      %v747 = vunpack.c.l.b16 %v472
      %v748 = vunpack.c.l.b16 %v473
      %v749 = vpack.c.b16 %v746, %v745
      %v750 = vpack.c.b16 %v748, %v747
      %v755 = vunpack.c.l.b16 %v715
      %v756 = vunpack.c.h.b16 %v715
      %v757 = vunpack.c.l.b16 %v716
      %v758 = vunpack.c.h.b16 %v716
      %v759 = vunpack.c.l.b16 %v717
      %v760 = vunpack.c.h.b16 %v717
      %v761 = vunpack.c.l.b16 %v718
      %v762 = vunpack.c.h.b16 %v718
      %v763 = vpack.c.b16 %v759, %v755
      %v764 = vpack.c.b16 %v760, %v756
      %v765 = vpack.c.b16 %v761, %v757
      %v766 = vpack.c.b16 %v762, %v758
      %v772 = vsel %vm530, %v749, 0
      %v775 = vsel %vm530, %v750, 0
      %777 = vmatprep.subr.bf16.mxu0 %v764
      %778 = vmatpush1.bf16.msra.mxu0 %v763
      %779 = vmatprep.subr.bf16.mxu0 0
      %780 = vmatpush1.bf16.msra.mxu0 0
      %781 = vmatprep.subr.bf16.mxu0 0
      %782 = vmatpush1.bf16.msra.mxu0 0
      %783 = vmatprep.subr.bf16.mxu0 0
      %784 = vmatpush1.bf16.msra.mxu0 0
      %785 = vmatprep.subr.bf16.mxu0 0
      %786 = vmatpush1.bf16.msra.mxu0 0
      %787 = vmatprep.subr.bf16.mxu0 0
      %788 = vmatpush1.bf16.msra.mxu0 0
      %789 = vmatprep.subr.bf16.mxu0 0
      %790 = vmatpush1.bf16.msra.mxu0 0
      %791 = vmatprep.subr.bf16.mxu0 0
      %792 = vmatpush1.bf16.msra.mxu0 0
      %793 = vmatprep.subr.bf16.mxu0 0
      %794 = vmatpush1.bf16.msra.mxu0 0
      %795 = vmatprep.subr.bf16.mxu0 0
      %796 = vmatpush1.bf16.msra.mxu0 0
      %797 = vmatprep.subr.bf16.mxu0 0
      %798 = vmatpush1.bf16.msra.mxu0 0
      %799 = vmatprep.subr.bf16.mxu0 0
      %800 = vmatpush1.bf16.msra.mxu0 0
      %801 = vmatprep.subr.bf16.mxu0 0
      %802 = vmatpush1.bf16.msra.mxu0 0
      %803 = vmatprep.subr.bf16.mxu0 0
      %804 = vmatpush1.bf16.msra.mxu0 0
      %805 = vmatprep.subr.bf16.mxu0 0
      %806 = vmatpush1.bf16.msra.mxu0 0
      %807 = vmatprep.subr.bf16.mxu0 0
      %808 = vmatpush1.bf16.msra.mxu0 0
      %809 = vmatprep.mubr.bf16.mxu0 0
      %810 = vmatmul.mubr.bf16.gmra.mrb[0].mxu0 %v772
      %v811 = vpop.f32.mrb[0].mxu0
      %v812 = vadd.f32 %v724, %v811
      %v813 = vpop.f32.mrb[0].mxu0
      %v814 = vadd.f32 %v728, %v813
      %v815 = vpop.f32.mrb[0].mxu0
      %v816 = vadd.f32 %v724, %v815
      %v817 = vpop.f32.mrb[0].mxu0
      %v818 = vadd.f32 %v728, %v817
      %819 = vmatprep.mubr.bf16.mxu0 0
      %820 = vmatmul.mubr.bf16.gmra.mrb[0].mxu0 %v775
      %v821 = vpop.f32.mrb[0].mxu0
      %v822 = vadd.f32 %v724, %v821
      %v823 = vpop.f32.mrb[0].mxu0
      %v824 = vadd.f32 %v728, %v823
      %v825 = vpop.f32.mrb[0].mxu0
      %v826 = vadd.f32 %v724, %v825
      %v827 = vpop.f32.mrb[0].mxu0
      %v828 = vadd.f32 %v728, %v827
      %829 = vdwg.mxu0
      %830 = vmatprep.subr.bf16.mxu0 %v766
      %831 = vmatpush1.bf16.msra.mxu0 %v765
      %832 = vmatprep.subr.bf16.mxu0 0
      %833 = vmatpush1.bf16.msra.mxu0 0
      %834 = vmatprep.subr.bf16.mxu0 0
      %835 = vmatpush1.bf16.msra.mxu0 0
      %836 = vmatprep.subr.bf16.mxu0 0
      %837 = vmatpush1.bf16.msra.mxu0 0
      %838 = vmatprep.subr.bf16.mxu0 0
      %839 = vmatpush1.bf16.msra.mxu0 0
      %840 = vmatprep.subr.bf16.mxu0 0
      %841 = vmatpush1.bf16.msra.mxu0 0
      %842 = vmatprep.subr.bf16.mxu0 0
      %843 = vmatpush1.bf16.msra.mxu0 0
      %844 = vmatprep.subr.bf16.mxu0 0
      %845 = vmatpush1.bf16.msra.mxu0 0
      %846 = vmatprep.subr.bf16.mxu0 0
      %847 = vmatpush1.bf16.msra.mxu0 0
      %848 = vmatprep.subr.bf16.mxu0 0
      %849 = vmatpush1.bf16.msra.mxu0 0
      %850 = vmatprep.subr.bf16.mxu0 0
      %851 = vmatpush1.bf16.msra.mxu0 0
      %852 = vmatprep.subr.bf16.mxu0 0
      %853 = vmatpush1.bf16.msra.mxu0 0
      %854 = vmatprep.subr.bf16.mxu0 0
      %855 = vmatpush1.bf16.msra.mxu0 0
      %856 = vmatprep.subr.bf16.mxu0 0
      %857 = vmatpush1.bf16.msra.mxu0 0
      %858 = vmatprep.subr.bf16.mxu0 0
      %859 = vmatpush1.bf16.msra.mxu0 0
      %860 = vmatprep.subr.bf16.mxu0 0
      %861 = vmatpush1.bf16.msra.mxu0 0
      %862 = vmatprep.mubr.bf16.mxu0 0
      %863 = vmatmul.mubr.bf16.gmra.mrb[0].mxu0 %v772
      %v864 = vpop.f32.mrb[0].mxu0
      %v865 = vadd.f32 %v732, %v864
      %v866 = vpop.f32.mrb[0].mxu0
      %v867 = vadd.f32 %v736, %v866
      %v868 = vpop.f32.mrb[0].mxu0
      %v869 = vadd.f32 %v732, %v868
      %v870 = vpop.f32.mrb[0].mxu0
      %v871 = vadd.f32 %v736, %v870
      %872 = vmatprep.mubr.bf16.mxu0 0
      %873 = vmatmul.mubr.bf16.gmra.mrb[0].mxu0 %v775
      %v874 = vpop.f32.mrb[0].mxu0
      %v875 = vadd.f32 %v732, %v874
      %v876 = vpop.f32.mrb[0].mxu0
      %v877 = vadd.f32 %v736, %v876
      %v878 = vpop.f32.mrb[0].mxu0
      %v879 = vadd.f32 %v732, %v878
      %v880 = vpop.f32.mrb[0].mxu0
      %v881 = vadd.f32 %v736, %v880
      %882 = vdwg.mxu0
      %v883 = vpack.c.bf16 %v812, %v812
      %v884 = vpack.c.bf16 %v814, %v814
      %v885 = vpack.c.bf16 %v865, %v865
      %v886 = vpack.c.bf16 %v867, %v867
      %v887 = vpack.c.bf16 %v816, %v816
      %v888 = vpack.c.bf16 %v818, %v818
      %v889 = vpack.c.bf16 %v869, %v869
      %v890 = vpack.c.bf16 %v871, %v871
      %v891 = vpack.c.bf16 %v822, %v822
      %v892 = vpack.c.bf16 %v824, %v824
      %v893 = vpack.c.bf16 %v875, %v875
      %v894 = vpack.c.bf16 %v877, %v877
      %v895 = vpack.c.bf16 %v826, %v826
      %v896 = vpack.c.bf16 %v828, %v828
      %v897 = vpack.c.bf16 %v879, %v879
      %v898 = vpack.c.bf16 %v881, %v881
      %v915 = vunpack.c.l.b16 %v883
      %v916 = vunpack.c.l.b16 %v884
      %v917 = vunpack.c.l.b16 %v885
      %v918 = vunpack.c.l.b16 %v886
      %v919 = vunpack.c.l.b16 %v887
      %v920 = vunpack.c.l.b16 %v888
      %v921 = vunpack.c.l.b16 %v889
      %v922 = vunpack.c.l.b16 %v890
      %v923 = vunpack.c.l.b16 %v891
      %v924 = vunpack.c.l.b16 %v892
      %v925 = vunpack.c.l.b16 %v893
      %v926 = vunpack.c.l.b16 %v894
      %v927 = vunpack.c.l.b16 %v895
      %v928 = vunpack.c.l.b16 %v896
      %v929 = vunpack.c.l.b16 %v897
      %v930 = vunpack.c.l.b16 %v898
      %v931 = vpack.c.b16 %v916, %v915
      %v932 = vpack.c.b16 %v918, %v917
      %v933 = vpack.c.b16 %v920, %v919
      %v934 = vpack.c.b16 %v922, %v921
      %v935 = vpack.c.b16 %v924, %v923
      %v936 = vpack.c.b16 %v926, %v925
      %v937 = vpack.c.b16 %v928, %v927
      %v938 = vpack.c.b16 %v930, %v929
      %947 = vst [vmem:[#allocation3] sm:$0xff] %v931
      %948 = vst [vmem:[#allocation3 + $0x8] sm:$0xff] %v932
      %949 = vst [vmem:[#allocation3 + $0x10] sm:$0xff] %v933
      %950 = vst [vmem:[#allocation3 + $0x18] sm:$0xff] %v934
      %951 = vst [vmem:[#allocation3 + $0x20] sm:$0xff] %v935
      %952 = vst [vmem:[#allocation3 + $0x28] sm:$0xff] %v936
      %953 = vst [vmem:[#allocation3 + $0x30] sm:$0xff] %v937
      %954 = vst [vmem:[#allocation3 + $0x38] sm:$0xff] %v938
      %v955 = vld [vmem:[%s2] sm:$0xff]
      %s956 = smul.u32 %s24, 4
      %v957 = vld [vmem:[#allocation4] sm:$0xff]
      %v958 = vld [vmem:[#allocation5] sm:$0xff]
      %v959 = vld [vmem:[#allocation4 + $0x8] sm:$0xff]
      %v960 = vld [vmem:[#allocation5 + $0x8] sm:$0xff]
      %v961 = vld [vmem:[#allocation2] sm:$0xff]
      %v962 = vld [vmem:[#allocation2 + $0x8] sm:$0xff]
      %v963 = vunpack.c.l.bf16 %v961
      %v964 = vunpack.c.h.bf16 %v961
      %v965 = vunpack.c.l.bf16 %v962
      %v966 = vunpack.c.h.bf16 %v962
      %s967 = scalar_lea.vmem [#allocation3], 48
      %v968 = vld [vmem:[%s967] sm:$0xff]
      %v969 = vld [vmem:[%s967 + $0x8] sm:$0xff]
      %v970 = vunpack.c.l.bf16 %v968
      %v971 = vunpack.c.h.bf16 %v968
      %v972 = vunpack.c.l.bf16 %v969
      %v973 = vunpack.c.h.bf16 %v969
      %v974 = vpack.c.bf16 %v957, %v957
      %v975 = vld [vmem:[%s7] sm:$0xff]
      %v976 = vld [vmem:[%s7 + $0x8] sm:$0xff]
      %v977 = vld [vmem:[%s7 + $0x10] sm:$0xff]
      %v978 = vld [vmem:[%s7 + $0x18] sm:$0xff]
      %v979 = vld [vmem:[%s7 + $0x20] sm:$0xff]
      %v980 = vld [vmem:[%s7 + $0x28] sm:$0xff]
      %v981 = vld [vmem:[%s7 + $0x30] sm:$0xff]
      %v982 = vld [vmem:[%s7 + $0x38] sm:$0xff]
      %v983 = vld [vmem:[%s7 + $0x40] sm:$0xff]
      %v984 = vld [vmem:[%s7 + $0x48] sm:$0xff]
      %v985 = vld [vmem:[%s7 + $0x50] sm:$0xff]
      %v986 = vld [vmem:[%s7 + $0x58] sm:$0xff]
      %v987 = vld [vmem:[%s7 + $0x60] sm:$0xff]
      %v988 = vld [vmem:[%s7 + $0x68] sm:$0xff]
      %v989 = vld [vmem:[%s7 + $0x70] sm:$0xff]
      %v990 = vld [vmem:[%s7 + $0x78] sm:$0xff]
      %v991 = vld [vmem:[%s7 + $0x80] sm:$0xff]
      %v992 = vld [vmem:[%s7 + $0x88] sm:$0xff]
      %v993 = vld [vmem:[%s7 + $0x90] sm:$0xff]
      %v994 = vld [vmem:[%s7 + $0x98] sm:$0xff]
      %v995 = vld [vmem:[%s7 + $0xa0] sm:$0xff]
      %v996 = vld [vmem:[%s7 + $0xa8] sm:$0xff]
      %v997 = vld [vmem:[%s7 + $0xb0] sm:$0xff]
      %v998 = vld [vmem:[%s7 + $0xb8] sm:$0xff]
      %v999 = vld [vmem:[%s7 + $0xc0] sm:$0xff]
      %v1000 = vld [vmem:[%s7 + $0xc8] sm:$0xff]
      %v1001 = vld [vmem:[%s7 + $0xd0] sm:$0xff]
      %v1002 = vld [vmem:[%s7 + $0xd8] sm:$0xff]
      %v1003 = vld [vmem:[%s7 + $0xe0] sm:$0xff]
      %v1004 = vld [vmem:[%s7 + $0xe8] sm:$0xff]
      %v1005 = vld [vmem:[%s7 + $0xf0] sm:$0xff]
      %v1006 = vld [vmem:[%s7 + $0xf8] sm:$0xff]
      %v1039 = vunpack.c.l.b16 %v975
      %v1040 = vunpack.c.h.b16 %v975
      %v1041 = vunpack.c.l.b16 %v976
      %v1042 = vunpack.c.h.b16 %v976
      %v1043 = vunpack.c.l.b16 %v977
      %v1044 = vunpack.c.h.b16 %v977
      %v1045 = vunpack.c.l.b16 %v978
      %v1046 = vunpack.c.h.b16 %v978
      %v1047 = vunpack.c.l.b16 %v979
      %v1048 = vunpack.c.h.b16 %v979
      %v1049 = vunpack.c.l.b16 %v980
      %v1050 = vunpack.c.h.b16 %v980
      %v1051 = vunpack.c.l.b16 %v981
      %v1052 = vunpack.c.h.b16 %v981
      %v1053 = vunpack.c.l.b16 %v982
      %v1054 = vunpack.c.h.b16 %v982
      %v1055 = vunpack.c.l.b16 %v983
      %v1056 = vunpack.c.h.b16 %v983
      %v1057 = vunpack.c.l.b16 %v984
      %v1058 = vunpack.c.h.b16 %v984
      %v1059 = vunpack.c.l.b16 %v985
      %v1060 = vunpack.c.h.b16 %v985
      %v1061 = vunpack.c.l.b16 %v986
      %v1062 = vunpack.c.h.b16 %v986
      %v1063 = vunpack.c.l.b16 %v987
      %v1064 = vunpack.c.h.b16 %v987
      %v1065 = vunpack.c.l.b16 %v988
      %v1066 = vunpack.c.h.b16 %v988
      %v1067 = vunpack.c.l.b16 %v989
      %v1068 = vunpack.c.h.b16 %v989
      %v1069 = vunpack.c.l.b16 %v990
      %v1070 = vunpack.c.h.b16 %v990
      %v1071 = vunpack.c.l.b16 %v991
      %v1072 = vunpack.c.h.b16 %v991
      %v1073 = vunpack.c.l.b16 %v992
      %v1074 = vunpack.c.h.b16 %v992
      %v1075 = vunpack.c.l.b16 %v993
      %v1076 = vunpack.c.h.b16 %v993
      %v1077 = vunpack.c.l.b16 %v994
      %v1078 = vunpack.c.h.b16 %v994
      %v1079 = vunpack.c.l.b16 %v995
      %v1080 = vunpack.c.h.b16 %v995
      %v1081 = vunpack.c.l.b16 %v996
      %v1082 = vunpack.c.h.b16 %v996
      %v1083 = vunpack.c.l.b16 %v997
      %v1084 = vunpack.c.h.b16 %v997
      %v1085 = vunpack.c.l.b16 %v998
      %v1086 = vunpack.c.h.b16 %v998
      %v1087 = vunpack.c.l.b16 %v999
      %v1088 = vunpack.c.h.b16 %v999
      %v1089 = vunpack.c.l.b16 %v1000
      %v1090 = vunpack.c.h.b16 %v1000
      %v1091 = vunpack.c.l.b16 %v1001
      %v1092 = vunpack.c.h.b16 %v1001
      %v1093 = vunpack.c.l.b16 %v1002
      %v1094 = vunpack.c.h.b16 %v1002
      %v1095 = vunpack.c.l.b16 %v1003
      %v1096 = vunpack.c.h.b16 %v1003
      %v1097 = vunpack.c.l.b16 %v1004
      %v1098 = vunpack.c.h.b16 %v1004
      %v1099 = vunpack.c.l.b16 %v1005
      %v1100 = vunpack.c.h.b16 %v1005
      %v1101 = vunpack.c.l.b16 %v1006
      %v1102 = vunpack.c.h.b16 %v1006
      %v1103 = vpack.c.b16 %v1043, %v1039
      %v1104 = vpack.c.b16 %v1044, %v1040
      %v1105 = vpack.c.b16 %v1045, %v1041
      %v1106 = vpack.c.b16 %v1046, %v1042
      %v1107 = vpack.c.b16 %v1051, %v1047
      %v1108 = vpack.c.b16 %v1052, %v1048
      %v1109 = vpack.c.b16 %v1053, %v1049
      %v1110 = vpack.c.b16 %v1054, %v1050
      %v1111 = vpack.c.b16 %v1059, %v1055
      %v1112 = vpack.c.b16 %v1060, %v1056
      %v1113 = vpack.c.b16 %v1061, %v1057
      %v1114 = vpack.c.b16 %v1062, %v1058
      %v1115 = vpack.c.b16 %v1067, %v1063
      %v1116 = vpack.c.b16 %v1068, %v1064
      %v1117 = vpack.c.b16 %v1069, %v1065
      %v1118 = vpack.c.b16 %v1070, %v1066
      %v1119 = vpack.c.b16 %v1075, %v1071
      %v1120 = vpack.c.b16 %v1076, %v1072
      %v1121 = vpack.c.b16 %v1077, %v1073
      %v1122 = vpack.c.b16 %v1078, %v1074
      %v1123 = vpack.c.b16 %v1083, %v1079
      %v1124 = vpack.c.b16 %v1084, %v1080
      %v1125 = vpack.c.b16 %v1085, %v1081
      %v1126 = vpack.c.b16 %v1086, %v1082
      %v1127 = vpack.c.b16 %v1091, %v1087
      %v1128 = vpack.c.b16 %v1092, %v1088
      %v1129 = vpack.c.b16 %v1093, %v1089
      %v1130 = vpack.c.b16 %v1094, %v1090
      %v1131 = vpack.c.b16 %v1099, %v1095
      %v1132 = vpack.c.b16 %v1100, %v1096
      %v1133 = vpack.c.b16 %v1101, %v1097
      %v1134 = vpack.c.b16 %v1102, %v1098
      %1167 = vmatprep.subr.bf16.mxu0 %v1104
      %1168 = vmatpush1.bf16.msra.mxu0 %v1103
      %1169 = vmatprep.subr.bf16.mxu0 %v1108
      %1170 = vmatpush1.bf16.msra.mxu0 %v1107
      %1171 = vmatprep.subr.bf16.mxu0 %v1112
      %1172 = vmatpush1.bf16.msra.mxu0 %v1111
      %1173 = vmatprep.subr.bf16.mxu0 %v1116
      %1174 = vmatpush1.bf16.msra.mxu0 %v1115
      %1175 = vmatprep.subr.bf16.mxu0 %v1120
      %1176 = vmatpush1.bf16.msra.mxu0 %v1119
      %1177 = vmatprep.subr.bf16.mxu0 %v1124
      %1178 = vmatpush1.bf16.msra.mxu0 %v1123
      %1179 = vmatprep.subr.bf16.mxu0 %v1128
      %1180 = vmatpush1.bf16.msra.mxu0 %v1127
      %1181 = vmatprep.subr.bf16.mxu0 %v1132
      %1182 = vmatpush1.bf16.msra.mxu0 %v1131
      %1183 = vmatprep.subr.bf16.mxu0 0
      %1184 = vmatpush1.bf16.msra.mxu0 0
      %1185 = vmatprep.subr.bf16.mxu0 0
      %1186 = vmatpush1.bf16.msra.mxu0 0
      %1187 = vmatprep.subr.bf16.mxu0 0
      %1188 = vmatpush1.bf16.msra.mxu0 0
      %1189 = vmatprep.subr.bf16.mxu0 0
      %1190 = vmatpush1.bf16.msra.mxu0 0
      %1191 = vmatprep.subr.bf16.mxu0 0
      %1192 = vmatpush1.bf16.msra.mxu0 0
      %1193 = vmatprep.subr.bf16.mxu0 0
      %1194 = vmatpush1.bf16.msra.mxu0 0
      %1195 = vmatprep.subr.bf16.mxu0 0
      %1196 = vmatpush1.bf16.msra.mxu0 0
      %1197 = vmatprep.subr.bf16.mxu0 0
      %1198 = vmatpush1.bf16.msra.mxu0 0
      %1199 = vmatprep.mubr.bf16.mxu0 0
      %1200 = vmatmul.mubr.bf16.gmra.mrb[0].mxu0 %v974
      %v1201 = vpop.f32.mrb[0].mxu0
      %v1202 = vadd.f32 %v963, %v1201
      %v1203 = vpop.f32.mrb[0].mxu0
      %v1204 = vadd.f32 %v964, %v1203
      %v1205 = vpop.f32.mrb[0].mxu0
      %v1206 = vpop.f32.mrb[0].mxu0
      %1207 = vdwg.mxu0
      %1208 = vmatprep.subr.bf16.mxu0 %v1106
      %1209 = vmatpush1.bf16.msra.mxu0 %v1105
      %1210 = vmatprep.subr.bf16.mxu0 %v1110
      %1211 = vmatpush1.bf16.msra.mxu0 %v1109
      %1212 = vmatprep.subr.bf16.mxu0 %v1114
      %1213 = vmatpush1.bf16.msra.mxu0 %v1113
      %1214 = vmatprep.subr.bf16.mxu0 %v1118
      %1215 = vmatpush1.bf16.msra.mxu0 %v1117
      %1216 = vmatprep.subr.bf16.mxu0 %v1122
      %1217 = vmatpush1.bf16.msra.mxu0 %v1121
      %1218 = vmatprep.subr.bf16.mxu0 %v1126
      %1219 = vmatpush1.bf16.msra.mxu0 %v1125
      %1220 = vmatprep.subr.bf16.mxu0 %v1130
      %1221 = vmatpush1.bf16.msra.mxu0 %v1129
      %1222 = vmatprep.subr.bf16.mxu0 %v1134
      %1223 = vmatpush1.bf16.msra.mxu0 %v1133
      %1224 = vmatprep.subr.bf16.mxu0 0
      %1225 = vmatpush1.bf16.msra.mxu0 0
      %1226 = vmatprep.subr.bf16.mxu0 0
      %1227 = vmatpush1.bf16.msra.mxu0 0
      %1228 = vmatprep.subr.bf16.mxu0 0
      %1229 = vmatpush1.bf16.msra.mxu0 0
      %1230 = vmatprep.subr.bf16.mxu0 0
      %1231 = vmatpush1.bf16.msra.mxu0 0
      %1232 = vmatprep.subr.bf16.mxu0 0
      %1233 = vmatpush1.bf16.msra.mxu0 0
      %1234 = vmatprep.subr.bf16.mxu0 0
      %1235 = vmatpush1.bf16.msra.mxu0 0
      %1236 = vmatprep.subr.bf16.mxu0 0
      %1237 = vmatpush1.bf16.msra.mxu0 0
      %1238 = vmatprep.subr.bf16.mxu0 0
      %1239 = vmatpush1.bf16.msra.mxu0 0
      %1240 = vmatprep.mubr.bf16.mxu0 0
      %1241 = vmatmul.mubr.bf16.gmra.mrb[0].mxu0 %v974
      %v1242 = vpop.f32.mrb[0].mxu0
      %v1243 = vadd.f32 %v965, %v1242
      %v1244 = vpop.f32.mrb[0].mxu0
      %v1245 = vadd.f32 %v966, %v1244
      %v1246 = vpop.f32.mrb[0].mxu0
      %v1247 = vpop.f32.mrb[0].mxu0
      %1248 = vdwg.mxu0
      %v1249 = vpack.c.bf16 %v959, %v959
      %v1250 = vld [vmem:[%s8] sm:$0xff]
      %v1251 = vld [vmem:[%s8 + $0x8] sm:$0xff]
      %v1252 = vld [vmem:[%s8 + $0x10] sm:$0xff]
      %v1253 = vld [vmem:[%s8 + $0x18] sm:$0xff]
      %v1254 = vld [vmem:[%s8 + $0x20] sm:$0xff]
      %v1255 = vld [vmem:[%s8 + $0x28] sm:$0xff]
      %v1256 = vld [vmem:[%s8 + $0x30] sm:$0xff]
      %v1257 = vld [vmem:[%s8 + $0x38] sm:$0xff]
      %v1258 = vld [vmem:[%s8 + $0x40] sm:$0xff]
      %v1259 = vld [vmem:[%s8 + $0x48] sm:$0xff]
      %v1260 = vld [vmem:[%s8 + $0x50] sm:$0xff]
      %v1261 = vld [vmem:[%s8 + $0x58] sm:$0xff]
      %v1262 = vld [vmem:[%s8 + $0x60] sm:$0xff]
      %v1263 = vld [vmem:[%s8 + $0x68] sm:$0xff]
      %v1264 = vld [vmem:[%s8 + $0x70] sm:$0xff]
      %v1265 = vld [vmem:[%s8 + $0x78] sm:$0xff]
      %v1266 = vld [vmem:[%s8 + $0x80] sm:$0xff]
      %v1267 = vld [vmem:[%s8 + $0x88] sm:$0xff]
      %v1268 = vld [vmem:[%s8 + $0x90] sm:$0xff]
      %v1269 = vld [vmem:[%s8 + $0x98] sm:$0xff]
      %v1270 = vld [vmem:[%s8 + $0xa0] sm:$0xff]
      %v1271 = vld [vmem:[%s8 + $0xa8] sm:$0xff]
      %v1272 = vld [vmem:[%s8 + $0xb0] sm:$0xff]
      %v1273 = vld [vmem:[%s8 + $0xb8] sm:$0xff]
      %v1274 = vld [vmem:[%s8 + $0xc0] sm:$0xff]
      %v1275 = vld [vmem:[%s8 + $0xc8] sm:$0xff]
      %v1276 = vld [vmem:[%s8 + $0xd0] sm:$0xff]
      %v1277 = vld [vmem:[%s8 + $0xd8] sm:$0xff]
      %v1278 = vld [vmem:[%s8 + $0xe0] sm:$0xff]
      %v1279 = vld [vmem:[%s8 + $0xe8] sm:$0xff]
      %v1280 = vld [vmem:[%s8 + $0xf0] sm:$0xff]
      %v1281 = vld [vmem:[%s8 + $0xf8] sm:$0xff]
      %v1314 = vunpack.c.l.b16 %v1250
      %v1315 = vunpack.c.h.b16 %v1250
      %v1316 = vunpack.c.l.b16 %v1251
      %v1317 = vunpack.c.h.b16 %v1251
      %v1318 = vunpack.c.l.b16 %v1252
      %v1319 = vunpack.c.h.b16 %v1252
      %v1320 = vunpack.c.l.b16 %v1253
      %v1321 = vunpack.c.h.b16 %v1253
      %v1322 = vunpack.c.l.b16 %v1254
      %v1323 = vunpack.c.h.b16 %v1254
      %v1324 = vunpack.c.l.b16 %v1255
      %v1325 = vunpack.c.h.b16 %v1255
      %v1326 = vunpack.c.l.b16 %v1256
      %v1327 = vunpack.c.h.b16 %v1256
      %v1328 = vunpack.c.l.b16 %v1257
      %v1329 = vunpack.c.h.b16 %v1257
      %v1330 = vunpack.c.l.b16 %v1258
      %v1331 = vunpack.c.h.b16 %v1258
      %v1332 = vunpack.c.l.b16 %v1259
      %v1333 = vunpack.c.h.b16 %v1259
      %v1334 = vunpack.c.l.b16 %v1260
      %v1335 = vunpack.c.h.b16 %v1260
      %v1336 = vunpack.c.l.b16 %v1261
      %v1337 = vunpack.c.h.b16 %v1261
      %v1338 = vunpack.c.l.b16 %v1262
      %v1339 = vunpack.c.h.b16 %v1262
      %v1340 = vunpack.c.l.b16 %v1263
      %v1341 = vunpack.c.h.b16 %v1263
      %v1342 = vunpack.c.l.b16 %v1264
      %v1343 = vunpack.c.h.b16 %v1264
      %v1344 = vunpack.c.l.b16 %v1265
      %v1345 = vunpack.c.h.b16 %v1265
      %v1346 = vunpack.c.l.b16 %v1266
      %v1347 = vunpack.c.h.b16 %v1266
      %v1348 = vunpack.c.l.b16 %v1267
      %v1349 = vunpack.c.h.b16 %v1267
      %v1350 = vunpack.c.l.b16 %v1268
      %v1351 = vunpack.c.h.b16 %v1268
      %v1352 = vunpack.c.l.b16 %v1269
      %v1353 = vunpack.c.h.b16 %v1269
      %v1354 = vunpack.c.l.b16 %v1270
      %v1355 = vunpack.c.h.b16 %v1270
      %v1356 = vunpack.c.l.b16 %v1271
      %v1357 = vunpack.c.h.b16 %v1271
      %v1358 = vunpack.c.l.b16 %v1272
      %v1359 = vunpack.c.h.b16 %v1272
      %v1360 = vunpack.c.l.b16 %v1273
      %v1361 = vunpack.c.h.b16 %v1273
      %v1362 = vunpack.c.l.b16 %v1274
      %v1363 = vunpack.c.h.b16 %v1274
      %v1364 = vunpack.c.l.b16 %v1275
      %v1365 = vunpack.c.h.b16 %v1275
      %v1366 = vunpack.c.l.b16 %v1276
      %v1367 = vunpack.c.h.b16 %v1276
      %v1368 = vunpack.c.l.b16 %v1277
      %v1369 = vunpack.c.h.b16 %v1277
      %v1370 = vunpack.c.l.b16 %v1278
      %v1371 = vunpack.c.h.b16 %v1278
      %v1372 = vunpack.c.l.b16 %v1279
      %v1373 = vunpack.c.h.b16 %v1279
      %v1374 = vunpack.c.l.b16 %v1280
      %v1375 = vunpack.c.h.b16 %v1280
      %v1376 = vunpack.c.l.b16 %v1281
      %v1377 = vunpack.c.h.b16 %v1281
      %v1378 = vpack.c.b16 %v1318, %v1314
      %v1379 = vpack.c.b16 %v1319, %v1315
      %v1380 = vpack.c.b16 %v1320, %v1316
      %v1381 = vpack.c.b16 %v1321, %v1317
      %v1382 = vpack.c.b16 %v1326, %v1322
      %v1383 = vpack.c.b16 %v1327, %v1323
      %v1384 = vpack.c.b16 %v1328, %v1324
      %v1385 = vpack.c.b16 %v1329, %v1325
      %v1386 = vpack.c.b16 %v1334, %v1330
      %v1387 = vpack.c.b16 %v1335, %v1331
      %v1388 = vpack.c.b16 %v1336, %v1332
      %v1389 = vpack.c.b16 %v1337, %v1333
      %v1390 = vpack.c.b16 %v1342, %v1338
      %v1391 = vpack.c.b16 %v1343, %v1339
      %v1392 = vpack.c.b16 %v1344, %v1340
      %v1393 = vpack.c.b16 %v1345, %v1341
      %v1394 = vpack.c.b16 %v1350, %v1346
      %v1395 = vpack.c.b16 %v1351, %v1347
      %v1396 = vpack.c.b16 %v1352, %v1348
      %v1397 = vpack.c.b16 %v1353, %v1349
      %v1398 = vpack.c.b16 %v1358, %v1354
      %v1399 = vpack.c.b16 %v1359, %v1355
      %v1400 = vpack.c.b16 %v1360, %v1356
      %v1401 = vpack.c.b16 %v1361, %v1357
      %v1402 = vpack.c.b16 %v1366, %v1362
      %v1403 = vpack.c.b16 %v1367, %v1363
      %v1404 = vpack.c.b16 %v1368, %v1364
      %v1405 = vpack.c.b16 %v1369, %v1365
      %v1406 = vpack.c.b16 %v1374, %v1370
      %v1407 = vpack.c.b16 %v1375, %v1371
      %v1408 = vpack.c.b16 %v1376, %v1372
      %v1409 = vpack.c.b16 %v1377, %v1373
      %1442 = vmatprep.subr.bf16.mxu0 %v1379
      %1443 = vmatpush1.bf16.msra.mxu0 %v1378
      %1444 = vmatprep.subr.bf16.mxu0 %v1383
      %1445 = vmatpush1.bf16.msra.mxu0 %v1382
      %1446 = vmatprep.subr.bf16.mxu0 %v1387
      %1447 = vmatpush1.bf16.msra.mxu0 %v1386
      %1448 = vmatprep.subr.bf16.mxu0 %v1391
      %1449 = vmatpush1.bf16.msra.mxu0 %v1390
      %1450 = vmatprep.subr.bf16.mxu0 %v1395
      %1451 = vmatpush1.bf16.msra.mxu0 %v1394
      %1452 = vmatprep.subr.bf16.mxu0 %v1399
      %1453 = vmatpush1.bf16.msra.mxu0 %v1398
      %1454 = vmatprep.subr.bf16.mxu0 %v1403
      %1455 = vmatpush1.bf16.msra.mxu0 %v1402
      %1456 = vmatprep.subr.bf16.mxu0 %v1407
      %1457 = vmatpush1.bf16.msra.mxu0 %v1406
      %1458 = vmatprep.subr.bf16.mxu0 0
      %1459 = vmatpush1.bf16.msra.mxu0 0
      %1460 = vmatprep.subr.bf16.mxu0 0
      %1461 = vmatpush1.bf16.msra.mxu0 0
      %1462 = vmatprep.subr.bf16.mxu0 0
      %1463 = vmatpush1.bf16.msra.mxu0 0
      %1464 = vmatprep.subr.bf16.mxu0 0
      %1465 = vmatpush1.bf16.msra.mxu0 0
      %1466 = vmatprep.subr.bf16.mxu0 0
      %1467 = vmatpush1.bf16.msra.mxu0 0
      %1468 = vmatprep.subr.bf16.mxu0 0
      %1469 = vmatpush1.bf16.msra.mxu0 0
      %1470 = vmatprep.subr.bf16.mxu0 0
      %1471 = vmatpush1.bf16.msra.mxu0 0
      %1472 = vmatprep.subr.bf16.mxu0 0
      %1473 = vmatpush1.bf16.msra.mxu0 0
      %1474 = vmatprep.mubr.bf16.mxu0 0
      %1475 = vmatmul.mubr.bf16.gmra.mrb[0].mxu0 %v1249
      %v1476 = vpop.f32.mrb[0].mxu0
      %v1477 = vadd.f32 %v970, %v1476
      %v1478 = vpop.f32.mrb[0].mxu0
      %v1479 = vadd.f32 %v971, %v1478
      %v1480 = vpop.f32.mrb[0].mxu0
      %v1481 = vpop.f32.mrb[0].mxu0
      %1482 = vdwg.mxu0
      %1483 = vmatprep.subr.bf16.mxu0 %v1381
      %1484 = vmatpush1.bf16.msra.mxu0 %v1380
      %1485 = vmatprep.subr.bf16.mxu0 %v1385
      %1486 = vmatpush1.bf16.msra.mxu0 %v1384
      %1487 = vmatprep.subr.bf16.mxu0 %v1389
      %1488 = vmatpush1.bf16.msra.mxu0 %v1388
      %1489 = vmatprep.subr.bf16.mxu0 %v1393
      %1490 = vmatpush1.bf16.msra.mxu0 %v1392
      %1491 = vmatprep.subr.bf16.mxu0 %v1397
      %1492 = vmatpush1.bf16.msra.mxu0 %v1396
      %1493 = vmatprep.subr.bf16.mxu0 %v1401
      %1494 = vmatpush1.bf16.msra.mxu0 %v1400
      %1495 = vmatprep.subr.bf16.mxu0 %v1405
      %1496 = vmatpush1.bf16.msra.mxu0 %v1404
      %1497 = vmatprep.subr.bf16.mxu0 %v1409
      %1498 = vmatpush1.bf16.msra.mxu0 %v1408
      %1499 = vmatprep.subr.bf16.mxu0 0
      %1500 = vmatpush1.bf16.msra.mxu0 0
      %1501 = vmatprep.subr.bf16.mxu0 0
      %1502 = vmatpush1.bf16.msra.mxu0 0
      %1503 = vmatprep.subr.bf16.mxu0 0
      %1504 = vmatpush1.bf16.msra.mxu0 0
      %1505 = vmatprep.subr.bf16.mxu0 0
      %1506 = vmatpush1.bf16.msra.mxu0 0
      %1507 = vmatprep.subr.bf16.mxu0 0
      %1508 = vmatpush1.bf16.msra.mxu0 0
      %1509 = vmatprep.subr.bf16.mxu0 0
      %1510 = vmatpush1.bf16.msra.mxu0 0
      %1511 = vmatprep.subr.bf16.mxu0 0
      %1512 = vmatpush1.bf16.msra.mxu0 0
      %1513 = vmatprep.subr.bf16.mxu0 0
      %1514 = vmatpush1.bf16.msra.mxu0 0
      %1515 = vmatprep.mubr.bf16.mxu0 0
      %1516 = vmatmul.mubr.bf16.gmra.mrb[0].mxu0 %v1249
      %v1517 = vpop.f32.mrb[0].mxu0
      %v1518 = vadd.f32 %v972, %v1517
      %v1519 = vpop.f32.mrb[0].mxu0
      %v1520 = vadd.f32 %v973, %v1519
      %v1521 = vpop.f32.mrb[0].mxu0
      %v1522 = vpop.f32.mrb[0].mxu0
      %1523 = vdwg.mxu0
      %v1524 = vxor.u32 %v1202, 2147483648
      %v1525 = vmul.f32 %v1524, 1.442695
      %v1526 = vpow.pop %v1525
      %v1527 = vadd.f32 %v1526, 1.0
      %v1528 = vrcp.pop %v1527
      %v1529 = vmul.f32 1.0, %v1528
      %v1530 = vxor.u32 %v1204, 2147483648
      %v1531 = vmul.f32 %v1530, 1.442695
      %v1532 = vpow.pop %v1531
      %v1533 = vadd.f32 %v1532, 1.0
      %v1534 = vrcp.pop %v1533
      %v1535 = vmul.f32 1.0, %v1534
      %v1536 = vtanh.pop %v1243
      %v1537 = vxor.u32 %v1245, 2147483648
      %v1538 = vmul.f32 %v1537, 1.442695
      %v1539 = vpow.pop %v1538
      %v1540 = vadd.f32 %v1539, 1.0
      %v1541 = vrcp.pop %v1540
      %v1542 = vmul.f32 1.0, %v1541
      %v1543 = vmul.f32 %v1535, %v958
      %v1544 = vmul.f32 %v1529, %v1536
      %v1545 = vadd.f32 %v1543, %v1544
      %v1546 = vtanh.pop %v1545
      %v1547 = vmul.f32 %v1542, %v1546
      %v1548 = vxor.u32 %v1477, 2147483648
      %v1549 = vmul.f32 %v1548, 1.442695
      %v1550 = vpow.pop %v1549
      %v1551 = vadd.f32 %v1550, 1.0
      %v1552 = vrcp.pop %v1551
      %v1553 = vmul.f32 1.0, %v1552
      %v1554 = vxor.u32 %v1479, 2147483648
      %v1555 = vmul.f32 %v1554, 1.442695
      %v1556 = vpow.pop %v1555
      %v1557 = vadd.f32 %v1556, 1.0
      %v1558 = vrcp.pop %v1557
      %v1559 = vmul.f32 1.0, %v1558
      %v1560 = vtanh.pop %v1518
      %v1561 = vxor.u32 %v1520, 2147483648
      %v1562 = vmul.f32 %v1561, 1.442695
      %v1563 = vpow.pop %v1562
      %v1564 = vadd.f32 %v1563, 1.0
      %v1565 = vrcp.pop %v1564
      %v1566 = vmul.f32 1.0, %v1565
      %v1567 = vmul.f32 %v1559, %v960
      %v1568 = vmul.f32 %v1553, %v1560
      %v1569 = vadd.f32 %v1567, %v1568
      %v1570 = vtanh.pop %v1569
      %v1571 = vmul.f32 %v1566, %v1570
      %v1572 = vstv %s956
      %vm1573 = vcmp.lt.s32.totalorder %v1572, %v955
      %s1574 = ssub.s32 7, %s956
      %v1575 = vstv %s1574
      %vm1576 = vcmp.lt.s32.totalorder %v1575, %v955
      %v1577 = vsel %vm1573, %v1547, %v957
      %v1578 = vsel %vm1573, %v1545, %v958
      %v1579 = vsel %vm1576, %v1571, %v959
      %v1580 = vsel %vm1576, %v1569, %v960
      %s1581 = sadd.s32 %s956, 1
      %s1582 = scalar_lea.vmem [#allocation2], 16
      %v1583 = vld [vmem:[%s1582] sm:$0xff]
      %v1584 = vld [vmem:[%s1582 + $0x8] sm:$0xff]
      %v1585 = vunpack.c.l.bf16 %v1583
      %v1586 = vunpack.c.h.bf16 %v1583
      %v1587 = vunpack.c.l.bf16 %v1584
      %v1588 = vunpack.c.h.bf16 %v1584
      %s1589 = scalar_lea.vmem [#allocation3], 32
      %v1590 = vld [vmem:[%s1589] sm:$0xff]
      %v1591 = vld [vmem:[%s1589 + $0x8] sm:$0xff]
      %v1592 = vunpack.c.l.bf16 %v1590
      %v1593 = vunpack.c.h.bf16 %v1590
      %v1594 = vunpack.c.l.bf16 %v1591
      %v1595 = vunpack.c.h.bf16 %v1591
      %v1596 = vpack.c.bf16 %v1577, %v1577
      %1597 = vmatprep.subr.bf16.mxu0 %v1104
      %1598 = vmatpush1.bf16.msra.mxu0 %v1103
      %1599 = vmatprep.subr.bf16.mxu0 %v1108
      %1600 = vmatpush1.bf16.msra.mxu0 %v1107
      %1601 = vmatprep.subr.bf16.mxu0 %v1112
      %1602 = vmatpush1.bf16.msra.mxu0 %v1111
      %1603 = vmatprep.subr.bf16.mxu0 %v1116
      %1604 = vmatpush1.bf16.msra.mxu0 %v1115
      %1605 = vmatprep.subr.bf16.mxu0 %v1120
      %1606 = vmatpush1.bf16.msra.mxu0 %v1119
      %1607 = vmatprep.subr.bf16.mxu0 %v1124
      %1608 = vmatpush1.bf16.msra.mxu0 %v1123
      %1609 = vmatprep.subr.bf16.mxu0 %v1128
      %1610 = vmatpush1.bf16.msra.mxu0 %v1127
      %1611 = vmatprep.subr.bf16.mxu0 %v1132
      %1612 = vmatpush1.bf16.msra.mxu0 %v1131
      %1613 = vmatprep.subr.bf16.mxu0 0
      %1614 = vmatpush1.bf16.msra.mxu0 0
      %1615 = vmatprep.subr.bf16.mxu0 0
      %1616 = vmatpush1.bf16.msra.mxu0 0
      %1617 = vmatprep.subr.bf16.mxu0 0
      %1618 = vmatpush1.bf16.msra.mxu0 0
      %1619 = vmatprep.subr.bf16.mxu0 0
      %1620 = vmatpush1.bf16.msra.mxu0 0
      %1621 = vmatprep.subr.bf16.mxu0 0
      %1622 = vmatpush1.bf16.msra.mxu0 0
      %1623 = vmatprep.subr.bf16.mxu0 0
      %1624 = vmatpush1.bf16.msra.mxu0 0
      %1625 = vmatprep.subr.bf16.mxu0 0
      %1626 = vmatpush1.bf16.msra.mxu0 0
      %1627 = vmatprep.subr.bf16.mxu0 0
      %1628 = vmatpush1.bf16.msra.mxu0 0
      %1629 = vmatprep.mubr.bf16.mxu0 0
      %1630 = vmatmul.mubr.bf16.gmra.mrb[0].mxu0 %v1596
      %v1631 = vpop.f32.mrb[0].mxu0
      %v1632 = vadd.f32 %v1585, %v1631
      %v1633 = vpop.f32.mrb[0].mxu0
      %v1634 = vadd.f32 %v1586, %v1633
      %v1635 = vpop.f32.mrb[0].mxu0
      %v1636 = vpop.f32.mrb[0].mxu0
      %1637 = vdwg.mxu0
      %1638 = vmatprep.subr.bf16.mxu0 %v1106
      %1639 = vmatpush1.bf16.msra.mxu0 %v1105
      %1640 = vmatprep.subr.bf16.mxu0 %v1110
      %1641 = vmatpush1.bf16.msra.mxu0 %v1109
      %1642 = vmatprep.subr.bf16.mxu0 %v1114
      %1643 = vmatpush1.bf16.msra.mxu0 %v1113
      %1644 = vmatprep.subr.bf16.mxu0 %v1118
      %1645 = vmatpush1.bf16.msra.mxu0 %v1117
      %1646 = vmatprep.subr.bf16.mxu0 %v1122
      %1647 = vmatpush1.bf16.msra.mxu0 %v1121
      %1648 = vmatprep.subr.bf16.mxu0 %v1126
      %1649 = vmatpush1.bf16.msra.mxu0 %v1125
      %1650 = vmatprep.subr.bf16.mxu0 %v1130
      %1651 = vmatpush1.bf16.msra.mxu0 %v1129
      %1652 = vmatprep.subr.bf16.mxu0 %v1134
      %1653 = vmatpush1.bf16.msra.mxu0 %v1133
      %1654 = vmatprep.subr.bf16.mxu0 0
      %1655 = vmatpush1.bf16.msra.mxu0 0
      %1656 = vmatprep.subr.bf16.mxu0 0
      %1657 = vmatpush1.bf16.msra.mxu0 0
      %1658 = vmatprep.subr.bf16.mxu0 0
      %1659 = vmatpush1.bf16.msra.mxu0 0
      %1660 = vmatprep.subr.bf16.mxu0 0
      %1661 = vmatpush1.bf16.msra.mxu0 0
      %1662 = vmatprep.subr.bf16.mxu0 0
      %1663 = vmatpush1.bf16.msra.mxu0 0
      %1664 = vmatprep.subr.bf16.mxu0 0
      %1665 = vmatpush1.bf16.msra.mxu0 0
      %1666 = vmatprep.subr.bf16.mxu0 0
      %1667 = vmatpush1.bf16.msra.mxu0 0
      %1668 = vmatprep.subr.bf16.mxu0 0
      %1669 = vmatpush1.bf16.msra.mxu0 0
      %1670 = vmatprep.mubr.bf16.mxu0 0
      %1671 = vmatmul.mubr.bf16.gmra.mrb[0].mxu0 %v1596
      %v1672 = vpop.f32.mrb[0].mxu0
      %v1673 = vadd.f32 %v1587, %v1672
      %v1674 = vpop.f32.mrb[0].mxu0
      %v1675 = vadd.f32 %v1588, %v1674
      %v1676 = vpop.f32.mrb[0].mxu0
      %v1677 = vpop.f32.mrb[0].mxu0
      %1678 = vdwg.mxu0
      %v1679 = vpack.c.bf16 %v1579, %v1579
      %1680 = vmatprep.subr.bf16.mxu0 %v1379
      %1681 = vmatpush1.bf16.msra.mxu0 %v1378
      %1682 = vmatprep.subr.bf16.mxu0 %v1383
      %1683 = vmatpush1.bf16.msra.mxu0 %v1382
      %1684 = vmatprep.subr.bf16.mxu0 %v1387
      %1685 = vmatpush1.bf16.msra.mxu0 %v1386
      %1686 = vmatprep.subr.bf16.mxu0 %v1391
      %1687 = vmatpush1.bf16.msra.mxu0 %v1390
      %1688 = vmatprep.subr.bf16.mxu0 %v1395
      %1689 = vmatpush1.bf16.msra.mxu0 %v1394
      %1690 = vmatprep.subr.bf16.mxu0 %v1399
      %1691 = vmatpush1.bf16.msra.mxu0 %v1398
      %1692 = vmatprep.subr.bf16.mxu0 %v1403
      %1693 = vmatpush1.bf16.msra.mxu0 %v1402
      %1694 = vmatprep.subr.bf16.mxu0 %v1407
      %1695 = vmatpush1.bf16.msra.mxu0 %v1406
      %1696 = vmatprep.subr.bf16.mxu0 0
      %1697 = vmatpush1.bf16.msra.mxu0 0
      %1698 = vmatprep.subr.bf16.mxu0 0
      %1699 = vmatpush1.bf16.msra.mxu0 0
      %1700 = vmatprep.subr.bf16.mxu0 0
      %1701 = vmatpush1.bf16.msra.mxu0 0
      %1702 = vmatprep.subr.bf16.mxu0 0
      %1703 = vmatpush1.bf16.msra.mxu0 0
      %1704 = vmatprep.subr.bf16.mxu0 0
      %1705 = vmatpush1.bf16.msra.mxu0 0
      %1706 = vmatprep.subr.bf16.mxu0 0
      %1707 = vmatpush1.bf16.msra.mxu0 0
      %1708 = vmatprep.subr.bf16.mxu0 0
      %1709 = vmatpush1.bf16.msra.mxu0 0
      %1710 = vmatprep.subr.bf16.mxu0 0
      %1711 = vmatpush1.bf16.msra.mxu0 0
      %1712 = vmatprep.mubr.bf16.mxu0 0
      %1713 = vmatmul.mubr.bf16.gmra.mrb[0].mxu0 %v1679
      %v1714 = vpop.f32.mrb[0].mxu0
      %v1715 = vadd.f32 %v1592, %v1714
      %v1716 = vpop.f32.mrb[0].mxu0
      %v1717 = vadd.f32 %v1593, %v1716
      %v1718 = vpop.f32.mrb[0].mxu0
      %v1719 = vpop.f32.mrb[0].mxu0
      %1720 = vdwg.mxu0
      %1721 = vmatprep.subr.bf16.mxu0 %v1381
      %1722 = vmatpush1.bf16.msra.mxu0 %v1380
      %1723 = vmatprep.subr.bf16.mxu0 %v1385
      %1724 = vmatpush1.bf16.msra.mxu0 %v1384
      %1725 = vmatprep.subr.bf16.mxu0 %v1389
      %1726 = vmatpush1.bf16.msra.mxu0 %v1388
      %1727 = vmatprep.subr.bf16.mxu0 %v1393
      %1728 = vmatpush1.bf16.msra.mxu0 %v1392
      %1729 = vmatprep.subr.bf16.mxu0 %v1397
      %1730 = vmatpush1.bf16.msra.mxu0 %v1396
      %1731 = vmatprep.subr.bf16.mxu0 %v1401
      %1732 = vmatpush1.bf16.msra.mxu0 %v1400
      %1733 = vmatprep.subr.bf16.mxu0 %v1405
      %1734 = vmatpush1.bf16.msra.mxu0 %v1404
      %1735 = vmatprep.subr.bf16.mxu0 %v1409
      %1736 = vmatpush1.bf16.msra.mxu0 %v1408
      %1737 = vmatprep.subr.bf16.mxu0 0
      %1738 = vmatpush1.bf16.msra.mxu0 0
      %1739 = vmatprep.subr.bf16.mxu0 0
      %1740 = vmatpush1.bf16.msra.mxu0 0
      %1741 = vmatprep.subr.bf16.mxu0 0
      %1742 = vmatpush1.bf16.msra.mxu0 0
      %1743 = vmatprep.subr.bf16.mxu0 0
      %1744 = vmatpush1.bf16.msra.mxu0 0
      %1745 = vmatprep.subr.bf16.mxu0 0
      %1746 = vmatpush1.bf16.msra.mxu0 0
      %1747 = vmatprep.subr.bf16.mxu0 0
      %1748 = vmatpush1.bf16.msra.mxu0 0
      %1749 = vmatprep.subr.bf16.mxu0 0
      %1750 = vmatpush1.bf16.msra.mxu0 0
      %1751 = vmatprep.subr.bf16.mxu0 0
      %1752 = vmatpush1.bf16.msra.mxu0 0
      %1753 = vmatprep.mubr.bf16.mxu0 0
      %1754 = vmatmul.mubr.bf16.gmra.mrb[0].mxu0 %v1679
      %v1755 = vpop.f32.mrb[0].mxu0
      %v1756 = vadd.f32 %v1594, %v1755
      %v1757 = vpop.f32.mrb[0].mxu0
      %v1758 = vadd.f32 %v1595, %v1757
      %v1759 = vpop.f32.mrb[0].mxu0
      %v1760 = vpop.f32.mrb[0].mxu0
      %1761 = vdwg.mxu0
      %v1762 = vxor.u32 %v1632, 2147483648
      %v1763 = vmul.f32 %v1762, 1.442695
      %v1764 = vpow.pop %v1763
      %v1765 = vadd.f32 %v1764, 1.0
      %v1766 = vrcp.pop %v1765
      %v1767 = vmul.f32 1.0, %v1766
      %v1768 = vxor.u32 %v1634, 2147483648
      %v1769 = vmul.f32 %v1768, 1.442695
      %v1770 = vpow.pop %v1769
      %v1771 = vadd.f32 %v1770, 1.0
      %v1772 = vrcp.pop %v1771
      %v1773 = vmul.f32 1.0, %v1772
      %v1774 = vtanh.pop %v1673
      %v1775 = vxor.u32 %v1675, 2147483648
      %v1776 = vmul.f32 %v1775, 1.442695
      %v1777 = vpow.pop %v1776
      %v1778 = vadd.f32 %v1777, 1.0
      %v1779 = vrcp.pop %v1778
      %v1780 = vmul.f32 1.0, %v1779
      %v1781 = vmul.f32 %v1773, %v1578
      %v1782 = vmul.f32 %v1767, %v1774
      %v1783 = vadd.f32 %v1781, %v1782
      %v1784 = vtanh.pop %v1783
      %v1785 = vmul.f32 %v1780, %v1784
      %v1786 = vxor.u32 %v1715, 2147483648
      %v1787 = vmul.f32 %v1786, 1.442695
      %v1788 = vpow.pop %v1787
      %v1789 = vadd.f32 %v1788, 1.0
      %v1790 = vrcp.pop %v1789
      %v1791 = vmul.f32 1.0, %v1790
      %v1792 = vxor.u32 %v1717, 2147483648
      %v1793 = vmul.f32 %v1792, 1.442695
      %v1794 = vpow.pop %v1793
      %v1795 = vadd.f32 %v1794, 1.0
      %v1796 = vrcp.pop %v1795
      %v1797 = vmul.f32 1.0, %v1796
      %v1798 = vtanh.pop %v1756
      %v1799 = vxor.u32 %v1758, 2147483648
      %v1800 = vmul.f32 %v1799, 1.442695
      %v1801 = vpow.pop %v1800
      %v1802 = vadd.f32 %v1801, 1.0
      %v1803 = vrcp.pop %v1802
      %v1804 = vmul.f32 1.0, %v1803
      %v1805 = vmul.f32 %v1797, %v1580
      %v1806 = vmul.f32 %v1791, %v1798
      %v1807 = vadd.f32 %v1805, %v1806
      %v1808 = vtanh.pop %v1807
      %v1809 = vmul.f32 %v1804, %v1808
      %v1810 = vstv %s1581
      %vm1811 = vcmp.lt.s32.totalorder %v1810, %v955
      %s1812 = ssub.s32 6, %s956
      %v1813 = vstv %s1812
      %vm1814 = vcmp.lt.s32.totalorder %v1813, %v955
      %v1815 = vsel %vm1811, %v1785, %v1577
      %v1816 = vsel %vm1811, %v1783, %v1578
      %v1817 = vsel %vm1814, %v1809, %v1579
      %v1818 = vsel %vm1814, %v1807, %v1580
      %s1819 = sadd.s32 %s956, 2
      %s1820 = scalar_lea.vmem [#allocation2], 32
      %v1821 = vld [vmem:[%s1820] sm:$0xff]
      %v1822 = vld [vmem:[%s1820 + $0x8] sm:$0xff]
      %v1823 = vunpack.c.l.bf16 %v1821
      %v1824 = vunpack.c.h.bf16 %v1821
      %v1825 = vunpack.c.l.bf16 %v1822
      %v1826 = vunpack.c.h.bf16 %v1822
      %s1827 = scalar_lea.vmem [#allocation3], 16
      %v1828 = vld [vmem:[%s1827] sm:$0xff]
      %v1829 = vld [vmem:[%s1827 + $0x8] sm:$0xff]
      %v1830 = vunpack.c.l.bf16 %v1828
      %v1831 = vunpack.c.h.bf16 %v1828
      %v1832 = vunpack.c.l.bf16 %v1829
      %v1833 = vunpack.c.h.bf16 %v1829
      %v1834 = vpack.c.bf16 %v1815, %v1815
      %1835 = vmatprep.subr.bf16.mxu0 %v1104
      %1836 = vmatpush1.bf16.msra.mxu0 %v1103
      %1837 = vmatprep.subr.bf16.mxu0 %v1108
      %1838 = vmatpush1.bf16.msra.mxu0 %v1107
      %1839 = vmatprep.subr.bf16.mxu0 %v1112
      %1840 = vmatpush1.bf16.msra.mxu0 %v1111
      %1841 = vmatprep.subr.bf16.mxu0 %v1116
      %1842 = vmatpush1.bf16.msra.mxu0 %v1115
      %1843 = vmatprep.subr.bf16.mxu0 %v1120
      %1844 = vmatpush1.bf16.msra.mxu0 %v1119
      %1845 = vmatprep.subr.bf16.mxu0 %v1124
      %1846 = vmatpush1.bf16.msra.mxu0 %v1123
      %1847 = vmatprep.subr.bf16.mxu0 %v1128
      %1848 = vmatpush1.bf16.msra.mxu0 %v1127
      %1849 = vmatprep.subr.bf16.mxu0 %v1132
      %1850 = vmatpush1.bf16.msra.mxu0 %v1131
      %1851 = vmatprep.subr.bf16.mxu0 0
      %1852 = vmatpush1.bf16.msra.mxu0 0
      %1853 = vmatprep.subr.bf16.mxu0 0
      %1854 = vmatpush1.bf16.msra.mxu0 0
      %1855 = vmatprep.subr.bf16.mxu0 0
      %1856 = vmatpush1.bf16.msra.mxu0 0
      %1857 = vmatprep.subr.bf16.mxu0 0
      %1858 = vmatpush1.bf16.msra.mxu0 0
      %1859 = vmatprep.subr.bf16.mxu0 0
      %1860 = vmatpush1.bf16.msra.mxu0 0
      %1861 = vmatprep.subr.bf16.mxu0 0
      %1862 = vmatpush1.bf16.msra.mxu0 0
      %1863 = vmatprep.subr.bf16.mxu0 0
      %1864 = vmatpush1.bf16.msra.mxu0 0
      %1865 = vmatprep.subr.bf16.mxu0 0
      %1866 = vmatpush1.bf16.msra.mxu0 0
      %1867 = vmatprep.mubr.bf16.mxu0 0
      %1868 = vmatmul.mubr.bf16.gmra.mrb[0].mxu0 %v1834
      %v1869 = vpop.f32.mrb[0].mxu0
      %v1870 = vadd.f32 %v1823, %v1869
      %v1871 = vpop.f32.mrb[0].mxu0
      %v1872 = vadd.f32 %v1824, %v1871
      %v1873 = vpop.f32.mrb[0].mxu0
      %v1874 = vpop.f32.mrb[0].mxu0
      %1875 = vdwg.mxu0
      %1876 = vmatprep.subr.bf16.mxu0 %v1106
      %1877 = vmatpush1.bf16.msra.mxu0 %v1105
      %1878 = vmatprep.subr.bf16.mxu0 %v1110
      %1879 = vmatpush1.bf16.msra.mxu0 %v1109
      %1880 = vmatprep.subr.bf16.mxu0 %v1114
      %1881 = vmatpush1.bf16.msra.mxu0 %v1113
      %1882 = vmatprep.subr.bf16.mxu0 %v1118
      %1883 = vmatpush1.bf16.msra.mxu0 %v1117
      %1884 = vmatprep.subr.bf16.mxu0 %v1122
      %1885 = vmatpush1.bf16.msra.mxu0 %v1121
      %1886 = vmatprep.subr.bf16.mxu0 %v1126
      %1887 = vmatpush1.bf16.msra.mxu0 %v1125
      %1888 = vmatprep.subr.bf16.mxu0 %v1130
      %1889 = vmatpush1.bf16.msra.mxu0 %v1129
      %1890 = vmatprep.subr.bf16.mxu0 %v1134
      %1891 = vmatpush1.bf16.msra.mxu0 %v1133
      %1892 = vmatprep.subr.bf16.mxu0 0
      %1893 = vmatpush1.bf16.msra.mxu0 0
      %1894 = vmatprep.subr.bf16.mxu0 0
      %1895 = vmatpush1.bf16.msra.mxu0 0
      %1896 = vmatprep.subr.bf16.mxu0 0
      %1897 = vmatpush1.bf16.msra.mxu0 0
      %1898 = vmatprep.subr.bf16.mxu0 0
      %1899 = vmatpush1.bf16.msra.mxu0 0
      %1900 = vmatprep.subr.bf16.mxu0 0
      %1901 = vmatpush1.bf16.msra.mxu0 0
      %1902 = vmatprep.subr.bf16.mxu0 0
      %1903 = vmatpush1.bf16.msra.mxu0 0
      %1904 = vmatprep.subr.bf16.mxu0 0
      %1905 = vmatpush1.bf16.msra.mxu0 0
      %1906 = vmatprep.subr.bf16.mxu0 0
      %1907 = vmatpush1.bf16.msra.mxu0 0
      %1908 = vmatprep.mubr.bf16.mxu0 0
      %1909 = vmatmul.mubr.bf16.gmra.mrb[0].mxu0 %v1834
      %v1910 = vpop.f32.mrb[0].mxu0
      %v1911 = vadd.f32 %v1825, %v1910
      %v1912 = vpop.f32.mrb[0].mxu0
      %v1913 = vadd.f32 %v1826, %v1912
      %v1914 = vpop.f32.mrb[0].mxu0
      %v1915 = vpop.f32.mrb[0].mxu0
      %1916 = vdwg.mxu0
      %v1917 = vpack.c.bf16 %v1817, %v1817
      %1918 = vmatprep.subr.bf16.mxu0 %v1379
      %1919 = vmatpush1.bf16.msra.mxu0 %v1378
      %1920 = vmatprep.subr.bf16.mxu0 %v1383
      %1921 = vmatpush1.bf16.msra.mxu0 %v1382
      %1922 = vmatprep.subr.bf16.mxu0 %v1387
      %1923 = vmatpush1.bf16.msra.mxu0 %v1386
      %1924 = vmatprep.subr.bf16.mxu0 %v1391
      %1925 = vmatpush1.bf16.msra.mxu0 %v1390
      %1926 = vmatprep.subr.bf16.mxu0 %v1395
      %1927 = vmatpush1.bf16.msra.mxu0 %v1394
      %1928 = vmatprep.subr.bf16.mxu0 %v1399
      %1929 = vmatpush1.bf16.msra.mxu0 %v1398
      %1930 = vmatprep.subr.bf16.mxu0 %v1403
      %1931 = vmatpush1.bf16.msra.mxu0 %v1402
      %1932 = vmatprep.subr.bf16.mxu0 %v1407
      %1933 = vmatpush1.bf16.msra.mxu0 %v1406
      %1934 = vmatprep.subr.bf16.mxu0 0
      %1935 = vmatpush1.bf16.msra.mxu0 0
      %1936 = vmatprep.subr.bf16.mxu0 0
      %1937 = vmatpush1.bf16.msra.mxu0 0
      %1938 = vmatprep.subr.bf16.mxu0 0
      %1939 = vmatpush1.bf16.msra.mxu0 0
      %1940 = vmatprep.subr.bf16.mxu0 0
      %1941 = vmatpush1.bf16.msra.mxu0 0
      %1942 = vmatprep.subr.bf16.mxu0 0
      %1943 = vmatpush1.bf16.msra.mxu0 0
      %1944 = vmatprep.subr.bf16.mxu0 0
      %1945 = vmatpush1.bf16.msra.mxu0 0
      %1946 = vmatprep.subr.bf16.mxu0 0
      %1947 = vmatpush1.bf16.msra.mxu0 0
      %1948 = vmatprep.subr.bf16.mxu0 0
      %1949 = vmatpush1.bf16.msra.mxu0 0
      %1950 = vmatprep.mubr.bf16.mxu0 0
      %1951 = vmatmul.mubr.bf16.gmra.mrb[0].mxu0 %v1917
      %v1952 = vpop.f32.mrb[0].mxu0
      %v1953 = vadd.f32 %v1830, %v1952
      %v1954 = vpop.f32.mrb[0].mxu0
      %v1955 = vadd.f32 %v1831, %v1954
      %v1956 = vpop.f32.mrb[0].mxu0
      %v1957 = vpop.f32.mrb[0].mxu0
      %1958 = vdwg.mxu0
      %1959 = vmatprep.subr.bf16.mxu0 %v1381
      %1960 = vmatpush1.bf16.msra.mxu0 %v1380
      %1961 = vmatprep.subr.bf16.mxu0 %v1385
      %1962 = vmatpush1.bf16.msra.mxu0 %v1384
      %1963 = vmatprep.subr.bf16.mxu0 %v1389
      %1964 = vmatpush1.bf16.msra.mxu0 %v1388
      %1965 = vmatprep.subr.bf16.mxu0 %v1393
      %1966 = vmatpush1.bf16.msra.mxu0 %v1392
      %1967 = vmatprep.subr.bf16.mxu0 %v1397
      %1968 = vmatpush1.bf16.msra.mxu0 %v1396
      %1969 = vmatprep.subr.bf16.mxu0 %v1401
      %1970 = vmatpush1.bf16.msra.mxu0 %v1400
      %1971 = vmatprep.subr.bf16.mxu0 %v1405
      %1972 = vmatpush1.bf16.msra.mxu0 %v1404
      %1973 = vmatprep.subr.bf16.mxu0 %v1409
      %1974 = vmatpush1.bf16.msra.mxu0 %v1408
      %1975 = vmatprep.subr.bf16.mxu0 0
      %1976 = vmatpush1.bf16.msra.mxu0 0
      %1977 = vmatprep.subr.bf16.mxu0 0
      %1978 = vmatpush1.bf16.msra.mxu0 0
      %1979 = vmatprep.subr.bf16.mxu0 0
      %1980 = vmatpush1.bf16.msra.mxu0 0
      %1981 = vmatprep.subr.bf16.mxu0 0
      %1982 = vmatpush1.bf16.msra.mxu0 0
      %1983 = vmatprep.subr.bf16.mxu0 0
      %1984 = vmatpush1.bf16.msra.mxu0 0
      %1985 = vmatprep.subr.bf16.mxu0 0
      %1986 = vmatpush1.bf16.msra.mxu0 0
      %1987 = vmatprep.subr.bf16.mxu0 0
      %1988 = vmatpush1.bf16.msra.mxu0 0
      %1989 = vmatprep.subr.bf16.mxu0 0
      %1990 = vmatpush1.bf16.msra.mxu0 0
      %1991 = vmatprep.mubr.bf16.mxu0 0
      %1992 = vmatmul.mubr.bf16.gmra.mrb[0].mxu0 %v1917
      %v1993 = vpop.f32.mrb[0].mxu0
      %v1994 = vadd.f32 %v1832, %v1993
      %v1995 = vpop.f32.mrb[0].mxu0
      %v1996 = vadd.f32 %v1833, %v1995
      %v1997 = vpop.f32.mrb[0].mxu0
      %v1998 = vpop.f32.mrb[0].mxu0
      %1999 = vdwg.mxu0
      %v2000 = vxor.u32 %v1870, 2147483648
      %v2001 = vmul.f32 %v2000, 1.442695
      %v2002 = vpow.pop %v2001
      %v2003 = vadd.f32 %v2002, 1.0
      %v2004 = vrcp.pop %v2003
      %v2005 = vmul.f32 1.0, %v2004
      %v2006 = vxor.u32 %v1872, 2147483648
      %v2007 = vmul.f32 %v2006, 1.442695
      %v2008 = vpow.pop %v2007
      %v2009 = vadd.f32 %v2008, 1.0
      %v2010 = vrcp.pop %v2009
      %v2011 = vmul.f32 1.0, %v2010
      %v2012 = vtanh.pop %v1911
      %v2013 = vxor.u32 %v1913, 2147483648
      %v2014 = vmul.f32 %v2013, 1.442695
      %v2015 = vpow.pop %v2014
      %v2016 = vadd.f32 %v2015, 1.0
      %v2017 = vrcp.pop %v2016
      %v2018 = vmul.f32 1.0, %v2017
      %v2019 = vmul.f32 %v2011, %v1816
      %v2020 = vmul.f32 %v2005, %v2012
      %v2021 = vadd.f32 %v2019, %v2020
      %v2022 = vtanh.pop %v2021
      %v2023 = vmul.f32 %v2018, %v2022
      %v2024 = vxor.u32 %v1953, 2147483648
      %v2025 = vmul.f32 %v2024, 1.442695
      %v2026 = vpow.pop %v2025
      %v2027 = vadd.f32 %v2026, 1.0
      %v2028 = vrcp.pop %v2027
      %v2029 = vmul.f32 1.0, %v2028
      %v2030 = vxor.u32 %v1955, 2147483648
      %v2031 = vmul.f32 %v2030, 1.442695
      %v2032 = vpow.pop %v2031
      %v2033 = vadd.f32 %v2032, 1.0
      %v2034 = vrcp.pop %v2033
      %v2035 = vmul.f32 1.0, %v2034
      %v2036 = vtanh.pop %v1994
      %v2037 = vxor.u32 %v1996, 2147483648
      %v2038 = vmul.f32 %v2037, 1.442695
      %v2039 = vpow.pop %v2038
      %v2040 = vadd.f32 %v2039, 1.0
      %v2041 = vrcp.pop %v2040
      %v2042 = vmul.f32 1.0, %v2041
      %v2043 = vmul.f32 %v2035, %v1818
      %v2044 = vmul.f32 %v2029, %v2036
      %v2045 = vadd.f32 %v2043, %v2044
      %v2046 = vtanh.pop %v2045
      %v2047 = vmul.f32 %v2042, %v2046
      %v2048 = vstv %s1819
      %vm2049 = vcmp.lt.s32.totalorder %v2048, %v955
      %s2050 = ssub.s32 5, %s956
      %v2051 = vstv %s2050
      %vm2052 = vcmp.lt.s32.totalorder %v2051, %v955
      %v2053 = vsel %vm2049, %v2023, %v1815
      %v2054 = vsel %vm2049, %v2021, %v1816
      %v2055 = vsel %vm2052, %v2047, %v1817
      %v2056 = vsel %vm2052, %v2045, %v1818
      %s2057 = sadd.s32 %s956, 3
      %s2058 = scalar_lea.vmem [#allocation2], 48
      %v2059 = vld [vmem:[%s2058] sm:$0xff]
      %v2060 = vld [vmem:[%s2058 + $0x8] sm:$0xff]
      %v2061 = vunpack.c.l.bf16 %v2059
      %v2062 = vunpack.c.h.bf16 %v2059
      %v2063 = vunpack.c.l.bf16 %v2060
      %v2064 = vunpack.c.h.bf16 %v2060
      %v2065 = vld [vmem:[#allocation3] sm:$0xff]
      %v2066 = vld [vmem:[#allocation3 + $0x8] sm:$0xff]
      %v2067 = vunpack.c.l.bf16 %v2065
      %v2068 = vunpack.c.h.bf16 %v2065
      %v2069 = vunpack.c.l.bf16 %v2066
      %v2070 = vunpack.c.h.bf16 %v2066
      %v2071 = vpack.c.bf16 %v2053, %v2053
      %2072 = vmatprep.subr.bf16.mxu0 %v1104
      %2073 = vmatpush1.bf16.msra.mxu0 %v1103
      %2074 = vmatprep.subr.bf16.mxu0 %v1108
      %2075 = vmatpush1.bf16.msra.mxu0 %v1107
      %2076 = vmatprep.subr.bf16.mxu0 %v1112
      %2077 = vmatpush1.bf16.msra.mxu0 %v1111
      %2078 = vmatprep.subr.bf16.mxu0 %v1116
      %2079 = vmatpush1.bf16.msra.mxu0 %v1115
      %2080 = vmatprep.subr.bf16.mxu0 %v1120
      %2081 = vmatpush1.bf16.msra.mxu0 %v1119
      %2082 = vmatprep.subr.bf16.mxu0 %v1124
      %2083 = vmatpush1.bf16.msra.mxu0 %v1123
      %2084 = vmatprep.subr.bf16.mxu0 %v1128
      %2085 = vmatpush1.bf16.msra.mxu0 %v1127
      %2086 = vmatprep.subr.bf16.mxu0 %v1132
      %2087 = vmatpush1.bf16.msra.mxu0 %v1131
      %2088 = vmatprep.subr.bf16.mxu0 0
      %2089 = vmatpush1.bf16.msra.mxu0 0
      %2090 = vmatprep.subr.bf16.mxu0 0
      %2091 = vmatpush1.bf16.msra.mxu0 0
      %2092 = vmatprep.subr.bf16.mxu0 0
      %2093 = vmatpush1.bf16.msra.mxu0 0
      %2094 = vmatprep.subr.bf16.mxu0 0
      %2095 = vmatpush1.bf16.msra.mxu0 0
      %2096 = vmatprep.subr.bf16.mxu0 0
      %2097 = vmatpush1.bf16.msra.mxu0 0
      %2098 = vmatprep.subr.bf16.mxu0 0
      %2099 = vmatpush1.bf16.msra.mxu0 0
      %2100 = vmatprep.subr.bf16.mxu0 0
      %2101 = vmatpush1.bf16.msra.mxu0 0
      %2102 = vmatprep.subr.bf16.mxu0 0
      %2103 = vmatpush1.bf16.msra.mxu0 0
      %2104 = vmatprep.mubr.bf16.mxu0 0
      %2105 = vmatmul.mubr.bf16.gmra.mrb[0].mxu0 %v2071
      %v2106 = vpop.f32.mrb[0].mxu0
      %v2107 = vadd.f32 %v2061, %v2106
      %v2108 = vpop.f32.mrb[0].mxu0
      %v2109 = vadd.f32 %v2062, %v2108
      %v2110 = vpop.f32.mrb[0].mxu0
      %v2111 = vpop.f32.mrb[0].mxu0
      %2112 = vdwg.mxu0
      %2113 = vmatprep.subr.bf16.mxu0 %v1106
      %2114 = vmatpush1.bf16.msra.mxu0 %v1105
      %2115 = vmatprep.subr.bf16.mxu0 %v1110
      %2116 = vmatpush1.bf16.msra.mxu0 %v1109
      %2117 = vmatprep.subr.bf16.mxu0 %v1114
      %2118 = vmatpush1.bf16.msra.mxu0 %v1113
      %2119 = vmatprep.subr.bf16.mxu0 %v1118
      %2120 = vmatpush1.bf16.msra.mxu0 %v1117
      %2121 = vmatprep.subr.bf16.mxu0 %v1122
      %2122 = vmatpush1.bf16.msra.mxu0 %v1121
      %2123 = vmatprep.subr.bf16.mxu0 %v1126
      %2124 = vmatpush1.bf16.msra.mxu0 %v1125
      %2125 = vmatprep.subr.bf16.mxu0 %v1130
      %2126 = vmatpush1.bf16.msra.mxu0 %v1129
      %2127 = vmatprep.subr.bf16.mxu0 %v1134
      %2128 = vmatpush1.bf16.msra.mxu0 %v1133
      %2129 = vmatprep.subr.bf16.mxu0 0
      %2130 = vmatpush1.bf16.msra.mxu0 0
      %2131 = vmatprep.subr.bf16.mxu0 0
      %2132 = vmatpush1.bf16.msra.mxu0 0
      %2133 = vmatprep.subr.bf16.mxu0 0
      %2134 = vmatpush1.bf16.msra.mxu0 0
      %2135 = vmatprep.subr.bf16.mxu0 0
      %2136 = vmatpush1.bf16.msra.mxu0 0
      %2137 = vmatprep.subr.bf16.mxu0 0
      %2138 = vmatpush1.bf16.msra.mxu0 0
      %2139 = vmatprep.subr.bf16.mxu0 0
      %2140 = vmatpush1.bf16.msra.mxu0 0
      %2141 = vmatprep.subr.bf16.mxu0 0
      %2142 = vmatpush1.bf16.msra.mxu0 0
      %2143 = vmatprep.subr.bf16.mxu0 0
      %2144 = vmatpush1.bf16.msra.mxu0 0
      %2145 = vmatprep.mubr.bf16.mxu0 0
      %2146 = vmatmul.mubr.bf16.gmra.mrb[0].mxu0 %v2071
      %v2147 = vpop.f32.mrb[0].mxu0
      %v2148 = vadd.f32 %v2063, %v2147
      %v2149 = vpop.f32.mrb[0].mxu0
      %v2150 = vadd.f32 %v2064, %v2149
      %v2151 = vpop.f32.mrb[0].mxu0
      %v2152 = vpop.f32.mrb[0].mxu0
      %2153 = vdwg.mxu0
      %v2154 = vpack.c.bf16 %v2055, %v2055
      %2155 = vmatprep.subr.bf16.mxu0 %v1379
      %2156 = vmatpush1.bf16.msra.mxu0 %v1378
      %2157 = vmatprep.subr.bf16.mxu0 %v1383
      %2158 = vmatpush1.bf16.msra.mxu0 %v1382
      %2159 = vmatprep.subr.bf16.mxu0 %v1387
      %2160 = vmatpush1.bf16.msra.mxu0 %v1386
      %2161 = vmatprep.subr.bf16.mxu0 %v1391
      %2162 = vmatpush1.bf16.msra.mxu0 %v1390
      %2163 = vmatprep.subr.bf16.mxu0 %v1395
      %2164 = vmatpush1.bf16.msra.mxu0 %v1394
      %2165 = vmatprep.subr.bf16.mxu0 %v1399
      %2166 = vmatpush1.bf16.msra.mxu0 %v1398
      %2167 = vmatprep.subr.bf16.mxu0 %v1403
      %2168 = vmatpush1.bf16.msra.mxu0 %v1402
      %2169 = vmatprep.subr.bf16.mxu0 %v1407
      %2170 = vmatpush1.bf16.msra.mxu0 %v1406
      %2171 = vmatprep.subr.bf16.mxu0 0
      %2172 = vmatpush1.bf16.msra.mxu0 0
      %2173 = vmatprep.subr.bf16.mxu0 0
      %2174 = vmatpush1.bf16.msra.mxu0 0
      %2175 = vmatprep.subr.bf16.mxu0 0
      %2176 = vmatpush1.bf16.msra.mxu0 0
      %2177 = vmatprep.subr.bf16.mxu0 0
      %2178 = vmatpush1.bf16.msra.mxu0 0
      %2179 = vmatprep.subr.bf16.mxu0 0
      %2180 = vmatpush1.bf16.msra.mxu0 0
      %2181 = vmatprep.subr.bf16.mxu0 0
      %2182 = vmatpush1.bf16.msra.mxu0 0
      %2183 = vmatprep.subr.bf16.mxu0 0
      %2184 = vmatpush1.bf16.msra.mxu0 0
      %2185 = vmatprep.subr.bf16.mxu0 0
      %2186 = vmatpush1.bf16.msra.mxu0 0
      %2187 = vmatprep.mubr.bf16.mxu0 0
      %2188 = vmatmul.mubr.bf16.gmra.mrb[0].mxu0 %v2154
      %v2189 = vpop.f32.mrb[0].mxu0
      %v2190 = vadd.f32 %v2067, %v2189
      %v2191 = vpop.f32.mrb[0].mxu0
      %v2192 = vadd.f32 %v2068, %v2191
      %v2193 = vpop.f32.mrb[0].mxu0
      %v2194 = vpop.f32.mrb[0].mxu0
      %2195 = vdwg.mxu0
      %2196 = vmatprep.subr.bf16.mxu0 %v1381
      %2197 = vmatpush1.bf16.msra.mxu0 %v1380
      %2198 = vmatprep.subr.bf16.mxu0 %v1385
      %2199 = vmatpush1.bf16.msra.mxu0 %v1384
      %2200 = vmatprep.subr.bf16.mxu0 %v1389
      %2201 = vmatpush1.bf16.msra.mxu0 %v1388
      %2202 = vmatprep.subr.bf16.mxu0 %v1393
      %2203 = vmatpush1.bf16.msra.mxu0 %v1392
      %2204 = vmatprep.subr.bf16.mxu0 %v1397
      %2205 = vmatpush1.bf16.msra.mxu0 %v1396
      %2206 = vmatprep.subr.bf16.mxu0 %v1401
      %2207 = vmatpush1.bf16.msra.mxu0 %v1400
      %2208 = vmatprep.subr.bf16.mxu0 %v1405
      %2209 = vmatpush1.bf16.msra.mxu0 %v1404
      %2210 = vmatprep.subr.bf16.mxu0 %v1409
      %2211 = vmatpush1.bf16.msra.mxu0 %v1408
      %2212 = vmatprep.subr.bf16.mxu0 0
      %2213 = vmatpush1.bf16.msra.mxu0 0
      %2214 = vmatprep.subr.bf16.mxu0 0
      %2215 = vmatpush1.bf16.msra.mxu0 0
      %2216 = vmatprep.subr.bf16.mxu0 0
      %2217 = vmatpush1.bf16.msra.mxu0 0
      %2218 = vmatprep.subr.bf16.mxu0 0
      %2219 = vmatpush1.bf16.msra.mxu0 0
      %2220 = vmatprep.subr.bf16.mxu0 0
      %2221 = vmatpush1.bf16.msra.mxu0 0
      %2222 = vmatprep.subr.bf16.mxu0 0
      %2223 = vmatpush1.bf16.msra.mxu0 0
      %2224 = vmatprep.subr.bf16.mxu0 0
      %2225 = vmatpush1.bf16.msra.mxu0 0
      %2226 = vmatprep.subr.bf16.mxu0 0
      %2227 = vmatpush1.bf16.msra.mxu0 0
      %2228 = vmatprep.mubr.bf16.mxu0 0
      %2229 = vmatmul.mubr.bf16.gmra.mrb[0].mxu0 %v2154
      %v2230 = vpop.f32.mrb[0].mxu0
      %v2231 = vadd.f32 %v2069, %v2230
      %v2232 = vpop.f32.mrb[0].mxu0
      %v2233 = vadd.f32 %v2070, %v2232
      %v2234 = vpop.f32.mrb[0].mxu0
      %v2235 = vpop.f32.mrb[0].mxu0
      %2236 = vdwg.mxu0
      %v2237 = vxor.u32 %v2107, 2147483648
      %v2238 = vmul.f32 %v2237, 1.442695
      %v2239 = vpow.pop %v2238
      %v2240 = vadd.f32 %v2239, 1.0
      %v2241 = vrcp.pop %v2240
      %v2242 = vmul.f32 1.0, %v2241
      %v2243 = vxor.u32 %v2109, 2147483648
      %v2244 = vmul.f32 %v2243, 1.442695
      %v2245 = vpow.pop %v2244
      %v2246 = vadd.f32 %v2245, 1.0
      %v2247 = vrcp.pop %v2246
      %v2248 = vmul.f32 1.0, %v2247
      %v2249 = vtanh.pop %v2148
      %v2250 = vxor.u32 %v2150, 2147483648
      %v2251 = vmul.f32 %v2250, 1.442695
      %v2252 = vpow.pop %v2251
      %v2253 = vadd.f32 %v2252, 1.0
      %v2254 = vrcp.pop %v2253
      %v2255 = vmul.f32 1.0, %v2254
      %v2256 = vmul.f32 %v2248, %v2054
      %v2257 = vmul.f32 %v2242, %v2249
      %v2258 = vadd.f32 %v2256, %v2257
      %v2259 = vtanh.pop %v2258
      %v2260 = vmul.f32 %v2255, %v2259
      %v2261 = vxor.u32 %v2190, 2147483648
      %v2262 = vmul.f32 %v2261, 1.442695
      %v2263 = vpow.pop %v2262
      %v2264 = vadd.f32 %v2263, 1.0
      %v2265 = vrcp.pop %v2264
      %v2266 = vmul.f32 1.0, %v2265
      %v2267 = vxor.u32 %v2192, 2147483648
      %v2268 = vmul.f32 %v2267, 1.442695
      %v2269 = vpow.pop %v2268
      %v2270 = vadd.f32 %v2269, 1.0
      %v2271 = vrcp.pop %v2270
      %v2272 = vmul.f32 1.0, %v2271
      %v2273 = vtanh.pop %v2231
      %v2274 = vxor.u32 %v2233, 2147483648
      %v2275 = vmul.f32 %v2274, 1.442695
      %v2276 = vpow.pop %v2275
      %v2277 = vadd.f32 %v2276, 1.0
      %v2278 = vrcp.pop %v2277
      %v2279 = vmul.f32 1.0, %v2278
      %v2280 = vmul.f32 %v2272, %v2056
      %v2281 = vmul.f32 %v2266, %v2273
      %v2282 = vadd.f32 %v2280, %v2281
      %v2283 = vtanh.pop %v2282
      %v2284 = vmul.f32 %v2279, %v2283
      %v2285 = vstv %s2057
      %vm2286 = vcmp.lt.s32.totalorder %v2285, %v955
      %s2287 = ssub.s32 4, %s956
      %v2288 = vstv %s2287
      %vm2289 = vcmp.lt.s32.totalorder %v2288, %v955
      %v2290 = vsel %vm2286, %v2260, %v2053
      %v2291 = vsel %vm2286, %v2258, %v2054
      %v2292 = vsel %vm2289, %v2284, %v2055
      %v2293 = vsel %vm2289, %v2282, %v2056
      %2294 = vst [vmem:[#allocation4] sm:$0xff] %v2290
      %2295 = vst [vmem:[#allocation4 + $0x8] sm:$0xff] %v2292
      %2296 = vst [vmem:[#allocation5] sm:$0xff] %v2291
      %2297 = vst [vmem:[#allocation5 + $0x8] sm:$0xff] %v2293
      %p2298 = scmp.eq.s32.totalorder %s24, 1
      // Predicated region
      $region77: #{simple_rnn_forward.1} parent=71 // pred_check
        %p2299 = pneg %p2298
      $region78: #{simple_rnn_forward.1} parent=71 // pred_check_branch
        %2301 = sbr.rel (%p2299) target = $region80
      $region79: #{simple_rnn_forward.1} parent=71 // pred_region
        %v2302 = vld [vmem:[#allocation4] sm:$0xff]
        %v2303 = vld [vmem:[#allocation4 + $0x8] sm:$0xff]
        %v2304 = vpack.c.bf16 %v2302, %v2302
        %v2305 = vpack.c.bf16 %v2303, %v2303
        %v2306 = vld [vmem:[%s9] sm:$0xf]
        %v2307 = vld [vmem:[%s9 + $0x4] sm:$0xf]
        %v2308 = vld [vmem:[%s9 + $0x8] sm:$0xf]
        %v2309 = vld [vmem:[%s9 + $0xc] sm:$0xf]
        %v2310 = vld [vmem:[%s9 + $0x10] sm:$0xf]
        %v2311 = vld [vmem:[%s9 + $0x14] sm:$0xf]
        %v2312 = vld [vmem:[%s9 + $0x18] sm:$0xf]
        %v2313 = vld [vmem:[%s9 + $0x1c] sm:$0xf]
        %v2314 = vld [vmem:[%s9 + $0x20] sm:$0xf]
        %v2315 = vld [vmem:[%s9 + $0x24] sm:$0xf]
        %v2316 = vld [vmem:[%s9 + $0x28] sm:$0xf]
        %v2317 = vld [vmem:[%s9 + $0x2c] sm:$0xf]
        %v2318 = vld [vmem:[%s9 + $0x30] sm:$0xf]
        %v2319 = vld [vmem:[%s9 + $0x34] sm:$0xf]
        %v2320 = vld [vmem:[%s9 + $0x38] sm:$0xf]
        %v2321 = vld [vmem:[%s9 + $0x3c] sm:$0xf]
        %v2322 = vld [vmem:[%s9 + $0x40] sm:$0xf]
        %v2323 = vld [vmem:[%s9 + $0x44] sm:$0xf]
        %v2324 = vld [vmem:[%s9 + $0x48] sm:$0xf]
        %v2325 = vld [vmem:[%s9 + $0x4c] sm:$0xf]
        %v2326 = vld [vmem:[%s9 + $0x50] sm:$0xf]
        %v2327 = vld [vmem:[%s9 + $0x54] sm:$0xf]
        %v2328 = vld [vmem:[%s9 + $0x58] sm:$0xf]
        %v2329 = vld [vmem:[%s9 + $0x5c] sm:$0xf]
        %v2330 = vld [vmem:[%s9 + $0x60] sm:$0xf]
        %v2331 = vld [vmem:[%s9 + $0x64] sm:$0xf]
        %v2332 = vld [vmem:[%s9 + $0x68] sm:$0xf]
        %v2333 = vld [vmem:[%s9 + $0x6c] sm:$0xf]
        %v2334 = vld [vmem:[%s9 + $0x70] sm:$0xf]
        %v2335 = vld [vmem:[%s9 + $0x74] sm:$0xf]
        %v2336 = vld [vmem:[%s9 + $0x78] sm:$0xf]
        %v2337 = vld [vmem:[%s9 + $0x7c] sm:$0xf]
        %v2338 = vld [vmem:[%s10] sm:$0x1]
        %v2340 = vlaneseq
        %v2341 = vshrl.u32 %v2340, 7
        %v2342 = vsub.s32 0, %v2341
        %v2343 = vrot.slane %v2338, %v2342
        %v2377 = vunpack.c.l.b16 %v2306
        %v2378 = vunpack.c.l.b16 %v2307
        %v2379 = vunpack.c.l.b16 %v2308
        %v2380 = vunpack.c.l.b16 %v2309
        %v2381 = vunpack.c.l.b16 %v2310
        %v2382 = vunpack.c.l.b16 %v2311
        %v2383 = vunpack.c.l.b16 %v2312
        %v2384 = vunpack.c.l.b16 %v2313
        %v2385 = vunpack.c.l.b16 %v2314
        %v2386 = vunpack.c.l.b16 %v2315
        %v2387 = vunpack.c.l.b16 %v2316
        %v2388 = vunpack.c.l.b16 %v2317
        %v2389 = vunpack.c.l.b16 %v2318
        %v2390 = vunpack.c.l.b16 %v2319
        %v2391 = vunpack.c.l.b16 %v2320
        %v2392 = vunpack.c.l.b16 %v2321
        %v2393 = vunpack.c.l.b16 %v2322
        %v2394 = vunpack.c.l.b16 %v2323
        %v2395 = vunpack.c.l.b16 %v2324
        %v2396 = vunpack.c.l.b16 %v2325
        %v2397 = vunpack.c.l.b16 %v2326
        %v2398 = vunpack.c.l.b16 %v2327
        %v2399 = vunpack.c.l.b16 %v2328
        %v2400 = vunpack.c.l.b16 %v2329
        %v2401 = vunpack.c.l.b16 %v2330
        %v2402 = vunpack.c.l.b16 %v2331
        %v2403 = vunpack.c.l.b16 %v2332
        %v2404 = vunpack.c.l.b16 %v2333
        %v2405 = vunpack.c.l.b16 %v2334
        %v2406 = vunpack.c.l.b16 %v2335
        %v2407 = vunpack.c.l.b16 %v2336
        %v2408 = vunpack.c.l.b16 %v2337
        %v2409 = vpack.c.b16 %v2378, %v2377
        %v2410 = vpack.c.b16 %v2380, %v2379
        %v2411 = vpack.c.b16 %v2382, %v2381
        %v2412 = vpack.c.b16 %v2384, %v2383
        %v2413 = vpack.c.b16 %v2386, %v2385
        %v2414 = vpack.c.b16 %v2388, %v2387
        %v2415 = vpack.c.b16 %v2390, %v2389
        %v2416 = vpack.c.b16 %v2392, %v2391
        %v2417 = vpack.c.b16 %v2394, %v2393
        %v2418 = vpack.c.b16 %v2396, %v2395
        %v2419 = vpack.c.b16 %v2398, %v2397
        %v2420 = vpack.c.b16 %v2400, %v2399
        %v2421 = vpack.c.b16 %v2402, %v2401
        %v2422 = vpack.c.b16 %v2404, %v2403
        %v2423 = vpack.c.b16 %v2406, %v2405
        %v2424 = vpack.c.b16 %v2408, %v2407
        %2441 = vmatprep.subr.bf16.mxu0 0
        %2442 = vmatpush1.bf16.msra.mxu0 %v2409
        %2443 = vmatprep.subr.bf16.mxu0 0
        %2444 = vmatpush1.bf16.msra.mxu0 %v2410
        %2445 = vmatprep.subr.bf16.mxu0 0
        %2446 = vmatpush1.bf16.msra.mxu0 %v2411
        %2447 = vmatprep.subr.bf16.mxu0 0
        %2448 = vmatpush1.bf16.msra.mxu0 %v2412
        %2449 = vmatprep.subr.bf16.mxu0 0
        %2450 = vmatpush1.bf16.msra.mxu0 %v2413
        %2451 = vmatprep.subr.bf16.mxu0 0
        %2452 = vmatpush1.bf16.msra.mxu0 %v2414
        %2453 = vmatprep.subr.bf16.mxu0 0
        %2454 = vmatpush1.bf16.msra.mxu0 %v2415
        %2455 = vmatprep.subr.bf16.mxu0 0
        %2456 = vmatpush1.bf16.msra.mxu0 %v2416
        %2457 = vmatprep.subr.bf16.mxu0 0
        %2458 = vmatpush1.bf16.msra.mxu0 %v2417
        %2459 = vmatprep.subr.bf16.mxu0 0
        %2460 = vmatpush1.bf16.msra.mxu0 %v2418
        %2461 = vmatprep.subr.bf16.mxu0 0
        %2462 = vmatpush1.bf16.msra.mxu0 %v2419
        %2463 = vmatprep.subr.bf16.mxu0 0
        %2464 = vmatpush1.bf16.msra.mxu0 %v2420
        %2465 = vmatprep.subr.bf16.mxu0 0
        %2466 = vmatpush1.bf16.msra.mxu0 %v2421
        %2467 = vmatprep.subr.bf16.mxu0 0
        %2468 = vmatpush1.bf16.msra.mxu0 %v2422
        %2469 = vmatprep.subr.bf16.mxu0 0
        %2470 = vmatpush1.bf16.msra.mxu0 %v2423
        %2471 = vmatprep.subr.bf16.mxu0 0
        %2472 = vmatpush1.bf16.msra.mxu0 %v2424
        %2473 = vmatprep.mubr.bf16.mxu0 %v2305
        %2474 = vmatmul.mubr.bf16.gmra.mrb[0].mxu0 %v2304
        %v2475 = vpop.f32.mrb[0].mxu0
        %v2476 = vadd.f32 %v2343, %v2475
        %v2477 = vpop.f32.mrb[0].mxu0
        %v2478 = vpop.f32.mrb[0].mxu0
        %v2479 = vpop.f32.mrb[0].mxu0
        %2480 = vdwg.mxu0
        %vm2481 = vcmp.gt.f32.partialorder %v2476, 0.0
        %v2482 = vmul.f32 %v2476, 0.01
        %v2483 = vsel %vm2481, %v2476, %v2482
        %v2484 = vpack.c.bf16 %v2483, %v2483
        %v2485 = vld [vmem:[%s11] sm:$0xf]
        %v2486 = vld [vmem:[%s11 + $0x4] sm:$0xf]
        %v2487 = vld [vmem:[%s11 + $0x8] sm:$0xf]
        %v2488 = vld [vmem:[%s11 + $0xc] sm:$0xf]
        %v2489 = vld [vmem:[%s11 + $0x10] sm:$0xf]
        %v2490 = vld [vmem:[%s11 + $0x14] sm:$0xf]
        %v2491 = vld [vmem:[%s11 + $0x18] sm:$0xf]
        %v2492 = vld [vmem:[%s11 + $0x1c] sm:$0xf]
        %v2493 = vld [vmem:[%s11 + $0x20] sm:$0xf]
        %v2494 = vld [vmem:[%s11 + $0x24] sm:$0xf]
        %v2495 = vld [vmem:[%s11 + $0x28] sm:$0xf]
        %v2496 = vld [vmem:[%s11 + $0x2c] sm:$0xf]
        %v2497 = vld [vmem:[%s11 + $0x30] sm:$0xf]
        %v2498 = vld [vmem:[%s11 + $0x34] sm:$0xf]
        %v2499 = vld [vmem:[%s11 + $0x38] sm:$0xf]
        %v2500 = vld [vmem:[%s11 + $0x3c] sm:$0xf]
        %v2501 = vld [vmem:[%s12] sm:$0x1]
        %v2503 = vlaneseq
        %v2504 = vshrl.u32 %v2503, 7
        %v2505 = vsub.s32 0, %v2504
        %v2506 = vrot.slane %v2501, %v2505
        %v2524 = vunpack.c.l.b16 %v2485
        %v2525 = vunpack.c.l.b16 %v2486
        %v2526 = vunpack.c.l.b16 %v2487
        %v2527 = vunpack.c.l.b16 %v2488
        %v2528 = vunpack.c.l.b16 %v2489
        %v2529 = vunpack.c.l.b16 %v2490
        %v2530 = vunpack.c.l.b16 %v2491
        %v2531 = vunpack.c.l.b16 %v2492
        %v2532 = vunpack.c.l.b16 %v2493
        %v2533 = vunpack.c.l.b16 %v2494
        %v2534 = vunpack.c.l.b16 %v2495
        %v2535 = vunpack.c.l.b16 %v2496
        %v2536 = vunpack.c.l.b16 %v2497
        %v2537 = vunpack.c.l.b16 %v2498
        %v2538 = vunpack.c.l.b16 %v2499
        %v2539 = vunpack.c.l.b16 %v2500
        %v2540 = vpack.c.b16 %v2525, %v2524
        %v2541 = vpack.c.b16 %v2527, %v2526
        %v2542 = vpack.c.b16 %v2529, %v2528
        %v2543 = vpack.c.b16 %v2531, %v2530
        %v2544 = vpack.c.b16 %v2533, %v2532
        %v2545 = vpack.c.b16 %v2535, %v2534
        %v2546 = vpack.c.b16 %v2537, %v2536
        %v2547 = vpack.c.b16 %v2539, %v2538
        %2556 = vmatprep.subr.bf16.mxu0 0
        %2557 = vmatpush1.bf16.msra.mxu0 %v2540
        %2558 = vmatprep.subr.bf16.mxu0 0
        %2559 = vmatpush1.bf16.msra.mxu0 %v2541
        %2560 = vmatprep.subr.bf16.mxu0 0
        %2561 = vmatpush1.bf16.msra.mxu0 %v2542
        %2562 = vmatprep.subr.bf16.mxu0 0
        %2563 = vmatpush1.bf16.msra.mxu0 %v2543
        %2564 = vmatprep.subr.bf16.mxu0 0
        %2565 = vmatpush1.bf16.msra.mxu0 %v2544
        %2566 = vmatprep.subr.bf16.mxu0 0
        %2567 = vmatpush1.bf16.msra.mxu0 %v2545
        %2568 = vmatprep.subr.bf16.mxu0 0
        %2569 = vmatpush1.bf16.msra.mxu0 %v2546
        %2570 = vmatprep.subr.bf16.mxu0 0
        %2571 = vmatpush1.bf16.msra.mxu0 %v2547
        %2572 = vmatprep.subr.bf16.mxu0 0
        %2573 = vmatpush1.bf16.msra.mxu0 0
        %2574 = vmatprep.subr.bf16.mxu0 0
        %2575 = vmatpush1.bf16.msra.mxu0 0
        %2576 = vmatprep.subr.bf16.mxu0 0
        %2577 = vmatpush1.bf16.msra.mxu0 0
        %2578 = vmatprep.subr.bf16.mxu0 0
        %2579 = vmatpush1.bf16.msra.mxu0 0
        %2580 = vmatprep.subr.bf16.mxu0 0
        %2581 = vmatpush1.bf16.msra.mxu0 0
        %2582 = vmatprep.subr.bf16.mxu0 0
        %2583 = vmatpush1.bf16.msra.mxu0 0
        %2584 = vmatprep.subr.bf16.mxu0 0
        %2585 = vmatpush1.bf16.msra.mxu0 0
        %2586 = vmatprep.subr.bf16.mxu0 0
        %2587 = vmatpush1.bf16.msra.mxu0 0
        %2588 = vmatprep.mubr.bf16.mxu0 0
        %2589 = vmatmul.mubr.bf16.gmra.mrb[0].mxu0 %v2484
        %v2590 = vpop.f32.mrb[0].mxu0
        %v2591 = vadd.f32 %v2506, %v2590
        %v2592 = vpop.f32.mrb[0].mxu0
        %v2593 = vpop.f32.mrb[0].mxu0
        %v2594 = vpop.f32.mrb[0].mxu0
        %2595 = vdwg.mxu0
        %vm2596 = vcmp.gt.f32.partialorder %v2591, 0.0
        %v2597 = vmin.f32 %v2591, 0.0
        %v2598 = vmul.f32 %v2597, 1.442695
        %v2599 = vpow.pop %v2598
        %v2600 = vsub.f32 %v2599, 1.0
        %v2601 = vsel %vm2596, %v2591, %v2600
        %2602 = vst [vmem:[%s13] sm:$0xff] %v2601
      $region80: #{simple_rnn_forward.1} parent=71 // pred_fallthru
        _
      // Predicated region
      $region81: #{simple_rnn_forward.1} parent=71 // pred_check
        %p2603 = pneg %p322
      $region82: #{simple_rnn_forward.1} parent=71 // pred_check_branch
        %2605 = sbr.rel (%p2603) target = $region84
      $region83: #{simple_rnn_forward.1} parent=71 // pred_region
        _
      $region84: #{simple_rnn_forward.1} parent=71 // pred_fallthru
        _
      // Predicated region
      $region85: #{simple_rnn_forward.1} parent=71 // pred_check
        %p2606 = pneg %p322
      $region86: #{simple_rnn_forward.1} parent=71 // pred_check_branch
        %2608 = sbr.rel (%p2606) target = $region88
      $region87: #{simple_rnn_forward.1} parent=71 // pred_region
        _
      $region88: #{simple_rnn_forward.1} parent=71 // pred_fallthru
        _
    $region72: #{simple_rnn_forward.1} parent=5 // pred_fallthru
      _
    %p2609 = scmp.le.s32.totalorder 2, %s19
    // Predicated region
    $region89: #{simple_rnn_forward.1} parent=5 // pred_check
      %p2610 = pneg %p2609
    $region90: #{simple_rnn_forward.1} parent=5 // pred_check_branch
      %2612 = sbr.rel (%p2610) target = $region92
    $region91: #{simple_rnn_forward.1} parent=5 // pred_region
      %s2613 = ssub.s32 %s19, 2
    $region92: #{simple_rnn_forward.1} parent=5 // pred_fallthru
      _
  $region6: #{simple_rnn_forward.1} parent=0 // loop_footer
    %s23 = sadd.s32 1, %s19
  $region7: #{simple_rnn_forward.1} parent=0 // loop_footer_branch
    %18 = sbr.rel target = $region3
  $region8: #{simple_rnn_forward.1} parent=0 // loop_exit
    _

</llo_original>
